<compile_context>
chip_gen: v6e
topology: v6e:2x2x1
jax: 0.10.0
libtpu: 0.0.40
codegen_flags: <defaults>
</compile_context>

<pallas_src>
import numpy as np
import jax
import jax.numpy as jnp
from jax.experimental import pallas as pl
from jax.experimental.pallas import tpu as pltpu


# ----------------------------- kernels -----------------------------

def _sg_kernel_folded(abd_ref, wbd_ref, dir_ref, out_ref):
    # abd_ref: (L*SG, L*C)  block-diag lamb*axis                  (constant over grid)
    # wbd_ref: (L*C, L*SG)  block-diag enabled*exp(-lamb)*weight^T (constant over grid)
    # dir_ref: (L*C, TB)    direction tile, channel-major
    # out_ref: (L*C, TB)
    d = dir_ref[...].astype(jnp.float32)                     # in-kernel upcast (cheap)
    z = jnp.dot(abd_ref[...], d,
                preferred_element_type=jnp.float32)          # (L*SG, TB) = lamb*cos
    term = jnp.exp(z.astype(wbd_ref.dtype))                  # EUP; bf16 if wbd is bf16
    out_ref[...] = jnp.dot(wbd_ref[...], term,
                           preferred_element_type=jnp.float32).astype(out_ref.dtype)


def _sg_kernel_sub(abd_ref, lam_ref, wbd_ref, dir_ref, out_ref):
    # Numerically-guarded variant: exponent lamb*(cos-1) is always <= 0.
    d = dir_ref[...].astype(jnp.float32)
    z = jnp.dot(abd_ref[...], d, preferred_element_type=jnp.float32)
    term = jnp.exp((z - lam_ref[...]).astype(wbd_ref.dtype))
    out_ref[...] = jnp.dot(wbd_ref[...], term,
                           preferred_element_type=jnp.float32).astype(out_ref.dtype)


# ------------------------- tiny precompute -------------------------

def _build_blockdiag(weight, axis, lamb, is_enabled, *, fold_lamb, w_dtype):
    """O(L^2*SG*C) precompute packing per-light params into block-diagonals."""
    L, SG, C = axis.shape
    en = is_enabled.astype(jnp.float32)
    eyeL = jnp.eye(L, dtype=jnp.float32)
    lamb = lamb.astype(jnp.float32)                                        # (L, SG, 1)
    a_scaled = lamb * axis.astype(jnp.float32)                             # (L, SG, C)
    A_bd = jnp.einsum("lsc,lm->lsmc", a_scaled, eyeL).reshape(L * SG, L * C)
    w_en = weight.astype(jnp.float32) * en[:, None, None]                  # (L, SG, C)
    if fold_lamb:
        w_en = w_en * jnp.exp(-lamb)          # fold exp(-lamb) into the weight columns
    W_bd = jnp.einsum("lsc,lm->lcms", w_en, eyeL).reshape(L * C, L * SG)
    W_bd = W_bd.astype(w_dtype)
    lam_col = lamb.reshape(L * SG, 1)
    return A_bd, W_bd, lam_col


# ------------------------- tiling policy ----------------------------

def _round_up_128(x):
    return ((x + 127) // 128) * 128


def _tpu_tile_config():
    """Per-generation lane-tile / VMEM defaults."""
    kind = ""
    try:
        kind = jax.devices()[0].device_kind.lower()
    except Exception:
        pass
    if "v5 lite" in kind or "v5lite" in kind or "v5e" in kind:
        # mem-bound at 0.82 TB/s; 16 MiB default scoped VMEM -> cap tile, modest limit
        return dict(max_tb=4096, min_steps=1, vmem_limit=32 << 20)
    if "v7" in kind:
        # 2 TensorCores/chip, 64 MiB physical VMEM: keep >= 2 grid steps for both TCs
        return dict(max_tb=8192, min_steps=2, vmem_limit=48 << 20)
    # v6e / default
    return dict(max_tb=8192, min_steps=1, vmem_limit=32 << 20)


def _choose_tile(B, max_tb, min_steps):
    """Large lane tile (multiple of 128); no divisibility requirement (cdiv grid)."""
    tb = min(max_tb, _round_up_128(B))
    if min_steps > 1:
        tb = min(tb, _round_up_128((B + min_steps - 1) // min_steps))
    return max(tb, 128)


# --------------------------- entry points ---------------------------

def fused_sg_lighting(direction_lcb, axis, weight, lamb, is_enabled, *,
                      tb=None, fold_lamb=True,
                      compute_dtype=jnp.float32, out_dtype=jnp.float32):
    """Channel-major entry point (no big-array transposes).

    direction_lcb: (L, C, B) (any float dtype; upcast happens inside the kernel);
    axis/weight: (L, SG, C); lamb: (L, SG, 1); is_enabled: (L,).
    Returns (L, C, B) in out_dtype.

    fold_lamb=True folds exp(-lamb) into the weight matrix (fewer inputs, no VPU
    subtract); use fold_lamb=False if lamb may exceed ~88 (f32 overflow of exp(lamb))."""
    L, C, B = direction_lcb.shape
    SG = axis.shape[1]

    cfg = _tpu_tile_config()
    if tb is None:
        tb = _choose_tile(B, cfg["max_tb"], cfg["min_steps"])
    grid = (pl.cdiv(B, tb),)          # ragged B -> Pallas partial-block handling

    d_flat = direction_lcb.reshape(L * C, B)      # free reshape, dtype preserved

    A_bd, W_bd, lam_col = _build_blockdiag(
        weight, axis, lamb, is_enabled, fold_lamb=fold_lamb, w_dtype=compute_dtype)

    dir_spec = pl.BlockSpec((L * C, tb), lambda b: (0, b))
    out_spec = pl.BlockSpec((L * C, tb), lambda b: (0, b))

    if fold_lamb:
        kern = _sg_kernel_folded
        operands = (A_bd, W_bd, d_flat)
        in_specs = [pl.BlockSpec((L * SG, L * C), lambda b: (0, 0)),   # A_bd, loaded once
                    pl.BlockSpec((L * C, L * SG), lambda b: (0, 0)),   # W_bd, loaded once
                    dir_spec]
    else:
        kern = _sg_kernel_sub
        operands = (A_bd, lam_col, W_bd, d_flat)
        in_specs = [pl.BlockSpec((L * SG, L * C), lambda b: (0, 0)),
                    pl.BlockSpec((L * SG, 1), lambda b: (0, 0)),
                    pl.BlockSpec((L * C, L * SG), lambda b: (0, 0)),
                    dir_spec]

    cost = pl.CostEstimate(
        flops=2 * 2 * (L * SG) * (L * C) * B,          # two dense block-diag matmuls
        transcendentals=L * SG * B,                    # the exp is the real ceiling
        bytes_accessed=(L * C * B) * (jnp.dtype(direction_lcb.dtype).itemsize
                                      + jnp.dtype(out_dtype).itemsize))

    out_flat = pl.pallas_call(
        kern,
        out_shape=jax.ShapeDtypeStruct((L * C, B), out_dtype),
        grid_spec=pltpu.PrefetchScalarGridSpec(
            num_scalar_prefetch=0,
            grid=grid,
            in_specs=in_specs,
            out_specs=out_spec),
        compiler_params=pltpu.CompilerParams(
            dimension_semantics=("parallel",),
            vmem_limit_bytes=cfg["vmem_limit"]),
        cost_estimate=cost,
    )(*operands)

    return out_flat.reshape(L, C, B)


def fused_sg_lighting_lbc(direction, axis, weight, lamb, is_enabled, **kw):
    """Compatibility path for the PyTorch (L, B, C) layout.  Prefer keeping data
    channel-major and calling fused_sg_lighting directly: each of these transposes
    is an extra HBM pass over the big array."""
    out_lcb = fused_sg_lighting(jnp.transpose(direction, (0, 2, 1)),
                                axis, weight, lamb, is_enabled, **kw)
    return jnp.transpose(out_lcb, (0, 2, 1))


# ------------------- module param / reference glue -------------------

def make_module_params(key, num_lights=(2, 2, 2), sg_col=6, sg_row=2, ch=3):
    """Deterministic synthetic init following FusedSGGridPointLighting.__init__."""
    spp = int(np.prod(num_lights))
    SG = sg_col * sg_row

    phiC = ((np.arange(sg_col) + 0.5) / sg_col - 0.5) * np.pi * 2
    thetaC = (np.arange(sg_row) + 0.5) / sg_row * np.pi / 2.0
    phiC, thetaC = np.meshgrid(phiC, thetaC)
    thetaCenter = jnp.asarray(thetaC.reshape(1, SG, 1), jnp.float32)
    phiCenter = jnp.asarray(phiC.reshape(1, SG, 1), jnp.float32)
    thetaRange = np.float32(np.pi / 2 / sg_row * 1.5)
    phiRange = np.float32(2 * np.pi / sg_col * 1.5)

    k1, k2, k3, k4 = jax.random.split(key, 4)
    weight_p = jnp.full((spp, SG, ch), -4.0, jnp.float32) \
        + 0.1 * jax.random.normal(k1, (spp, SG, ch), jnp.float32)
    theta_p = 0.1 * jax.random.normal(k2, (spp, SG, 1), jnp.float32)
    phi_p = 0.1 * jax.random.normal(k3, (spp, SG, 1), jnp.float32)
    lamb_p = jnp.full((spp, SG, 1), np.log(np.pi / sg_row), jnp.float32) \
        + 0.1 * jax.random.normal(k4, (spp, SG, 1), jnp.float32)
    is_enabled = jnp.ones((spp,), jnp.bool_)

    return dict(weight_p=weight_p, theta_p=theta_p, phi_p=phi_p, lamb_p=lamb_p,
                thetaCenter=thetaCenter, phiCenter=phiCenter,
                thetaRange=thetaRange, phiRange=phiRange,
                is_enabled=is_enabled, spp=spp, SG=SG, ch=ch)


def deparameterize_and_axis(p):
    """Plain-JAX glue: deparameterize() + get_axis() (tiny, O(L*SG))."""
    theta = p["thetaRange"] * jnp.tanh(p["theta_p"]) + p["thetaCenter"]   # (L, SG, 1)
    phi = p["phiRange"] * jnp.tanh(p["phi_p"]) + p["phiCenter"]           # (L, SG, 1)
    lamb = jnp.exp(p["lamb_p"])                                           # (L, SG, 1)
    weight = jnp.exp(p["weight_p"])                                       # (L, SG, C)
    axis = jnp.concatenate(
        [jnp.sin(theta) * jnp.cos(phi),
         jnp.sin(theta) * jnp.sin(phi),
         jnp.cos(theta)], axis=2)                                         # (L, SG, 3)
    return weight, axis, lamb


def reference_forward(direction, weight, axis, lamb, is_enabled):
    """Plain-JAX reference in the PyTorch (L, B, C) convention."""
    cos = jnp.einsum("lbc,lsc->lbs", direction, axis)[..., None]          # (L,B,SG,1)
    sg = weight[:, None] * jnp.exp(lamb[:, None] * (cos - 1.0))           # (L,B,SG,C)
    out = jnp.sum(sg, axis=2)                                             # (L, B, C)
    return is_enabled.astype(jnp.float32)[:, None, None] * out


if __name__ == "__main__":
    key = jax.random.PRNGKey(0)
    kp, kd = jax.random.split(key)

    params = make_module_params(kp, num_lights=(2, 2, 2))                 # L = spp = 8
    L, C = params["spp"], params["ch"]
    B = 4096                                                              # dirs per light

    # unit-length directions, channel-major (L, C, B) kernel-native layout
    d = jax.random.normal(kd, (L, C, B), jnp.float32)
    direction_lcb = d / jnp.linalg.norm(d, axis=1, keepdims=True)

    weight, axis, lamb = deparameterize_and_axis(params)

    # default (folded-lamb) path
    out_lcb = fused_sg_lighting(direction_lcb, axis, weight, lamb,
                                params["is_enabled"])
    out_lcb = jax.block_until_ready(out_lcb)
    assert out_lcb.shape == (L, C, B)

    # correctness vs. PyTorch-layout reference
    direction_lbc = jnp.transpose(direction_lcb, (0, 2, 1))
    ref_lbc = reference_forward(direction_lbc, weight, axis, lamb,
                                params["is_enabled"])
    np.testing.assert_allclose(np.asarray(out_lcb),
                               np.asarray(jnp.transpose(ref_lbc, (0, 2, 1))),
                               rtol=1e-5, atol=1e-5)

    # guarded (non-folded) path: exponent always <= 0, for very sharp lobes
    out_guarded = jax.block_until_ready(
        fused_sg_lighting(direction_lcb, axis, weight, lamb,
                          params["is_enabled"], fold_lamb=False))
    np.testing.assert_allclose(np.asarray(out_guarded),
                               np.asarray(jnp.transpose(ref_lbc, (0, 2, 1))),
                               rtol=1e-5, atol=1e-5)

    # PyTorch-layout wrapper + ragged-B (partial last block, no pad/slice HBM passes)
    out_lbc = jax.block_until_ready(
        fused_sg_lighting_lbc(direction_lbc[:, :300], axis, weight, lamb,
                              params["is_enabled"]))
    np.testing.assert_allclose(np.asarray(out_lbc), np.asarray(ref_lbc[:, :300]),
                               rtol=1e-5, atol=1e-5)

    print("KERNEL_OK")
</pallas_src>

<mosaic_0001>
module attributes {stable_mosaic.version = 11 : i64} {
  func.func @_sg_kernel_folded(%arg0: i32, %arg1: memref<96x24xf32, #tpu.memory_space<vmem>>, %arg2: memref<24x96xf32, #tpu.memory_space<vmem>>, %arg3: memref<24x4096xf32, #tpu.memory_space<vmem>>, %arg4: memref<24x4096xf32, #tpu.memory_space<vmem>>) attributes {dimension_semantics = [#tpu.dimension_semantics<parallel>], iteration_bounds = array<i64: 1>, scalar_prefetch = 0 : i64, scratch_operands = 0 : i64, tpu.core_type = #tpu.core_type<tc>, window_params = [{pipeline_mode = #tpu.pipeline_mode<synchronous>, transform_indices = @transform_0, window_bounds = array<i64: 96, 24>}, {pipeline_mode = #tpu.pipeline_mode<synchronous>, transform_indices = @transform_1, window_bounds = array<i64: 24, 96>}, {transform_indices = @transform_2, window_bounds = array<i64: 24, 4096>}, {transform_indices = @transform_3, window_bounds = array<i64: 24, 4096>}]} {
    %c0 = arith.constant 0 : index
    %c0_0 = arith.constant 0 : index
    %0 = vector.load %arg3[%c0, %c0_0] : memref<24x4096xf32, #tpu.memory_space<vmem>>, vector<24x4096xf32>
    %c0_1 = arith.constant 0 : index
    %c0_2 = arith.constant 0 : index
    %1 = vector.load %arg1[%c0_1, %c0_2] : memref<96x24xf32, #tpu.memory_space<vmem>>, vector<96x24xf32>
    %cst = arith.constant dense<0.000000e+00> : vector<96x4096xf32>
    %2 = tpu.matmul %1, %0, %cst {dimension_numbers = #tpu.dot_dimension_numbers<[1], [0], [0], [1], [0, 0, 1, 1], [], []>} : vector<96x24xf32>, vector<24x4096xf32>, vector<96x4096xf32> -> vector<96x4096xf32>
    %3 = math.exp %2 : vector<96x4096xf32>
    %c0_3 = arith.constant 0 : index
    %c0_4 = arith.constant 0 : index
    %4 = vector.load %arg2[%c0_3, %c0_4] : memref<24x96xf32, #tpu.memory_space<vmem>>, vector<24x96xf32>
    %cst_5 = arith.constant dense<0.000000e+00> : vector<24x4096xf32>
    %5 = tpu.matmul %4, %3, %cst_5 {dimension_numbers = #tpu.dot_dimension_numbers<[1], [0], [0], [1], [0, 0, 1, 1], [], []>} : vector<24x96xf32>, vector<96x4096xf32>, vector<24x4096xf32> -> vector<24x4096xf32>
    %c0_6 = arith.constant 0 : index
    %c0_7 = arith.constant 0 : index
    %6 = vector.load %arg4[%c0_6, %c0_7] : memref<24x4096xf32, #tpu.memory_space<vmem>>, vector<24x4096xf32>
    tpu.vector_store %arg4[%c0_6, %c0_7], %5 {strides = array<i32>} : memref<24x4096xf32, #tpu.memory_space<vmem>>, vector<24x4096xf32>,
    return
  }
  func.func @transform_0(%arg0: i32) -> (i32, i32) {
    %c0_i32 = arith.constant 0 : i32
    %c0_i32_0 = arith.constant 0 : i32
    %c0_i32_1 = arith.constant 0 : i32
    return %c0_i32, %c0_i32_0 : i32, i32
  }
  func.func @transform_1(%arg0: i32) -> (i32, i32) {
    %c0_i32 = arith.constant 0 : i32
    %c0_i32_0 = arith.constant 0 : i32
    %c0_i32_1 = arith.constant 0 : i32
    return %c0_i32, %c0_i32_0 : i32, i32
  }
  func.func @transform_2(%arg0: i32) -> (i32, i32) {
    %c0_i32 = arith.constant 0 : i32
    %c0_i32_0 = arith.constant 0 : i32
    return %c0_i32, %arg0 : i32, i32
  }
  func.func @transform_3(%arg0: i32) -> (i32, i32) {
    %c0_i32 = arith.constant 0 : i32
    %c0_i32_0 = arith.constant 0 : i32
    return %c0_i32, %arg0 : i32, i32
  }
}

</mosaic_0001>

<llo_original>
// kernel: tpu_custom_call.1
$region0: #{tpu_custom_call.1}
  #allocation0 [shape = 'u32[]', space=smem, size = 0x4, offset = 0x4, fixed_abs, tag = 'smem constant byte address 0x4 - core index']
  #allocation1 [shape = 'u32[144,128]{1,0:T(1,128)}', space=vmem, size = 0x12000, scoped, tag = 'internal scratch']
  %s0 = inlined_call_operand.vmem [shape: f32[96,24], index: 0, kind: input, shape index: {}]
  %s1 = inlined_call_operand.vmem [shape: f32[24,96], index: 1, kind: input, shape index: {}]
  %s2 = inlined_call_operand.hbm [shape: f32[24,4096], index: 2, kind: input, shape index: {}]
  %s3 = inlined_call_operand.hbm [shape: f32[24,4096], index: 3, kind: output, shape index: {}]
  %s4 = sld [smem:[#allocation0]]
  $region26: #{tpu_custom_call.1} parent=0
    _
  %s6 = ssub.s32 1, %s4
  %s7 = scalar_select 0, %s6, %s4
  $region1: #{tpu_custom_call.1} parent=0
    #allocation2 [shape = 'u8[393216]{0}', space=vmem, size = 0x60000, scoped, tag = 'input window, operand 2, single buffered']
    #allocation3 [shape = 's32[1]{0}', space=sflag, size = 0x4, scoped, tag = 'scoped memory for tpu_custom_call.1']
    #allocation4 [shape = 's32[1]{0}', space=sflag, size = 0x4, scoped, tag = 'scoped memory for tpu_custom_call.1']
    #allocation5 [shape = 'u8[393216]{0}', space=vmem, size = 0x60000, scoped, tag = 'output window, operand 0, single buffered']
    %8 = vsyncpa [#allocation3], 0
    %9 = vsyncpa [#allocation4], 0
    // Predicated region
    $region2: #{tpu_custom_call.1} parent=1 // pred_check
      _
    $region3: #{tpu_custom_call.1} parent=1 // pred_check_branch
      %11 = sbr.rel (0) target = $region5
    $region4: #{tpu_custom_call.1} parent=1 // pred_region
      _
    $region5: #{tpu_custom_call.1} parent=1 // pred_fallthru
      _
    // Predicated region
    $region6: #{tpu_custom_call.1} parent=1 // pred_check
      _
    $region7: #{tpu_custom_call.1} parent=1 // pred_check_branch
      %13 = sbr.rel (0) target = $region9
    $region8: #{tpu_custom_call.1} parent=1 // pred_region
      _
    $region9: #{tpu_custom_call.1} parent=1 // pred_fallthru
      _
    // Predicated region
    $region10: #{tpu_custom_call.1} parent=1 // pred_check
      _
    $region11: #{tpu_custom_call.1} parent=1 // pred_check_branch
      %15 = sbr.rel (0) target = $region13
    $region12: #{tpu_custom_call.1} parent=1 // pred_region
      %s17 = ssub.s32 12288, 12288
      %18 = vsyncadd [#allocation3], %s17
      %s19 = sshll.u32 [#allocation2], 4
      %s20 = int_to_ptr.vmem [resolvable:$true] %s19
      %25 = dma.hbm_to_vmem [thread:$0]  %s2, 12288, %s20, [#allocation3], 4096, 4096, 256
    $region13: #{tpu_custom_call.1} parent=1 // pred_fallthru
      _
    // Predicated region
    $region14: #{tpu_custom_call.1} parent=1 // pred_check
      _
    $region15: #{tpu_custom_call.1} parent=1 // pred_check_branch
      %27 = sbr.rel (0) target = $region17
    $region16: #{tpu_custom_call.1} parent=1 // pred_region
      %28 = dma.done [#allocation3], 12288
    $region17: #{tpu_custom_call.1} parent=1 // pred_fallthru
      _
    %v29 = vld [vmem:[#allocation2] sm:$0xff]
    %v30 = vld [vmem:[#allocation2 + $0x8] sm:$0xff]
    %v31 = vld [vmem:[#allocation2 + $0x10] sm:$0xff]
    %v32 = vld [vmem:[#allocation2 + $0x18] sm:$0xff]
    %v33 = vld [vmem:[#allocation2 + $0x20] sm:$0xff]
    %v34 = vld [vmem:[#allocation2 + $0x28] sm:$0xff]
    %v35 = vld [vmem:[#allocation2 + $0x30] sm:$0xff]
    %v36 = vld [vmem:[#allocation2 + $0x38] sm:$0xff]
    %v37 = vld [vmem:[#allocation2 + $0x40] sm:$0xff]
    %v38 = vld [vmem:[#allocation2 + $0x48] sm:$0xff]
    %v39 = vld [vmem:[#allocation2 + $0x50] sm:$0xff]
    %v40 = vld [vmem:[#allocation2 + $0x58] sm:$0xff]
    %v41 = vld [vmem:[#allocation2 + $0x60] sm:$0xff]
    %v42 = vld [vmem:[#allocation2 + $0x68] sm:$0xff]
    %v43 = vld [vmem:[#allocation2 + $0x70] sm:$0xff]
    %v44 = vld [vmem:[#allocation2 + $0x78] sm:$0xff]
    %v45 = vld [vmem:[#allocation2 + $0x80] sm:$0xff]
    %v46 = vld [vmem:[#allocation2 + $0x88] sm:$0xff]
    %v47 = vld [vmem:[#allocation2 + $0x90] sm:$0xff]
    %v48 = vld [vmem:[#allocation2 + $0x98] sm:$0xff]
    %v49 = vld [vmem:[#allocation2 + $0xa0] sm:$0xff]
    %v50 = vld [vmem:[#allocation2 + $0xa8] sm:$0xff]
    %v51 = vld [vmem:[#allocation2 + $0xb0] sm:$0xff]
    %v52 = vld [vmem:[#allocation2 + $0xb8] sm:$0xff]
    %v53 = vld [vmem:[#allocation2 + $0xc0] sm:$0xff]
    %v54 = vld [vmem:[#allocation2 + $0xc8] sm:$0xff]
    %v55 = vld [vmem:[#allocation2 + $0xd0] sm:$0xff]
    %v56 = vld [vmem:[#allocation2 + $0xd8] sm:$0xff]
    %v57 = vld [vmem:[#allocation2 + $0xe0] sm:$0xff]
    %v58 = vld [vmem:[#allocation2 + $0xe8] sm:$0xff]
    %v59 = vld [vmem:[#allocation2 + $0xf0] sm:$0xff]
    %v60 = vld [vmem:[#allocation2 + $0xf8] sm:$0xff]
    %v61 = vld [vmem:[#allocation2 + $0x100] sm:$0xff]
    %v62 = vld [vmem:[#allocation2 + $0x108] sm:$0xff]
    %v63 = vld [vmem:[#allocation2 + $0x110] sm:$0xff]
    %v64 = vld [vmem:[#allocation2 + $0x118] sm:$0xff]
    %v65 = vld [vmem:[#allocation2 + $0x120] sm:$0xff]
    %v66 = vld [vmem:[#allocation2 + $0x128] sm:$0xff]
    %v67 = vld [vmem:[#allocation2 + $0x130] sm:$0xff]
    %v68 = vld [vmem:[#allocation2 + $0x138] sm:$0xff]
    %v69 = vld [vmem:[#allocation2 + $0x140] sm:$0xff]
    %v70 = vld [vmem:[#allocation2 + $0x148] sm:$0xff]
    %v71 = vld [vmem:[#allocation2 + $0x150] sm:$0xff]
    %v72 = vld [vmem:[#allocation2 + $0x158] sm:$0xff]
    %v73 = vld [vmem:[#allocation2 + $0x160] sm:$0xff]
    %v74 = vld [vmem:[#allocation2 + $0x168] sm:$0xff]
    %v75 = vld [vmem:[#allocation2 + $0x170] sm:$0xff]
    %v76 = vld [vmem:[#allocation2 + $0x178] sm:$0xff]
    %v77 = vld [vmem:[#allocation2 + $0x180] sm:$0xff]
    %v78 = vld [vmem:[#allocation2 + $0x188] sm:$0xff]
    %v79 = vld [vmem:[#allocation2 + $0x190] sm:$0xff]
    %v80 = vld [vmem:[#allocation2 + $0x198] sm:$0xff]
    %v81 = vld [vmem:[#allocation2 + $0x1a0] sm:$0xff]
    %v82 = vld [vmem:[#allocation2 + $0x1a8] sm:$0xff]
    %v83 = vld [vmem:[#allocation2 + $0x1b0] sm:$0xff]
    %v84 = vld [vmem:[#allocation2 + $0x1b8] sm:$0xff]
    %v85 = vld [vmem:[#allocation2 + $0x1c0] sm:$0xff]
    %v86 = vld [vmem:[#allocation2 + $0x1c8] sm:$0xff]
    %v87 = vld [vmem:[#allocation2 + $0x1d0] sm:$0xff]
    %v88 = vld [vmem:[#allocation2 + $0x1d8] sm:$0xff]
    %v89 = vld [vmem:[#allocation2 + $0x1e0] sm:$0xff]
    %v90 = vld [vmem:[#allocation2 + $0x1e8] sm:$0xff]
    %v91 = vld [vmem:[#allocation2 + $0x1f0] sm:$0xff]
    %v92 = vld [vmem:[#allocation2 + $0x1f8] sm:$0xff]
    %v93 = vld [vmem:[#allocation2 + $0x200] sm:$0xff]
    %v94 = vld [vmem:[#allocation2 + $0x208] sm:$0xff]
    %v95 = vld [vmem:[#allocation2 + $0x210] sm:$0xff]
    %v96 = vld [vmem:[#allocation2 + $0x218] sm:$0xff]
    %v97 = vld [vmem:[#allocation2 + $0x220] sm:$0xff]
    %v98 = vld [vmem:[#allocation2 + $0x228] sm:$0xff]
    %v99 = vld [vmem:[#allocation2 + $0x230] sm:$0xff]
    %v100 = vld [vmem:[#allocation2 + $0x238] sm:$0xff]
    %v101 = vld [vmem:[#allocation2 + $0x240] sm:$0xff]
    %v102 = vld [vmem:[#allocation2 + $0x248] sm:$0xff]
    %v103 = vld [vmem:[#allocation2 + $0x250] sm:$0xff]
    %v104 = vld [vmem:[#allocation2 + $0x258] sm:$0xff]
    %v105 = vld [vmem:[#allocation2 + $0x260] sm:$0xff]
    %v106 = vld [vmem:[#allocation2 + $0x268] sm:$0xff]
    %v107 = vld [vmem:[#allocation2 + $0x270] sm:$0xff]
    %v108 = vld [vmem:[#allocation2 + $0x278] sm:$0xff]
    %v109 = vld [vmem:[#allocation2 + $0x280] sm:$0xff]
    %v110 = vld [vmem:[#allocation2 + $0x288] sm:$0xff]
    %v111 = vld [vmem:[#allocation2 + $0x290] sm:$0xff]
    %v112 = vld [vmem:[#allocation2 + $0x298] sm:$0xff]
    %v113 = vld [vmem:[#allocation2 + $0x2a0] sm:$0xff]
    %v114 = vld [vmem:[#allocation2 + $0x2a8] sm:$0xff]
    %v115 = vld [vmem:[#allocation2 + $0x2b0] sm:$0xff]
    %v116 = vld [vmem:[#allocation2 + $0x2b8] sm:$0xff]
    %v117 = vld [vmem:[#allocation2 + $0x2c0] sm:$0xff]
    %v118 = vld [vmem:[#allocation2 + $0x2c8] sm:$0xff]
    %v119 = vld [vmem:[#allocation2 + $0x2d0] sm:$0xff]
    %v120 = vld [vmem:[#allocation2 + $0x2d8] sm:$0xff]
    %v121 = vld [vmem:[#allocation2 + $0x2e0] sm:$0xff]
    %v122 = vld [vmem:[#allocation2 + $0x2e8] sm:$0xff]
    %v123 = vld [vmem:[#allocation2 + $0x2f0] sm:$0xff]
    %v124 = vld [vmem:[#allocation2 + $0x2f8] sm:$0xff]
    %v125 = vld [vmem:[%s0] sm:$0xff]
    %v126 = vld [vmem:[%s0 + $0x8] sm:$0xff]
    %v127 = vld [vmem:[%s0 + $0x10] sm:$0xff]
    %v128 = vld [vmem:[%s0 + $0x18] sm:$0xff]
    %v129 = vld [vmem:[%s0 + $0x20] sm:$0xff]
    %v130 = vld [vmem:[%s0 + $0x28] sm:$0xff]
    %v131 = vld [vmem:[%s0 + $0x30] sm:$0xff]
    %v132 = vld [vmem:[%s0 + $0x38] sm:$0xff]
    %v133 = vld [vmem:[%s0 + $0x40] sm:$0xff]
    %v134 = vld [vmem:[%s0 + $0x48] sm:$0xff]
    %v135 = vld [vmem:[%s0 + $0x50] sm:$0xff]
    %v136 = vld [vmem:[%s0 + $0x58] sm:$0xff]
    %vm137 = vcmask 195584
    %v139 = vsel %vm137, %v125, 0
    %v142 = vsel %vm137, %v126, 0
    %v145 = vsel %vm137, %v127, 0
    %v148 = vsel %vm137, %v128, 0
    %v151 = vsel %vm137, %v129, 0
    %v154 = vsel %vm137, %v130, 0
    %v157 = vsel %vm137, %v131, 0
    %v160 = vsel %vm137, %v132, 0
    %v163 = vsel %vm137, %v133, 0
    %v166 = vsel %vm137, %v134, 0
    %v169 = vsel %vm137, %v135, 0
    %v172 = vsel %vm137, %v136, 0
    %174 = vmatprep.subr.mxu0 0.0
    %175 = vmatpush1.msra.mxu0 0.0
    %176 = vmatprep.subr.mxu0 0.0
    %177 = vmatpush1.msra.mxu0 0.0
    %178 = vmatprep.subr.mxu0 0.0
    %179 = vmatpush1.msra.mxu0 0.0
    %180 = vmatprep.subr.mxu0 0.0
    %181 = vmatpush1.msra.mxu0 0.0
    %182 = vmatprep.subr.mxu0 0.0
    %183 = vmatpush1.msra.mxu0 0.0
    %184 = vmatprep.subr.mxu0 0.0
    %185 = vmatpush1.msra.mxu0 0.0
    %186 = vmatprep.subr.mxu0 0.0
    %187 = vmatpush1.msra.mxu0 0.0
    %188 = vmatprep.subr.mxu0 0.0
    %189 = vmatpush1.msra.mxu0 0.0
    %190 = vmatprep.subr.mxu0 0.0
    %191 = vmatpush1.msra.mxu0 0.0
    %192 = vmatprep.subr.mxu0 0.0
    %193 = vmatpush1.msra.mxu0 0.0
    %194 = vmatprep.subr.mxu0 0.0
    %195 = vmatpush1.msra.mxu0 0.0
    %196 = vmatprep.subr.mxu0 0.0
    %197 = vmatpush1.msra.mxu0 0.0
    %198 = vmatprep.subr.mxu0 0.0
    %199 = vmatpush1.msra.mxu0 0.0
    %200 = vmatprep.subr.mxu0 %v94
    %201 = vmatpush1.msra.mxu0 %v93
    %202 = vmatprep.subr.mxu0 %v62
    %203 = vmatpush1.msra.mxu0 %v61
    %204 = vmatprep.subr.mxu0 %v30
    %205 = vmatpush1.msra.mxu0 %v29
    %206 = vmatprep.subr.mxu0 0.0
    %207 = vmatpush2.msra.mxu0 0.0
    %208 = vmatprep.subr.mxu0 0.0
    %209 = vmatpush2.msra.mxu0 0.0
    %210 = vmatprep.subr.mxu0 0.0
    %211 = vmatpush2.msra.mxu0 0.0
    %212 = vmatprep.subr.mxu0 0.0
    %213 = vmatpush2.msra.mxu0 0.0
    %214 = vmatprep.subr.mxu0 0.0
    %215 = vmatpush2.msra.mxu0 0.0
    %216 = vmatprep.subr.mxu0 0.0
    %217 = vmatpush2.msra.mxu0 0.0
    %218 = vmatprep.subr.mxu0 0.0
    %219 = vmatpush2.msra.mxu0 0.0
    %220 = vmatprep.subr.mxu0 0.0
    %221 = vmatpush2.msra.mxu0 0.0
    %222 = vmatprep.subr.mxu0 0.0
    %223 = vmatpush2.msra.mxu0 0.0
    %224 = vmatprep.subr.mxu0 0.0
    %225 = vmatpush2.msra.mxu0 0.0
    %226 = vmatprep.subr.mxu0 0.0
    %227 = vmatpush2.msra.mxu0 0.0
    %228 = vmatprep.subr.mxu0 0.0
    %229 = vmatpush2.msra.mxu0 0.0
    %230 = vmatprep.subr.mxu0 0.0
    %231 = vmatpush2.msra.mxu0 0.0
    %232 = vmatprep.subr.mxu0 0.0
    %233 = vmatpush2.msra.mxu0 0.0
    %234 = vmatprep.subr.mxu0 0.0
    %235 = vmatpush2.msra.mxu0 0.0
    %236 = vmatprep.subr.mxu0 0.0
    %237 = vmatpush2.msra.mxu0 0.0
    %238 = vmatprep.mubr.f32.mxu0 0.0
    %239 = vmatmul.mubr.f32.gmra.mxu0 %v139
    %v240 = vpop.f32.mrf.mxu0
    %v241 = vadd.f32 0.0, %v240
    %v242 = vpop.f32.mrf.mxu0
    %v243 = vadd.f32 0.0, %v242
    %244 = vmatprep.mubr.f32.mxu0 0.0
    %245 = vmatmul.mubr.f32.gmra.mxu0 %v142
    %v246 = vpop.f32.mrf.mxu0
    %v247 = vadd.f32 0.0, %v246
    %v248 = vpop.f32.mrf.mxu0
    %v249 = vadd.f32 0.0, %v248
    %250 = vmatprep.mubr.f32.mxu0 0.0
    %251 = vmatmul.mubr.f32.gmra.mxu0 %v145
    %v252 = vpop.f32.mrf.mxu0
    %v253 = vadd.f32 0.0, %v252
    %v254 = vpop.f32.mrf.mxu0
    %v255 = vadd.f32 0.0, %v254
    %256 = vmatprep.mubr.f32.mxu0 0.0
    %257 = vmatmul.mubr.f32.gmra.mxu0 %v148
    %v258 = vpop.f32.mrf.mxu0
    %v259 = vadd.f32 0.0, %v258
    %v260 = vpop.f32.mrf.mxu0
    %v261 = vadd.f32 0.0, %v260
    %262 = vmatprep.mubr.f32.mxu0 0.0
    %263 = vmatmul.mubr.f32.gmra.mxu0 %v151
    %v264 = vpop.f32.mrf.mxu0
    %v265 = vadd.f32 0.0, %v264
    %v266 = vpop.f32.mrf.mxu0
    %v267 = vadd.f32 0.0, %v266
    %268 = vmatprep.mubr.f32.mxu0 0.0
    %269 = vmatmul.mubr.f32.gmra.mxu0 %v154
    %v270 = vpop.f32.mrf.mxu0
    %v271 = vadd.f32 0.0, %v270
    %v272 = vpop.f32.mrf.mxu0
    %v273 = vadd.f32 0.0, %v272
    %274 = vmatprep.mubr.f32.mxu0 0.0
    %275 = vmatmul.mubr.f32.gmra.mxu0 %v157
    %v276 = vpop.f32.mrf.mxu0
    %v277 = vadd.f32 0.0, %v276
    %v278 = vpop.f32.mrf.mxu0
    %v279 = vadd.f32 0.0, %v278
    %280 = vmatprep.mubr.f32.mxu0 0.0
    %281 = vmatmul.mubr.f32.gmra.mxu0 %v160
    %v282 = vpop.f32.mrf.mxu0
    %v283 = vadd.f32 0.0, %v282
    %v284 = vpop.f32.mrf.mxu0
    %v285 = vadd.f32 0.0, %v284
    %286 = vmatprep.mubr.f32.mxu0 0.0
    %287 = vmatmul.mubr.f32.gmra.mxu0 %v163
    %v288 = vpop.f32.mrf.mxu0
    %v289 = vadd.f32 0.0, %v288
    %v290 = vpop.f32.mrf.mxu0
    %v291 = vadd.f32 0.0, %v290
    %292 = vmatprep.mubr.f32.mxu0 0.0
    %293 = vmatmul.mubr.f32.gmra.mxu0 %v166
    %v294 = vpop.f32.mrf.mxu0
    %v295 = vadd.f32 0.0, %v294
    %v296 = vpop.f32.mrf.mxu0
    %v297 = vadd.f32 0.0, %v296
    %298 = vmatprep.mubr.f32.mxu0 0.0
    %299 = vmatmul.mubr.f32.gmra.mxu0 %v169
    %v300 = vpop.f32.mrf.mxu0
    %v301 = vadd.f32 0.0, %v300
    %v302 = vpop.f32.mrf.mxu0
    %v303 = vadd.f32 0.0, %v302
    %304 = vmatprep.mubr.f32.mxu0 0.0
    %305 = vmatmul.mubr.f32.gmra.mxu0 %v172
    %v306 = vpop.f32.mrf.mxu0
    %v307 = vadd.f32 0.0, %v306
    %v308 = vpop.f32.mrf.mxu0
    %v309 = vadd.f32 0.0, %v308
    %310 = vdwg.mxu0
    %311 = vmatprep.subr.mxu0 0.0
    %312 = vmatpush1.msra.mxu0 0.0
    %313 = vmatprep.subr.mxu0 0.0
    %314 = vmatpush1.msra.mxu0 0.0
    %315 = vmatprep.subr.mxu0 0.0
    %316 = vmatpush1.msra.mxu0 0.0
    %317 = vmatprep.subr.mxu0 0.0
    %318 = vmatpush1.msra.mxu0 0.0
    %319 = vmatprep.subr.mxu0 0.0
    %320 = vmatpush1.msra.mxu0 0.0
    %321 = vmatprep.subr.mxu0 0.0
    %322 = vmatpush1.msra.mxu0 0.0
    %323 = vmatprep.subr.mxu0 0.0
    %324 = vmatpush1.msra.mxu0 0.0
    %325 = vmatprep.subr.mxu0 0.0
    %326 = vmatpush1.msra.mxu0 0.0
    %327 = vmatprep.subr.mxu0 0.0
    %328 = vmatpush1.msra.mxu0 0.0
    %329 = vmatprep.subr.mxu0 0.0
    %330 = vmatpush1.msra.mxu0 0.0
    %331 = vmatprep.subr.mxu0 0.0
    %332 = vmatpush1.msra.mxu0 0.0
    %333 = vmatprep.subr.mxu0 0.0
    %334 = vmatpush1.msra.mxu0 0.0
    %335 = vmatprep.subr.mxu0 0.0
    %336 = vmatpush1.msra.mxu0 0.0
    %337 = vmatprep.subr.mxu0 %v96
    %338 = vmatpush1.msra.mxu0 %v95
    %339 = vmatprep.subr.mxu0 %v64
    %340 = vmatpush1.msra.mxu0 %v63
    %341 = vmatprep.subr.mxu0 %v32
    %342 = vmatpush1.msra.mxu0 %v31
    %343 = vmatprep.subr.mxu0 0.0
    %344 = vmatpush2.msra.mxu0 0.0
    %345 = vmatprep.subr.mxu0 0.0
    %346 = vmatpush2.msra.mxu0 0.0
    %347 = vmatprep.subr.mxu0 0.0
    %348 = vmatpush2.msra.mxu0 0.0
    %349 = vmatprep.subr.mxu0 0.0
    %350 = vmatpush2.msra.mxu0 0.0
    %351 = vmatprep.subr.mxu0 0.0
    %352 = vmatpush2.msra.mxu0 0.0
    %353 = vmatprep.subr.mxu0 0.0
    %354 = vmatpush2.msra.mxu0 0.0
    %355 = vmatprep.subr.mxu0 0.0
    %356 = vmatpush2.msra.mxu0 0.0
    %357 = vmatprep.subr.mxu0 0.0
    %358 = vmatpush2.msra.mxu0 0.0
    %359 = vmatprep.subr.mxu0 0.0
    %360 = vmatpush2.msra.mxu0 0.0
    %361 = vmatprep.subr.mxu0 0.0
    %362 = vmatpush2.msra.mxu0 0.0
    %363 = vmatprep.subr.mxu0 0.0
    %364 = vmatpush2.msra.mxu0 0.0
    %365 = vmatprep.subr.mxu0 0.0
    %366 = vmatpush2.msra.mxu0 0.0
    %367 = vmatprep.subr.mxu0 0.0
    %368 = vmatpush2.msra.mxu0 0.0
    %369 = vmatprep.subr.mxu0 0.0
    %370 = vmatpush2.msra.mxu0 0.0
    %371 = vmatprep.subr.mxu0 0.0
    %372 = vmatpush2.msra.mxu0 0.0
    %373 = vmatprep.subr.mxu0 0.0
    %374 = vmatpush2.msra.mxu0 0.0
    %375 = vmatprep.mubr.f32.mxu0 0.0
    %376 = vmatmul.mubr.f32.gmra.mxu0 %v139
    %v377 = vpop.f32.mrf.mxu0
    %v378 = vadd.f32 0.0, %v377
    %v379 = vpop.f32.mrf.mxu0
    %v380 = vadd.f32 0.0, %v379
    %381 = vmatprep.mubr.f32.mxu0 0.0
    %382 = vmatmul.mubr.f32.gmra.mxu0 %v142
    %v383 = vpop.f32.mrf.mxu0
    %v384 = vadd.f32 0.0, %v383
    %v385 = vpop.f32.mrf.mxu0
    %v386 = vadd.f32 0.0, %v385
    %387 = vmatprep.mubr.f32.mxu0 0.0
    %388 = vmatmul.mubr.f32.gmra.mxu0 %v145
    %v389 = vpop.f32.mrf.mxu0
    %v390 = vadd.f32 0.0, %v389
    %v391 = vpop.f32.mrf.mxu0
    %v392 = vadd.f32 0.0, %v391
    %393 = vmatprep.mubr.f32.mxu0 0.0
    %394 = vmatmul.mubr.f32.gmra.mxu0 %v148
    %v395 = vpop.f32.mrf.mxu0
    %v396 = vadd.f32 0.0, %v395
    %v397 = vpop.f32.mrf.mxu0
    %v398 = vadd.f32 0.0, %v397
    %399 = vmatprep.mubr.f32.mxu0 0.0
    %400 = vmatmul.mubr.f32.gmra.mxu0 %v151
    %v401 = vpop.f32.mrf.mxu0
    %v402 = vadd.f32 0.0, %v401
    %v403 = vpop.f32.mrf.mxu0
    %v404 = vadd.f32 0.0, %v403
    %405 = vmatprep.mubr.f32.mxu0 0.0
    %406 = vmatmul.mubr.f32.gmra.mxu0 %v154
    %v407 = vpop.f32.mrf.mxu0
    %v408 = vadd.f32 0.0, %v407
    %v409 = vpop.f32.mrf.mxu0
    %v410 = vadd.f32 0.0, %v409
    %411 = vmatprep.mubr.f32.mxu0 0.0
    %412 = vmatmul.mubr.f32.gmra.mxu0 %v157
    %v413 = vpop.f32.mrf.mxu0
    %v414 = vadd.f32 0.0, %v413
    %v415 = vpop.f32.mrf.mxu0
    %v416 = vadd.f32 0.0, %v415
    %417 = vmatprep.mubr.f32.mxu0 0.0
    %418 = vmatmul.mubr.f32.gmra.mxu0 %v160
    %v419 = vpop.f32.mrf.mxu0
    %v420 = vadd.f32 0.0, %v419
    %v421 = vpop.f32.mrf.mxu0
    %v422 = vadd.f32 0.0, %v421
    %423 = vmatprep.mubr.f32.mxu0 0.0
    %424 = vmatmul.mubr.f32.gmra.mxu0 %v163
    %v425 = vpop.f32.mrf.mxu0
    %v426 = vadd.f32 0.0, %v425
    %v427 = vpop.f32.mrf.mxu0
    %v428 = vadd.f32 0.0, %v427
    %429 = vmatprep.mubr.f32.mxu0 0.0
    %430 = vmatmul.mubr.f32.gmra.mxu0 %v166
    %v431 = vpop.f32.mrf.mxu0
    %v432 = vadd.f32 0.0, %v431
    %v433 = vpop.f32.mrf.mxu0
    %v434 = vadd.f32 0.0, %v433
    %435 = vmatprep.mubr.f32.mxu0 0.0
    %436 = vmatmul.mubr.f32.gmra.mxu0 %v169
    %v437 = vpop.f32.mrf.mxu0
    %v438 = vadd.f32 0.0, %v437
    %v439 = vpop.f32.mrf.mxu0
    %v440 = vadd.f32 0.0, %v439
    %441 = vmatprep.mubr.f32.mxu0 0.0
    %442 = vmatmul.mubr.f32.gmra.mxu0 %v172
    %v443 = vpop.f32.mrf.mxu0
    %v444 = vadd.f32 0.0, %v443
    %v445 = vpop.f32.mrf.mxu0
    %v446 = vadd.f32 0.0, %v445
    %447 = vdwg.mxu0
    %448 = vmatprep.subr.mxu0 0.0
    %449 = vmatpush1.msra.mxu0 0.0
    %450 = vmatprep.subr.mxu0 0.0
    %451 = vmatpush1.msra.mxu0 0.0
    %452 = vmatprep.subr.mxu0 0.0
    %453 = vmatpush1.msra.mxu0 0.0
    %454 = vmatprep.subr.mxu0 0.0
    %455 = vmatpush1.msra.mxu0 0.0
    %456 = vmatprep.subr.mxu0 0.0
    %457 = vmatpush1.msra.mxu0 0.0
    %458 = vmatprep.subr.mxu0 0.0
    %459 = vmatpush1.msra.mxu0 0.0
    %460 = vmatprep.subr.mxu0 0.0
    %461 = vmatpush1.msra.mxu0 0.0
    %462 = vmatprep.subr.mxu0 0.0
    %463 = vmatpush1.msra.mxu0 0.0
    %464 = vmatprep.subr.mxu0 0.0
    %465 = vmatpush1.msra.mxu0 0.0
    %466 = vmatprep.subr.mxu0 0.0
    %467 = vmatpush1.msra.mxu0 0.0
    %468 = vmatprep.subr.mxu0 0.0
    %469 = vmatpush1.msra.mxu0 0.0
    %470 = vmatprep.subr.mxu0 0.0
    %471 = vmatpush1.msra.mxu0 0.0
    %472 = vmatprep.subr.mxu0 0.0
    %473 = vmatpush1.msra.mxu0 0.0
    %474 = vmatprep.subr.mxu0 %v98
    %475 = vmatpush1.msra.mxu0 %v97
    %476 = vmatprep.subr.mxu0 %v66
    %477 = vmatpush1.msra.mxu0 %v65
    %478 = vmatprep.subr.mxu0 %v34
    %479 = vmatpush1.msra.mxu0 %v33
    %480 = vmatprep.subr.mxu0 0.0
    %481 = vmatpush2.msra.mxu0 0.0
    %482 = vmatprep.subr.mxu0 0.0
    %483 = vmatpush2.msra.mxu0 0.0
    %484 = vmatprep.subr.mxu0 0.0
    %485 = vmatpush2.msra.mxu0 0.0
    %486 = vmatprep.subr.mxu0 0.0
    %487 = vmatpush2.msra.mxu0 0.0
    %488 = vmatprep.subr.mxu0 0.0
    %489 = vmatpush2.msra.mxu0 0.0
    %490 = vmatprep.subr.mxu0 0.0
    %491 = vmatpush2.msra.mxu0 0.0
    %492 = vmatprep.subr.mxu0 0.0
    %493 = vmatpush2.msra.mxu0 0.0
    %494 = vmatprep.subr.mxu0 0.0
    %495 = vmatpush2.msra.mxu0 0.0
    %496 = vmatprep.subr.mxu0 0.0
    %497 = vmatpush2.msra.mxu0 0.0
    %498 = vmatprep.subr.mxu0 0.0
    %499 = vmatpush2.msra.mxu0 0.0
    %500 = vmatprep.subr.mxu0 0.0
    %501 = vmatpush2.msra.mxu0 0.0
    %502 = vmatprep.subr.mxu0 0.0
    %503 = vmatpush2.msra.mxu0 0.0
    %504 = vmatprep.subr.mxu0 0.0
    %505 = vmatpush2.msra.mxu0 0.0
    %506 = vmatprep.subr.mxu0 0.0
    %507 = vmatpush2.msra.mxu0 0.0
    %508 = vmatprep.subr.mxu0 0.0
    %509 = vmatpush2.msra.mxu0 0.0
    %510 = vmatprep.subr.mxu0 0.0
    %511 = vmatpush2.msra.mxu0 0.0
    %512 = vmatprep.mubr.f32.mxu0 0.0
    %513 = vmatmul.mubr.f32.gmra.mxu0 %v139
    %v514 = vpop.f32.mrf.mxu0
    %v515 = vadd.f32 0.0, %v514
    %v516 = vpop.f32.mrf.mxu0
    %v517 = vadd.f32 0.0, %v516
    %518 = vmatprep.mubr.f32.mxu0 0.0
    %519 = vmatmul.mubr.f32.gmra.mxu0 %v142
    %v520 = vpop.f32.mrf.mxu0
    %v521 = vadd.f32 0.0, %v520
    %v522 = vpop.f32.mrf.mxu0
    %v523 = vadd.f32 0.0, %v522
    %524 = vmatprep.mubr.f32.mxu0 0.0
    %525 = vmatmul.mubr.f32.gmra.mxu0 %v145
    %v526 = vpop.f32.mrf.mxu0
    %v527 = vadd.f32 0.0, %v526
    %v528 = vpop.f32.mrf.mxu0
    %v529 = vadd.f32 0.0, %v528
    %530 = vmatprep.mubr.f32.mxu0 0.0
    %531 = vmatmul.mubr.f32.gmra.mxu0 %v148
    %v532 = vpop.f32.mrf.mxu0
    %v533 = vadd.f32 0.0, %v532
    %v534 = vpop.f32.mrf.mxu0
    %v535 = vadd.f32 0.0, %v534
    %536 = vmatprep.mubr.f32.mxu0 0.0
    %537 = vmatmul.mubr.f32.gmra.mxu0 %v151
    %v538 = vpop.f32.mrf.mxu0
    %v539 = vadd.f32 0.0, %v538
    %v540 = vpop.f32.mrf.mxu0
    %v541 = vadd.f32 0.0, %v540
    %542 = vmatprep.mubr.f32.mxu0 0.0
    %543 = vmatmul.mubr.f32.gmra.mxu0 %v154
    %v544 = vpop.f32.mrf.mxu0
    %v545 = vadd.f32 0.0, %v544
    %v546 = vpop.f32.mrf.mxu0
    %v547 = vadd.f32 0.0, %v546
    %548 = vmatprep.mubr.f32.mxu0 0.0
    %549 = vmatmul.mubr.f32.gmra.mxu0 %v157
    %v550 = vpop.f32.mrf.mxu0
    %v551 = vadd.f32 0.0, %v550
    %v552 = vpop.f32.mrf.mxu0
    %v553 = vadd.f32 0.0, %v552
    %554 = vmatprep.mubr.f32.mxu0 0.0
    %555 = vmatmul.mubr.f32.gmra.mxu0 %v160
    %v556 = vpop.f32.mrf.mxu0
    %v557 = vadd.f32 0.0, %v556
    %v558 = vpop.f32.mrf.mxu0
    %v559 = vadd.f32 0.0, %v558
    %560 = vmatprep.mubr.f32.mxu0 0.0
    %561 = vmatmul.mubr.f32.gmra.mxu0 %v163
    %v562 = vpop.f32.mrf.mxu0
    %v563 = vadd.f32 0.0, %v562
    %v564 = vpop.f32.mrf.mxu0
    %v565 = vadd.f32 0.0, %v564
    %566 = vmatprep.mubr.f32.mxu0 0.0
    %567 = vmatmul.mubr.f32.gmra.mxu0 %v166
    %v568 = vpop.f32.mrf.mxu0
    %v569 = vadd.f32 0.0, %v568
    %v570 = vpop.f32.mrf.mxu0
    %v571 = vadd.f32 0.0, %v570
    %572 = vmatprep.mubr.f32.mxu0 0.0
    %573 = vmatmul.mubr.f32.gmra.mxu0 %v169
    %v574 = vpop.f32.mrf.mxu0
    %v575 = vadd.f32 0.0, %v574
    %v576 = vpop.f32.mrf.mxu0
    %v577 = vadd.f32 0.0, %v576
    %578 = vmatprep.mubr.f32.mxu0 0.0
    %579 = vmatmul.mubr.f32.gmra.mxu0 %v172
    %v580 = vpop.f32.mrf.mxu0
    %v581 = vadd.f32 0.0, %v580
    %v582 = vpop.f32.mrf.mxu0
    %v583 = vadd.f32 0.0, %v582
    %584 = vdwg.mxu0
    %585 = vmatprep.subr.mxu0 0.0
    %586 = vmatpush1.msra.mxu0 0.0
    %587 = vmatprep.subr.mxu0 0.0
    %588 = vmatpush1.msra.mxu0 0.0
    %589 = vmatprep.subr.mxu0 0.0
    %590 = vmatpush1.msra.mxu0 0.0
    %591 = vmatprep.subr.mxu0 0.0
    %592 = vmatpush1.msra.mxu0 0.0
    %593 = vmatprep.subr.mxu0 0.0
    %594 = vmatpush1.msra.mxu0 0.0
    %595 = vmatprep.subr.mxu0 0.0
    %596 = vmatpush1.msra.mxu0 0.0
    %597 = vmatprep.subr.mxu0 0.0
    %598 = vmatpush1.msra.mxu0 0.0
    %599 = vmatprep.subr.mxu0 0.0
    %600 = vmatpush1.msra.mxu0 0.0
    %601 = vmatprep.subr.mxu0 0.0
    %602 = vmatpush1.msra.mxu0 0.0
    %603 = vmatprep.subr.mxu0 0.0
    %604 = vmatpush1.msra.mxu0 0.0
    %605 = vmatprep.subr.mxu0 0.0
    %606 = vmatpush1.msra.mxu0 0.0
    %607 = vmatprep.subr.mxu0 0.0
    %608 = vmatpush1.msra.mxu0 0.0
    %609 = vmatprep.subr.mxu0 0.0
    %610 = vmatpush1.msra.mxu0 0.0
    %611 = vmatprep.subr.mxu0 %v100
    %612 = vmatpush1.msra.mxu0 %v99
    %613 = vmatprep.subr.mxu0 %v68
    %614 = vmatpush1.msra.mxu0 %v67
    %615 = vmatprep.subr.mxu0 %v36
    %616 = vmatpush1.msra.mxu0 %v35
    %617 = vmatprep.subr.mxu0 0.0
    %618 = vmatpush2.msra.mxu0 0.0
    %619 = vmatprep.subr.mxu0 0.0
    %620 = vmatpush2.msra.mxu0 0.0
    %621 = vmatprep.subr.mxu0 0.0
    %622 = vmatpush2.msra.mxu0 0.0
    %623 = vmatprep.subr.mxu0 0.0
    %624 = vmatpush2.msra.mxu0 0.0
    %625 = vmatprep.subr.mxu0 0.0
    %626 = vmatpush2.msra.mxu0 0.0
    %627 = vmatprep.subr.mxu0 0.0
    %628 = vmatpush2.msra.mxu0 0.0
    %629 = vmatprep.subr.mxu0 0.0
    %630 = vmatpush2.msra.mxu0 0.0
    %631 = vmatprep.subr.mxu0 0.0
    %632 = vmatpush2.msra.mxu0 0.0
    %633 = vmatprep.subr.mxu0 0.0
    %634 = vmatpush2.msra.mxu0 0.0
    %635 = vmatprep.subr.mxu0 0.0
    %636 = vmatpush2.msra.mxu0 0.0
    %637 = vmatprep.subr.mxu0 0.0
    %638 = vmatpush2.msra.mxu0 0.0
    %639 = vmatprep.subr.mxu0 0.0
    %640 = vmatpush2.msra.mxu0 0.0
    %641 = vmatprep.subr.mxu0 0.0
    %642 = vmatpush2.msra.mxu0 0.0
    %643 = vmatprep.subr.mxu0 0.0
    %644 = vmatpush2.msra.mxu0 0.0
    %645 = vmatprep.subr.mxu0 0.0
    %646 = vmatpush2.msra.mxu0 0.0
    %647 = vmatprep.subr.mxu0 0.0
    %648 = vmatpush2.msra.mxu0 0.0
    %649 = vmatprep.mubr.f32.mxu0 0.0
    %650 = vmatmul.mubr.f32.gmra.mxu0 %v139
    %v651 = vpop.f32.mrf.mxu0
    %v652 = vadd.f32 0.0, %v651
    %v653 = vpop.f32.mrf.mxu0
    %v654 = vadd.f32 0.0, %v653
    %655 = vmatprep.mubr.f32.mxu0 0.0
    %656 = vmatmul.mubr.f32.gmra.mxu0 %v142
    %v657 = vpop.f32.mrf.mxu0
    %v658 = vadd.f32 0.0, %v657
    %v659 = vpop.f32.mrf.mxu0
    %v660 = vadd.f32 0.0, %v659
    %661 = vmatprep.mubr.f32.mxu0 0.0
    %662 = vmatmul.mubr.f32.gmra.mxu0 %v145
    %v663 = vpop.f32.mrf.mxu0
    %v664 = vadd.f32 0.0, %v663
    %v665 = vpop.f32.mrf.mxu0
    %v666 = vadd.f32 0.0, %v665
    %667 = vmatprep.mubr.f32.mxu0 0.0
    %668 = vmatmul.mubr.f32.gmra.mxu0 %v148
    %v669 = vpop.f32.mrf.mxu0
    %v670 = vadd.f32 0.0, %v669
    %v671 = vpop.f32.mrf.mxu0
    %v672 = vadd.f32 0.0, %v671
    %673 = vmatprep.mubr.f32.mxu0 0.0
    %674 = vmatmul.mubr.f32.gmra.mxu0 %v151
    %v675 = vpop.f32.mrf.mxu0
    %v676 = vadd.f32 0.0, %v675
    %v677 = vpop.f32.mrf.mxu0
    %v678 = vadd.f32 0.0, %v677
    %679 = vmatprep.mubr.f32.mxu0 0.0
    %680 = vmatmul.mubr.f32.gmra.mxu0 %v154
    %v681 = vpop.f32.mrf.mxu0
    %v682 = vadd.f32 0.0, %v681
    %v683 = vpop.f32.mrf.mxu0
    %v684 = vadd.f32 0.0, %v683
    %685 = vmatprep.mubr.f32.mxu0 0.0
    %686 = vmatmul.mubr.f32.gmra.mxu0 %v157
    %v687 = vpop.f32.mrf.mxu0
    %v688 = vadd.f32 0.0, %v687
    %v689 = vpop.f32.mrf.mxu0
    %v690 = vadd.f32 0.0, %v689
    %691 = vmatprep.mubr.f32.mxu0 0.0
    %692 = vmatmul.mubr.f32.gmra.mxu0 %v160
    %v693 = vpop.f32.mrf.mxu0
    %v694 = vadd.f32 0.0, %v693
    %v695 = vpop.f32.mrf.mxu0
    %v696 = vadd.f32 0.0, %v695
    %697 = vmatprep.mubr.f32.mxu0 0.0
    %698 = vmatmul.mubr.f32.gmra.mxu0 %v163
    %v699 = vpop.f32.mrf.mxu0
    %v700 = vadd.f32 0.0, %v699
    %v701 = vpop.f32.mrf.mxu0
    %v702 = vadd.f32 0.0, %v701
    %703 = vmatprep.mubr.f32.mxu0 0.0
    %704 = vmatmul.mubr.f32.gmra.mxu0 %v166
    %v705 = vpop.f32.mrf.mxu0
    %v706 = vadd.f32 0.0, %v705
    %v707 = vpop.f32.mrf.mxu0
    %v708 = vadd.f32 0.0, %v707
    %709 = vmatprep.mubr.f32.mxu0 0.0
    %710 = vmatmul.mubr.f32.gmra.mxu0 %v169
    %v711 = vpop.f32.mrf.mxu0
    %v712 = vadd.f32 0.0, %v711
    %v713 = vpop.f32.mrf.mxu0
    %v714 = vadd.f32 0.0, %v713
    %715 = vmatprep.mubr.f32.mxu0 0.0
    %716 = vmatmul.mubr.f32.gmra.mxu0 %v172
    %v717 = vpop.f32.mrf.mxu0
    %v718 = vadd.f32 0.0, %v717
    %v719 = vpop.f32.mrf.mxu0
    %v720 = vadd.f32 0.0, %v719
    %721 = vdwg.mxu0
    %722 = vmatprep.subr.mxu0 0.0
    %723 = vmatpush1.msra.mxu0 0.0
    %724 = vmatprep.subr.mxu0 0.0
    %725 = vmatpush1.msra.mxu0 0.0
    %726 = vmatprep.subr.mxu0 0.0
    %727 = vmatpush1.msra.mxu0 0.0
    %728 = vmatprep.subr.mxu0 0.0
    %729 = vmatpush1.msra.mxu0 0.0
    %730 = vmatprep.subr.mxu0 0.0
    %731 = vmatpush1.msra.mxu0 0.0
    %732 = vmatprep.subr.mxu0 0.0
    %733 = vmatpush1.msra.mxu0 0.0
    %734 = vmatprep.subr.mxu0 0.0
    %735 = vmatpush1.msra.mxu0 0.0
    %736 = vmatprep.subr.mxu0 0.0
    %737 = vmatpush1.msra.mxu0 0.0
    %738 = vmatprep.subr.mxu0 0.0
    %739 = vmatpush1.msra.mxu0 0.0
    %740 = vmatprep.subr.mxu0 0.0
    %741 = vmatpush1.msra.mxu0 0.0
    %742 = vmatprep.subr.mxu0 0.0
    %743 = vmatpush1.msra.mxu0 0.0
    %744 = vmatprep.subr.mxu0 0.0
    %745 = vmatpush1.msra.mxu0 0.0
    %746 = vmatprep.subr.mxu0 0.0
    %747 = vmatpush1.msra.mxu0 0.0
    %748 = vmatprep.subr.mxu0 %v102
    %749 = vmatpush1.msra.mxu0 %v101
    %750 = vmatprep.subr.mxu0 %v70
    %751 = vmatpush1.msra.mxu0 %v69
    %752 = vmatprep.subr.mxu0 %v38
    %753 = vmatpush1.msra.mxu0 %v37
    %754 = vmatprep.subr.mxu0 0.0
    %755 = vmatpush2.msra.mxu0 0.0
    %756 = vmatprep.subr.mxu0 0.0
    %757 = vmatpush2.msra.mxu0 0.0
    %758 = vmatprep.subr.mxu0 0.0
    %759 = vmatpush2.msra.mxu0 0.0
    %760 = vmatprep.subr.mxu0 0.0
    %761 = vmatpush2.msra.mxu0 0.0
    %762 = vmatprep.subr.mxu0 0.0
    %763 = vmatpush2.msra.mxu0 0.0
    %764 = vmatprep.subr.mxu0 0.0
    %765 = vmatpush2.msra.mxu0 0.0
    %766 = vmatprep.subr.mxu0 0.0
    %767 = vmatpush2.msra.mxu0 0.0
    %768 = vmatprep.subr.mxu0 0.0
    %769 = vmatpush2.msra.mxu0 0.0
    %770 = vmatprep.subr.mxu0 0.0
    %771 = vmatpush2.msra.mxu0 0.0
    %772 = vmatprep.subr.mxu0 0.0
    %773 = vmatpush2.msra.mxu0 0.0
    %774 = vmatprep.subr.mxu0 0.0
    %775 = vmatpush2.msra.mxu0 0.0
    %776 = vmatprep.subr.mxu0 0.0
    %777 = vmatpush2.msra.mxu0 0.0
    %778 = vmatprep.subr.mxu0 0.0
    %779 = vmatpush2.msra.mxu0 0.0
    %780 = vmatprep.subr.mxu0 0.0
    %781 = vmatpush2.msra.mxu0 0.0
    %782 = vmatprep.subr.mxu0 0.0
    %783 = vmatpush2.msra.mxu0 0.0
    %784 = vmatprep.subr.mxu0 0.0
    %785 = vmatpush2.msra.mxu0 0.0
    %786 = vmatprep.mubr.f32.mxu0 0.0
    %787 = vmatmul.mubr.f32.gmra.mxu0 %v139
    %v788 = vpop.f32.mrf.mxu0
    %v789 = vadd.f32 0.0, %v788
    %v790 = vpop.f32.mrf.mxu0
    %v791 = vadd.f32 0.0, %v790
    %792 = vmatprep.mubr.f32.mxu0 0.0
    %793 = vmatmul.mubr.f32.gmra.mxu0 %v142
    %v794 = vpop.f32.mrf.mxu0
    %v795 = vadd.f32 0.0, %v794
    %v796 = vpop.f32.mrf.mxu0
    %v797 = vadd.f32 0.0, %v796
    %798 = vmatprep.mubr.f32.mxu0 0.0
    %799 = vmatmul.mubr.f32.gmra.mxu0 %v145
    %v800 = vpop.f32.mrf.mxu0
    %v801 = vadd.f32 0.0, %v800
    %v802 = vpop.f32.mrf.mxu0
    %v803 = vadd.f32 0.0, %v802
    %804 = vmatprep.mubr.f32.mxu0 0.0
    %805 = vmatmul.mubr.f32.gmra.mxu0 %v148
    %v806 = vpop.f32.mrf.mxu0
    %v807 = vadd.f32 0.0, %v806
    %v808 = vpop.f32.mrf.mxu0
    %v809 = vadd.f32 0.0, %v808
    %810 = vmatprep.mubr.f32.mxu0 0.0
    %811 = vmatmul.mubr.f32.gmra.mxu0 %v151
    %v812 = vpop.f32.mrf.mxu0
    %v813 = vadd.f32 0.0, %v812
    %v814 = vpop.f32.mrf.mxu0
    %v815 = vadd.f32 0.0, %v814
    %816 = vmatprep.mubr.f32.mxu0 0.0
    %817 = vmatmul.mubr.f32.gmra.mxu0 %v154
    %v818 = vpop.f32.mrf.mxu0
    %v819 = vadd.f32 0.0, %v818
    %v820 = vpop.f32.mrf.mxu0
    %v821 = vadd.f32 0.0, %v820
    %822 = vmatprep.mubr.f32.mxu0 0.0
    %823 = vmatmul.mubr.f32.gmra.mxu0 %v157
    %v824 = vpop.f32.mrf.mxu0
    %v825 = vadd.f32 0.0, %v824
    %v826 = vpop.f32.mrf.mxu0
    %v827 = vadd.f32 0.0, %v826
    %828 = vmatprep.mubr.f32.mxu0 0.0
    %829 = vmatmul.mubr.f32.gmra.mxu0 %v160
    %v830 = vpop.f32.mrf.mxu0
    %v831 = vadd.f32 0.0, %v830
    %v832 = vpop.f32.mrf.mxu0
    %v833 = vadd.f32 0.0, %v832
    %834 = vmatprep.mubr.f32.mxu0 0.0
    %835 = vmatmul.mubr.f32.gmra.mxu0 %v163
    %v836 = vpop.f32.mrf.mxu0
    %v837 = vadd.f32 0.0, %v836
    %v838 = vpop.f32.mrf.mxu0
    %v839 = vadd.f32 0.0, %v838
    %840 = vmatprep.mubr.f32.mxu0 0.0
    %841 = vmatmul.mubr.f32.gmra.mxu0 %v166
    %v842 = vpop.f32.mrf.mxu0
    %v843 = vadd.f32 0.0, %v842
    %v844 = vpop.f32.mrf.mxu0
    %v845 = vadd.f32 0.0, %v844
    %846 = vmatprep.mubr.f32.mxu0 0.0
    %847 = vmatmul.mubr.f32.gmra.mxu0 %v169
    %v848 = vpop.f32.mrf.mxu0
    %v849 = vadd.f32 0.0, %v848
    %v850 = vpop.f32.mrf.mxu0
    %v851 = vadd.f32 0.0, %v850
    %852 = vmatprep.mubr.f32.mxu0 0.0
    %853 = vmatmul.mubr.f32.gmra.mxu0 %v172
    %v854 = vpop.f32.mrf.mxu0
    %v855 = vadd.f32 0.0, %v854
    %v856 = vpop.f32.mrf.mxu0
    %v857 = vadd.f32 0.0, %v856
    %858 = vdwg.mxu0
    %859 = vmatprep.subr.mxu0 0.0
    %860 = vmatpush1.msra.mxu0 0.0
    %861 = vmatprep.subr.mxu0 0.0
    %862 = vmatpush1.msra.mxu0 0.0
    %863 = vmatprep.subr.mxu0 0.0
    %864 = vmatpush1.msra.mxu0 0.0
    %865 = vmatprep.subr.mxu0 0.0
    %866 = vmatpush1.msra.mxu0 0.0
    %867 = vmatprep.subr.mxu0 0.0
    %868 = vmatpush1.msra.mxu0 0.0
    %869 = vmatprep.subr.mxu0 0.0
    %870 = vmatpush1.msra.mxu0 0.0
    %871 = vmatprep.subr.mxu0 0.0
    %872 = vmatpush1.msra.mxu0 0.0
    %873 = vmatprep.subr.mxu0 0.0
    %874 = vmatpush1.msra.mxu0 0.0
    %875 = vmatprep.subr.mxu0 0.0
    %876 = vmatpush1.msra.mxu0 0.0
    %877 = vmatprep.subr.mxu0 0.0
    %878 = vmatpush1.msra.mxu0 0.0
    %879 = vmatprep.subr.mxu0 0.0
    %880 = vmatpush1.msra.mxu0 0.0
    %881 = vmatprep.subr.mxu0 0.0
    %882 = vmatpush1.msra.mxu0 0.0
    %883 = vmatprep.subr.mxu0 0.0
    %884 = vmatpush1.msra.mxu0 0.0
    %885 = vmatprep.subr.mxu0 %v104
    %886 = vmatpush1.msra.mxu0 %v103
    %887 = vmatprep.subr.mxu0 %v72
    %888 = vmatpush1.msra.mxu0 %v71
    %889 = vmatprep.subr.mxu0 %v40
    %890 = vmatpush1.msra.mxu0 %v39
    %891 = vmatprep.subr.mxu0 0.0
    %892 = vmatpush2.msra.mxu0 0.0
    %893 = vmatprep.subr.mxu0 0.0
    %894 = vmatpush2.msra.mxu0 0.0
    %895 = vmatprep.subr.mxu0 0.0
    %896 = vmatpush2.msra.mxu0 0.0
    %897 = vmatprep.subr.mxu0 0.0
    %898 = vmatpush2.msra.mxu0 0.0
    %899 = vmatprep.subr.mxu0 0.0
    %900 = vmatpush2.msra.mxu0 0.0
    %901 = vmatprep.subr.mxu0 0.0
    %902 = vmatpush2.msra.mxu0 0.0
    %903 = vmatprep.subr.mxu0 0.0
    %904 = vmatpush2.msra.mxu0 0.0
    %905 = vmatprep.subr.mxu0 0.0
    %906 = vmatpush2.msra.mxu0 0.0
    %907 = vmatprep.subr.mxu0 0.0
    %908 = vmatpush2.msra.mxu0 0.0
    %909 = vmatprep.subr.mxu0 0.0
    %910 = vmatpush2.msra.mxu0 0.0
    %911 = vmatprep.subr.mxu0 0.0
    %912 = vmatpush2.msra.mxu0 0.0
    %913 = vmatprep.subr.mxu0 0.0
    %914 = vmatpush2.msra.mxu0 0.0
    %915 = vmatprep.subr.mxu0 0.0
    %916 = vmatpush2.msra.mxu0 0.0
    %917 = vmatprep.subr.mxu0 0.0
    %918 = vmatpush2.msra.mxu0 0.0
    %919 = vmatprep.subr.mxu0 0.0
    %920 = vmatpush2.msra.mxu0 0.0
    %921 = vmatprep.subr.mxu0 0.0
    %922 = vmatpush2.msra.mxu0 0.0
    %923 = vmatprep.mubr.f32.mxu0 0.0
    %924 = vmatmul.mubr.f32.gmra.mxu0 %v139
    %v925 = vpop.f32.mrf.mxu0
    %v926 = vadd.f32 0.0, %v925
    %v927 = vpop.f32.mrf.mxu0
    %v928 = vadd.f32 0.0, %v927
    %929 = vmatprep.mubr.f32.mxu0 0.0
    %930 = vmatmul.mubr.f32.gmra.mxu0 %v142
    %v931 = vpop.f32.mrf.mxu0
    %v932 = vadd.f32 0.0, %v931
    %v933 = vpop.f32.mrf.mxu0
    %v934 = vadd.f32 0.0, %v933
    %935 = vmatprep.mubr.f32.mxu0 0.0
    %936 = vmatmul.mubr.f32.gmra.mxu0 %v145
    %v937 = vpop.f32.mrf.mxu0
    %v938 = vadd.f32 0.0, %v937
    %v939 = vpop.f32.mrf.mxu0
    %v940 = vadd.f32 0.0, %v939
    %941 = vmatprep.mubr.f32.mxu0 0.0
    %942 = vmatmul.mubr.f32.gmra.mxu0 %v148
    %v943 = vpop.f32.mrf.mxu0
    %v944 = vadd.f32 0.0, %v943
    %v945 = vpop.f32.mrf.mxu0
    %v946 = vadd.f32 0.0, %v945
    %947 = vmatprep.mubr.f32.mxu0 0.0
    %948 = vmatmul.mubr.f32.gmra.mxu0 %v151
    %v949 = vpop.f32.mrf.mxu0
    %v950 = vadd.f32 0.0, %v949
    %v951 = vpop.f32.mrf.mxu0
    %v952 = vadd.f32 0.0, %v951
    %953 = vmatprep.mubr.f32.mxu0 0.0
    %954 = vmatmul.mubr.f32.gmra.mxu0 %v154
    %v955 = vpop.f32.mrf.mxu0
    %v956 = vadd.f32 0.0, %v955
    %v957 = vpop.f32.mrf.mxu0
    %v958 = vadd.f32 0.0, %v957
    %959 = vmatprep.mubr.f32.mxu0 0.0
    %960 = vmatmul.mubr.f32.gmra.mxu0 %v157
    %v961 = vpop.f32.mrf.mxu0
    %v962 = vadd.f32 0.0, %v961
    %v963 = vpop.f32.mrf.mxu0
    %v964 = vadd.f32 0.0, %v963
    %965 = vmatprep.mubr.f32.mxu0 0.0
    %966 = vmatmul.mubr.f32.gmra.mxu0 %v160
    %v967 = vpop.f32.mrf.mxu0
    %v968 = vadd.f32 0.0, %v967
    %v969 = vpop.f32.mrf.mxu0
    %v970 = vadd.f32 0.0, %v969
    %971 = vmatprep.mubr.f32.mxu0 0.0
    %972 = vmatmul.mubr.f32.gmra.mxu0 %v163
    %v973 = vpop.f32.mrf.mxu0
    %v974 = vadd.f32 0.0, %v973
    %v975 = vpop.f32.mrf.mxu0
    %v976 = vadd.f32 0.0, %v975
    %977 = vmatprep.mubr.f32.mxu0 0.0
    %978 = vmatmul.mubr.f32.gmra.mxu0 %v166
    %v979 = vpop.f32.mrf.mxu0
    %v980 = vadd.f32 0.0, %v979
    %v981 = vpop.f32.mrf.mxu0
    %v982 = vadd.f32 0.0, %v981
    %983 = vmatprep.mubr.f32.mxu0 0.0
    %984 = vmatmul.mubr.f32.gmra.mxu0 %v169
    %v985 = vpop.f32.mrf.mxu0
    %v986 = vadd.f32 0.0, %v985
    %v987 = vpop.f32.mrf.mxu0
    %v988 = vadd.f32 0.0, %v987
    %989 = vmatprep.mubr.f32.mxu0 0.0
    %990 = vmatmul.mubr.f32.gmra.mxu0 %v172
    %v991 = vpop.f32.mrf.mxu0
    %v992 = vadd.f32 0.0, %v991
    %v993 = vpop.f32.mrf.mxu0
    %v994 = vadd.f32 0.0, %v993
    %995 = vdwg.mxu0
    %996 = vmatprep.subr.mxu0 0.0
    %997 = vmatpush1.msra.mxu0 0.0
    %998 = vmatprep.subr.mxu0 0.0
    %999 = vmatpush1.msra.mxu0 0.0
    %1000 = vmatprep.subr.mxu0 0.0
    %1001 = vmatpush1.msra.mxu0 0.0
    %1002 = vmatprep.subr.mxu0 0.0
    %1003 = vmatpush1.msra.mxu0 0.0
    %1004 = vmatprep.subr.mxu0 0.0
    %1005 = vmatpush1.msra.mxu0 0.0
    %1006 = vmatprep.subr.mxu0 0.0
    %1007 = vmatpush1.msra.mxu0 0.0
    %1008 = vmatprep.subr.mxu0 0.0
    %1009 = vmatpush1.msra.mxu0 0.0
    %1010 = vmatprep.subr.mxu0 0.0
    %1011 = vmatpush1.msra.mxu0 0.0
    %1012 = vmatprep.subr.mxu0 0.0
    %1013 = vmatpush1.msra.mxu0 0.0
    %1014 = vmatprep.subr.mxu0 0.0
    %1015 = vmatpush1.msra.mxu0 0.0
    %1016 = vmatprep.subr.mxu0 0.0
    %1017 = vmatpush1.msra.mxu0 0.0
    %1018 = vmatprep.subr.mxu0 0.0
    %1019 = vmatpush1.msra.mxu0 0.0
    %1020 = vmatprep.subr.mxu0 0.0
    %1021 = vmatpush1.msra.mxu0 0.0
    %1022 = vmatprep.subr.mxu0 %v106
    %1023 = vmatpush1.msra.mxu0 %v105
    %1024 = vmatprep.subr.mxu0 %v74
    %1025 = vmatpush1.msra.mxu0 %v73
    %1026 = vmatprep.subr.mxu0 %v42
    %1027 = vmatpush1.msra.mxu0 %v41
    %1028 = vmatprep.subr.mxu0 0.0
    %1029 = vmatpush2.msra.mxu0 0.0
    %1030 = vmatprep.subr.mxu0 0.0
    %1031 = vmatpush2.msra.mxu0 0.0
    %1032 = vmatprep.subr.mxu0 0.0
    %1033 = vmatpush2.msra.mxu0 0.0
    %1034 = vmatprep.subr.mxu0 0.0
    %1035 = vmatpush2.msra.mxu0 0.0
    %1036 = vmatprep.subr.mxu0 0.0
    %1037 = vmatpush2.msra.mxu0 0.0
    %1038 = vmatprep.subr.mxu0 0.0
    %1039 = vmatpush2.msra.mxu0 0.0
    %1040 = vmatprep.subr.mxu0 0.0
    %1041 = vmatpush2.msra.mxu0 0.0
    %1042 = vmatprep.subr.mxu0 0.0
    %1043 = vmatpush2.msra.mxu0 0.0
    %1044 = vmatprep.subr.mxu0 0.0
    %1045 = vmatpush2.msra.mxu0 0.0
    %1046 = vmatprep.subr.mxu0 0.0
    %1047 = vmatpush2.msra.mxu0 0.0
    %1048 = vmatprep.subr.mxu0 0.0
    %1049 = vmatpush2.msra.mxu0 0.0
    %1050 = vmatprep.subr.mxu0 0.0
    %1051 = vmatpush2.msra.mxu0 0.0
    %1052 = vmatprep.subr.mxu0 0.0
    %1053 = vmatpush2.msra.mxu0 0.0
    %1054 = vmatprep.subr.mxu0 0.0
    %1055 = vmatpush2.msra.mxu0 0.0
    %1056 = vmatprep.subr.mxu0 0.0
    %1057 = vmatpush2.msra.mxu0 0.0
    %1058 = vmatprep.subr.mxu0 0.0
    %1059 = vmatpush2.msra.mxu0 0.0
    %1060 = vmatprep.mubr.f32.mxu0 0.0
    %1061 = vmatmul.mubr.f32.gmra.mxu0 %v139
    %v1062 = vpop.f32.mrf.mxu0
    %v1063 = vadd.f32 0.0, %v1062
    %v1064 = vpop.f32.mrf.mxu0
    %v1065 = vadd.f32 0.0, %v1064
    %1066 = vmatprep.mubr.f32.mxu0 0.0
    %1067 = vmatmul.mubr.f32.gmra.mxu0 %v142
    %v1068 = vpop.f32.mrf.mxu0
    %v1069 = vadd.f32 0.0, %v1068
    %v1070 = vpop.f32.mrf.mxu0
    %v1071 = vadd.f32 0.0, %v1070
    %1072 = vmatprep.mubr.f32.mxu0 0.0
    %1073 = vmatmul.mubr.f32.gmra.mxu0 %v145
    %v1074 = vpop.f32.mrf.mxu0
    %v1075 = vadd.f32 0.0, %v1074
    %v1076 = vpop.f32.mrf.mxu0
    %v1077 = vadd.f32 0.0, %v1076
    %1078 = vmatprep.mubr.f32.mxu0 0.0
    %1079 = vmatmul.mubr.f32.gmra.mxu0 %v148
    %v1080 = vpop.f32.mrf.mxu0
    %v1081 = vadd.f32 0.0, %v1080
    %v1082 = vpop.f32.mrf.mxu0
    %v1083 = vadd.f32 0.0, %v1082
    %1084 = vmatprep.mubr.f32.mxu0 0.0
    %1085 = vmatmul.mubr.f32.gmra.mxu0 %v151
    %v1086 = vpop.f32.mrf.mxu0
    %v1087 = vadd.f32 0.0, %v1086
    %v1088 = vpop.f32.mrf.mxu0
    %v1089 = vadd.f32 0.0, %v1088
    %1090 = vmatprep.mubr.f32.mxu0 0.0
    %1091 = vmatmul.mubr.f32.gmra.mxu0 %v154
    %v1092 = vpop.f32.mrf.mxu0
    %v1093 = vadd.f32 0.0, %v1092
    %v1094 = vpop.f32.mrf.mxu0
    %v1095 = vadd.f32 0.0, %v1094
    %1096 = vmatprep.mubr.f32.mxu0 0.0
    %1097 = vmatmul.mubr.f32.gmra.mxu0 %v157
    %v1098 = vpop.f32.mrf.mxu0
    %v1099 = vadd.f32 0.0, %v1098
    %v1100 = vpop.f32.mrf.mxu0
    %v1101 = vadd.f32 0.0, %v1100
    %1102 = vmatprep.mubr.f32.mxu0 0.0
    %1103 = vmatmul.mubr.f32.gmra.mxu0 %v160
    %v1104 = vpop.f32.mrf.mxu0
    %v1105 = vadd.f32 0.0, %v1104
    %v1106 = vpop.f32.mrf.mxu0
    %v1107 = vadd.f32 0.0, %v1106
    %1108 = vmatprep.mubr.f32.mxu0 0.0
    %1109 = vmatmul.mubr.f32.gmra.mxu0 %v163
    %v1110 = vpop.f32.mrf.mxu0
    %v1111 = vadd.f32 0.0, %v1110
    %v1112 = vpop.f32.mrf.mxu0
    %v1113 = vadd.f32 0.0, %v1112
    %1114 = vmatprep.mubr.f32.mxu0 0.0
    %1115 = vmatmul.mubr.f32.gmra.mxu0 %v166
    %v1116 = vpop.f32.mrf.mxu0
    %v1117 = vadd.f32 0.0, %v1116
    %v1118 = vpop.f32.mrf.mxu0
    %v1119 = vadd.f32 0.0, %v1118
    %1120 = vmatprep.mubr.f32.mxu0 0.0
    %1121 = vmatmul.mubr.f32.gmra.mxu0 %v169
    %v1122 = vpop.f32.mrf.mxu0
    %v1123 = vadd.f32 0.0, %v1122
    %v1124 = vpop.f32.mrf.mxu0
    %v1125 = vadd.f32 0.0, %v1124
    %1126 = vmatprep.mubr.f32.mxu0 0.0
    %1127 = vmatmul.mubr.f32.gmra.mxu0 %v172
    %v1128 = vpop.f32.mrf.mxu0
    %v1129 = vadd.f32 0.0, %v1128
    %v1130 = vpop.f32.mrf.mxu0
    %v1131 = vadd.f32 0.0, %v1130
    %1132 = vdwg.mxu0
    %1133 = vmatprep.subr.mxu0 0.0
    %1134 = vmatpush1.msra.mxu0 0.0
    %1135 = vmatprep.subr.mxu0 0.0
    %1136 = vmatpush1.msra.mxu0 0.0
    %1137 = vmatprep.subr.mxu0 0.0
    %1138 = vmatpush1.msra.mxu0 0.0
    %1139 = vmatprep.subr.mxu0 0.0
    %1140 = vmatpush1.msra.mxu0 0.0
    %1141 = vmatprep.subr.mxu0 0.0
    %1142 = vmatpush1.msra.mxu0 0.0
    %1143 = vmatprep.subr.mxu0 0.0
    %1144 = vmatpush1.msra.mxu0 0.0
    %1145 = vmatprep.subr.mxu0 0.0
    %1146 = vmatpush1.msra.mxu0 0.0
    %1147 = vmatprep.subr.mxu0 0.0
    %1148 = vmatpush1.msra.mxu0 0.0
    %1149 = vmatprep.subr.mxu0 0.0
    %1150 = vmatpush1.msra.mxu0 0.0
    %1151 = vmatprep.subr.mxu0 0.0
    %1152 = vmatpush1.msra.mxu0 0.0
    %1153 = vmatprep.subr.mxu0 0.0
    %1154 = vmatpush1.msra.mxu0 0.0
    %1155 = vmatprep.subr.mxu0 0.0
    %1156 = vmatpush1.msra.mxu0 0.0
    %1157 = vmatprep.subr.mxu0 0.0
    %1158 = vmatpush1.msra.mxu0 0.0
    %1159 = vmatprep.subr.mxu0 %v108
    %1160 = vmatpush1.msra.mxu0 %v107
    %1161 = vmatprep.subr.mxu0 %v76
    %1162 = vmatpush1.msra.mxu0 %v75
    %1163 = vmatprep.subr.mxu0 %v44
    %1164 = vmatpush1.msra.mxu0 %v43
    %1165 = vmatprep.subr.mxu0 0.0
    %1166 = vmatpush2.msra.mxu0 0.0
    %1167 = vmatprep.subr.mxu0 0.0
    %1168 = vmatpush2.msra.mxu0 0.0
    %1169 = vmatprep.subr.mxu0 0.0
    %1170 = vmatpush2.msra.mxu0 0.0
    %1171 = vmatprep.subr.mxu0 0.0
    %1172 = vmatpush2.msra.mxu0 0.0
    %1173 = vmatprep.subr.mxu0 0.0
    %1174 = vmatpush2.msra.mxu0 0.0
    %1175 = vmatprep.subr.mxu0 0.0
    %1176 = vmatpush2.msra.mxu0 0.0
    %1177 = vmatprep.subr.mxu0 0.0
    %1178 = vmatpush2.msra.mxu0 0.0
    %1179 = vmatprep.subr.mxu0 0.0
    %1180 = vmatpush2.msra.mxu0 0.0
    %1181 = vmatprep.subr.mxu0 0.0
    %1182 = vmatpush2.msra.mxu0 0.0
    %1183 = vmatprep.subr.mxu0 0.0
    %1184 = vmatpush2.msra.mxu0 0.0
    %1185 = vmatprep.subr.mxu0 0.0
    %1186 = vmatpush2.msra.mxu0 0.0
    %1187 = vmatprep.subr.mxu0 0.0
    %1188 = vmatpush2.msra.mxu0 0.0
    %1189 = vmatprep.subr.mxu0 0.0
    %1190 = vmatpush2.msra.mxu0 0.0
    %1191 = vmatprep.subr.mxu0 0.0
    %1192 = vmatpush2.msra.mxu0 0.0
    %1193 = vmatprep.subr.mxu0 0.0
    %1194 = vmatpush2.msra.mxu0 0.0
    %1195 = vmatprep.subr.mxu0 0.0
    %1196 = vmatpush2.msra.mxu0 0.0
    %1197 = vmatprep.mubr.f32.mxu0 0.0
    %1198 = vmatmul.mubr.f32.gmra.mxu0 %v139
    %v1199 = vpop.f32.mrf.mxu0
    %v1200 = vadd.f32 0.0, %v1199
    %v1201 = vpop.f32.mrf.mxu0
    %v1202 = vadd.f32 0.0, %v1201
    %1203 = vmatprep.mubr.f32.mxu0 0.0
    %1204 = vmatmul.mubr.f32.gmra.mxu0 %v142
    %v1205 = vpop.f32.mrf.mxu0
    %v1206 = vadd.f32 0.0, %v1205
    %v1207 = vpop.f32.mrf.mxu0
    %v1208 = vadd.f32 0.0, %v1207
    %1209 = vmatprep.mubr.f32.mxu0 0.0
    %1210 = vmatmul.mubr.f32.gmra.mxu0 %v145
    %v1211 = vpop.f32.mrf.mxu0
    %v1212 = vadd.f32 0.0, %v1211
    %v1213 = vpop.f32.mrf.mxu0
    %v1214 = vadd.f32 0.0, %v1213
    %1215 = vmatprep.mubr.f32.mxu0 0.0
    %1216 = vmatmul.mubr.f32.gmra.mxu0 %v148
    %v1217 = vpop.f32.mrf.mxu0
    %v1218 = vadd.f32 0.0, %v1217
    %v1219 = vpop.f32.mrf.mxu0
    %v1220 = vadd.f32 0.0, %v1219
    %1221 = vmatprep.mubr.f32.mxu0 0.0
    %1222 = vmatmul.mubr.f32.gmra.mxu0 %v151
    %v1223 = vpop.f32.mrf.mxu0
    %v1224 = vadd.f32 0.0, %v1223
    %v1225 = vpop.f32.mrf.mxu0
    %v1226 = vadd.f32 0.0, %v1225
    %1227 = vmatprep.mubr.f32.mxu0 0.0
    %1228 = vmatmul.mubr.f32.gmra.mxu0 %v154
    %v1229 = vpop.f32.mrf.mxu0
    %v1230 = vadd.f32 0.0, %v1229
    %v1231 = vpop.f32.mrf.mxu0
    %v1232 = vadd.f32 0.0, %v1231
    %1233 = vmatprep.mubr.f32.mxu0 0.0
    %1234 = vmatmul.mubr.f32.gmra.mxu0 %v157
    %v1235 = vpop.f32.mrf.mxu0
    %v1236 = vadd.f32 0.0, %v1235
    %v1237 = vpop.f32.mrf.mxu0
    %v1238 = vadd.f32 0.0, %v1237
    %1239 = vmatprep.mubr.f32.mxu0 0.0
    %1240 = vmatmul.mubr.f32.gmra.mxu0 %v160
    %v1241 = vpop.f32.mrf.mxu0
    %v1242 = vadd.f32 0.0, %v1241
    %v1243 = vpop.f32.mrf.mxu0
    %v1244 = vadd.f32 0.0, %v1243
    %1245 = vmatprep.mubr.f32.mxu0 0.0
    %1246 = vmatmul.mubr.f32.gmra.mxu0 %v163
    %v1247 = vpop.f32.mrf.mxu0
    %v1248 = vadd.f32 0.0, %v1247
    %v1249 = vpop.f32.mrf.mxu0
    %v1250 = vadd.f32 0.0, %v1249
    %1251 = vmatprep.mubr.f32.mxu0 0.0
    %1252 = vmatmul.mubr.f32.gmra.mxu0 %v166
    %v1253 = vpop.f32.mrf.mxu0
    %v1254 = vadd.f32 0.0, %v1253
    %v1255 = vpop.f32.mrf.mxu0
    %v1256 = vadd.f32 0.0, %v1255
    %1257 = vmatprep.mubr.f32.mxu0 0.0
    %1258 = vmatmul.mubr.f32.gmra.mxu0 %v169
    %v1259 = vpop.f32.mrf.mxu0
    %v1260 = vadd.f32 0.0, %v1259
    %v1261 = vpop.f32.mrf.mxu0
    %v1262 = vadd.f32 0.0, %v1261
    %1263 = vmatprep.mubr.f32.mxu0 0.0
    %1264 = vmatmul.mubr.f32.gmra.mxu0 %v172
    %v1265 = vpop.f32.mrf.mxu0
    %v1266 = vadd.f32 0.0, %v1265
    %v1267 = vpop.f32.mrf.mxu0
    %v1268 = vadd.f32 0.0, %v1267
    %1269 = vdwg.mxu0
    %1270 = vmatprep.subr.mxu0 0.0
    %1271 = vmatpush1.msra.mxu0 0.0
    %1272 = vmatprep.subr.mxu0 0.0
    %1273 = vmatpush1.msra.mxu0 0.0
    %1274 = vmatprep.subr.mxu0 0.0
    %1275 = vmatpush1.msra.mxu0 0.0
    %1276 = vmatprep.subr.mxu0 0.0
    %1277 = vmatpush1.msra.mxu0 0.0
    %1278 = vmatprep.subr.mxu0 0.0
    %1279 = vmatpush1.msra.mxu0 0.0
    %1280 = vmatprep.subr.mxu0 0.0
    %1281 = vmatpush1.msra.mxu0 0.0
    %1282 = vmatprep.subr.mxu0 0.0
    %1283 = vmatpush1.msra.mxu0 0.0
    %1284 = vmatprep.subr.mxu0 0.0
    %1285 = vmatpush1.msra.mxu0 0.0
    %1286 = vmatprep.subr.mxu0 0.0
    %1287 = vmatpush1.msra.mxu0 0.0
    %1288 = vmatprep.subr.mxu0 0.0
    %1289 = vmatpush1.msra.mxu0 0.0
    %1290 = vmatprep.subr.mxu0 0.0
    %1291 = vmatpush1.msra.mxu0 0.0
    %1292 = vmatprep.subr.mxu0 0.0
    %1293 = vmatpush1.msra.mxu0 0.0
    %1294 = vmatprep.subr.mxu0 0.0
    %1295 = vmatpush1.msra.mxu0 0.0
    %1296 = vmatprep.subr.mxu0 %v110
    %1297 = vmatpush1.msra.mxu0 %v109
    %1298 = vmatprep.subr.mxu0 %v78
    %1299 = vmatpush1.msra.mxu0 %v77
    %1300 = vmatprep.subr.mxu0 %v46
    %1301 = vmatpush1.msra.mxu0 %v45
    %1302 = vmatprep.subr.mxu0 0.0
    %1303 = vmatpush2.msra.mxu0 0.0
    %1304 = vmatprep.subr.mxu0 0.0
    %1305 = vmatpush2.msra.mxu0 0.0
    %1306 = vmatprep.subr.mxu0 0.0
    %1307 = vmatpush2.msra.mxu0 0.0
    %1308 = vmatprep.subr.mxu0 0.0
    %1309 = vmatpush2.msra.mxu0 0.0
    %1310 = vmatprep.subr.mxu0 0.0
    %1311 = vmatpush2.msra.mxu0 0.0
    %1312 = vmatprep.subr.mxu0 0.0
    %1313 = vmatpush2.msra.mxu0 0.0
    %1314 = vmatprep.subr.mxu0 0.0
    %1315 = vmatpush2.msra.mxu0 0.0
    %1316 = vmatprep.subr.mxu0 0.0
    %1317 = vmatpush2.msra.mxu0 0.0
    %1318 = vmatprep.subr.mxu0 0.0
    %1319 = vmatpush2.msra.mxu0 0.0
    %1320 = vmatprep.subr.mxu0 0.0
    %1321 = vmatpush2.msra.mxu0 0.0
    %1322 = vmatprep.subr.mxu0 0.0
    %1323 = vmatpush2.msra.mxu0 0.0
    %1324 = vmatprep.subr.mxu0 0.0
    %1325 = vmatpush2.msra.mxu0 0.0
    %1326 = vmatprep.subr.mxu0 0.0
    %1327 = vmatpush2.msra.mxu0 0.0
    %1328 = vmatprep.subr.mxu0 0.0
    %1329 = vmatpush2.msra.mxu0 0.0
    %1330 = vmatprep.subr.mxu0 0.0
    %1331 = vmatpush2.msra.mxu0 0.0
    %1332 = vmatprep.subr.mxu0 0.0
    %1333 = vmatpush2.msra.mxu0 0.0
    %1334 = vmatprep.mubr.f32.mxu0 0.0
    %1335 = vmatmul.mubr.f32.gmra.mxu0 %v139
    %v1336 = vpop.f32.mrf.mxu0
    %v1337 = vadd.f32 0.0, %v1336
    %v1338 = vpop.f32.mrf.mxu0
    %v1339 = vadd.f32 0.0, %v1338
    %1340 = vmatprep.mubr.f32.mxu0 0.0
    %1341 = vmatmul.mubr.f32.gmra.mxu0 %v142
    %v1342 = vpop.f32.mrf.mxu0
    %v1343 = vadd.f32 0.0, %v1342
    %v1344 = vpop.f32.mrf.mxu0
    %v1345 = vadd.f32 0.0, %v1344
    %1346 = vmatprep.mubr.f32.mxu0 0.0
    %1347 = vmatmul.mubr.f32.gmra.mxu0 %v145
    %v1348 = vpop.f32.mrf.mxu0
    %v1349 = vadd.f32 0.0, %v1348
    %v1350 = vpop.f32.mrf.mxu0
    %v1351 = vadd.f32 0.0, %v1350
    %1352 = vmatprep.mubr.f32.mxu0 0.0
    %1353 = vmatmul.mubr.f32.gmra.mxu0 %v148
    %v1354 = vpop.f32.mrf.mxu0
    %v1355 = vadd.f32 0.0, %v1354
    %v1356 = vpop.f32.mrf.mxu0
    %v1357 = vadd.f32 0.0, %v1356
    %1358 = vmatprep.mubr.f32.mxu0 0.0
    %1359 = vmatmul.mubr.f32.gmra.mxu0 %v151
    %v1360 = vpop.f32.mrf.mxu0
    %v1361 = vadd.f32 0.0, %v1360
    %v1362 = vpop.f32.mrf.mxu0
    %v1363 = vadd.f32 0.0, %v1362
    %1364 = vmatprep.mubr.f32.mxu0 0.0
    %1365 = vmatmul.mubr.f32.gmra.mxu0 %v154
    %v1366 = vpop.f32.mrf.mxu0
    %v1367 = vadd.f32 0.0, %v1366
    %v1368 = vpop.f32.mrf.mxu0
    %v1369 = vadd.f32 0.0, %v1368
    %1370 = vmatprep.mubr.f32.mxu0 0.0
    %1371 = vmatmul.mubr.f32.gmra.mxu0 %v157
    %v1372 = vpop.f32.mrf.mxu0
    %v1373 = vadd.f32 0.0, %v1372
    %v1374 = vpop.f32.mrf.mxu0
    %v1375 = vadd.f32 0.0, %v1374
    %1376 = vmatprep.mubr.f32.mxu0 0.0
    %1377 = vmatmul.mubr.f32.gmra.mxu0 %v160
    %v1378 = vpop.f32.mrf.mxu0
    %v1379 = vadd.f32 0.0, %v1378
    %v1380 = vpop.f32.mrf.mxu0
    %v1381 = vadd.f32 0.0, %v1380
    %1382 = vmatprep.mubr.f32.mxu0 0.0
    %1383 = vmatmul.mubr.f32.gmra.mxu0 %v163
    %v1384 = vpop.f32.mrf.mxu0
    %v1385 = vadd.f32 0.0, %v1384
    %v1386 = vpop.f32.mrf.mxu0
    %v1387 = vadd.f32 0.0, %v1386
    %1388 = vmatprep.mubr.f32.mxu0 0.0
    %1389 = vmatmul.mubr.f32.gmra.mxu0 %v166
    %v1390 = vpop.f32.mrf.mxu0
    %v1391 = vadd.f32 0.0, %v1390
    %v1392 = vpop.f32.mrf.mxu0
    %v1393 = vadd.f32 0.0, %v1392
    %1394 = vmatprep.mubr.f32.mxu0 0.0
    %1395 = vmatmul.mubr.f32.gmra.mxu0 %v169
    %v1396 = vpop.f32.mrf.mxu0
    %v1397 = vadd.f32 0.0, %v1396
    %v1398 = vpop.f32.mrf.mxu0
    %v1399 = vadd.f32 0.0, %v1398
    %1400 = vmatprep.mubr.f32.mxu0 0.0
    %1401 = vmatmul.mubr.f32.gmra.mxu0 %v172
    %v1402 = vpop.f32.mrf.mxu0
    %v1403 = vadd.f32 0.0, %v1402
    %v1404 = vpop.f32.mrf.mxu0
    %v1405 = vadd.f32 0.0, %v1404
    %1406 = vdwg.mxu0
    %1407 = vmatprep.subr.mxu0 0.0
    %1408 = vmatpush1.msra.mxu0 0.0
    %1409 = vmatprep.subr.mxu0 0.0
    %1410 = vmatpush1.msra.mxu0 0.0
    %1411 = vmatprep.subr.mxu0 0.0
    %1412 = vmatpush1.msra.mxu0 0.0
    %1413 = vmatprep.subr.mxu0 0.0
    %1414 = vmatpush1.msra.mxu0 0.0
    %1415 = vmatprep.subr.mxu0 0.0
    %1416 = vmatpush1.msra.mxu0 0.0
    %1417 = vmatprep.subr.mxu0 0.0
    %1418 = vmatpush1.msra.mxu0 0.0
    %1419 = vmatprep.subr.mxu0 0.0
    %1420 = vmatpush1.msra.mxu0 0.0
    %1421 = vmatprep.subr.mxu0 0.0
    %1422 = vmatpush1.msra.mxu0 0.0
    %1423 = vmatprep.subr.mxu0 0.0
    %1424 = vmatpush1.msra.mxu0 0.0
    %1425 = vmatprep.subr.mxu0 0.0
    %1426 = vmatpush1.msra.mxu0 0.0
    %1427 = vmatprep.subr.mxu0 0.0
    %1428 = vmatpush1.msra.mxu0 0.0
    %1429 = vmatprep.subr.mxu0 0.0
    %1430 = vmatpush1.msra.mxu0 0.0
    %1431 = vmatprep.subr.mxu0 0.0
    %1432 = vmatpush1.msra.mxu0 0.0
    %1433 = vmatprep.subr.mxu0 %v112
    %1434 = vmatpush1.msra.mxu0 %v111
    %1435 = vmatprep.subr.mxu0 %v80
    %1436 = vmatpush1.msra.mxu0 %v79
    %1437 = vmatprep.subr.mxu0 %v48
    %1438 = vmatpush1.msra.mxu0 %v47
    %1439 = vmatprep.subr.mxu0 0.0
    %1440 = vmatpush2.msra.mxu0 0.0
    %1441 = vmatprep.subr.mxu0 0.0
    %1442 = vmatpush2.msra.mxu0 0.0
    %1443 = vmatprep.subr.mxu0 0.0
    %1444 = vmatpush2.msra.mxu0 0.0
    %1445 = vmatprep.subr.mxu0 0.0
    %1446 = vmatpush2.msra.mxu0 0.0
    %1447 = vmatprep.subr.mxu0 0.0
    %1448 = vmatpush2.msra.mxu0 0.0
    %1449 = vmatprep.subr.mxu0 0.0
    %1450 = vmatpush2.msra.mxu0 0.0
    %1451 = vmatprep.subr.mxu0 0.0
    %1452 = vmatpush2.msra.mxu0 0.0
    %1453 = vmatprep.subr.mxu0 0.0
    %1454 = vmatpush2.msra.mxu0 0.0
    %1455 = vmatprep.subr.mxu0 0.0
    %1456 = vmatpush2.msra.mxu0 0.0
    %1457 = vmatprep.subr.mxu0 0.0
    %1458 = vmatpush2.msra.mxu0 0.0
    %1459 = vmatprep.subr.mxu0 0.0
    %1460 = vmatpush2.msra.mxu0 0.0
    %1461 = vmatprep.subr.mxu0 0.0
    %1462 = vmatpush2.msra.mxu0 0.0
    %1463 = vmatprep.subr.mxu0 0.0
    %1464 = vmatpush2.msra.mxu0 0.0
    %1465 = vmatprep.subr.mxu0 0.0
    %1466 = vmatpush2.msra.mxu0 0.0
    %1467 = vmatprep.subr.mxu0 0.0
    %1468 = vmatpush2.msra.mxu0 0.0
    %1469 = vmatprep.subr.mxu0 0.0
    %1470 = vmatpush2.msra.mxu0 0.0
    %1471 = vmatprep.mubr.f32.mxu0 0.0
    %1472 = vmatmul.mubr.f32.gmra.mxu0 %v139
    %v1473 = vpop.f32.mrf.mxu0
    %v1474 = vadd.f32 0.0, %v1473
    %v1475 = vpop.f32.mrf.mxu0
    %v1476 = vadd.f32 0.0, %v1475
    %1477 = vmatprep.mubr.f32.mxu0 0.0
    %1478 = vmatmul.mubr.f32.gmra.mxu0 %v142
    %v1479 = vpop.f32.mrf.mxu0
    %v1480 = vadd.f32 0.0, %v1479
    %v1481 = vpop.f32.mrf.mxu0
    %v1482 = vadd.f32 0.0, %v1481
    %1483 = vmatprep.mubr.f32.mxu0 0.0
    %1484 = vmatmul.mubr.f32.gmra.mxu0 %v145
    %v1485 = vpop.f32.mrf.mxu0
    %v1486 = vadd.f32 0.0, %v1485
    %v1487 = vpop.f32.mrf.mxu0
    %v1488 = vadd.f32 0.0, %v1487
    %1489 = vmatprep.mubr.f32.mxu0 0.0
    %1490 = vmatmul.mubr.f32.gmra.mxu0 %v148
    %v1491 = vpop.f32.mrf.mxu0
    %v1492 = vadd.f32 0.0, %v1491
    %v1493 = vpop.f32.mrf.mxu0
    %v1494 = vadd.f32 0.0, %v1493
    %1495 = vmatprep.mubr.f32.mxu0 0.0
    %1496 = vmatmul.mubr.f32.gmra.mxu0 %v151
    %v1497 = vpop.f32.mrf.mxu0
    %v1498 = vadd.f32 0.0, %v1497
    %v1499 = vpop.f32.mrf.mxu0
    %v1500 = vadd.f32 0.0, %v1499
    %1501 = vmatprep.mubr.f32.mxu0 0.0
    %1502 = vmatmul.mubr.f32.gmra.mxu0 %v154
    %v1503 = vpop.f32.mrf.mxu0
    %v1504 = vadd.f32 0.0, %v1503
    %v1505 = vpop.f32.mrf.mxu0
    %v1506 = vadd.f32 0.0, %v1505
    %1507 = vmatprep.mubr.f32.mxu0 0.0
    %1508 = vmatmul.mubr.f32.gmra.mxu0 %v157
    %v1509 = vpop.f32.mrf.mxu0
    %v1510 = vadd.f32 0.0, %v1509
    %v1511 = vpop.f32.mrf.mxu0
    %v1512 = vadd.f32 0.0, %v1511
    %1513 = vmatprep.mubr.f32.mxu0 0.0
    %1514 = vmatmul.mubr.f32.gmra.mxu0 %v160
    %v1515 = vpop.f32.mrf.mxu0
    %v1516 = vadd.f32 0.0, %v1515
    %v1517 = vpop.f32.mrf.mxu0
    %v1518 = vadd.f32 0.0, %v1517
    %1519 = vmatprep.mubr.f32.mxu0 0.0
    %1520 = vmatmul.mubr.f32.gmra.mxu0 %v163
    %v1521 = vpop.f32.mrf.mxu0
    %v1522 = vadd.f32 0.0, %v1521
    %v1523 = vpop.f32.mrf.mxu0
    %v1524 = vadd.f32 0.0, %v1523
    %1525 = vmatprep.mubr.f32.mxu0 0.0
    %1526 = vmatmul.mubr.f32.gmra.mxu0 %v166
    %v1527 = vpop.f32.mrf.mxu0
    %v1528 = vadd.f32 0.0, %v1527
    %v1529 = vpop.f32.mrf.mxu0
    %v1530 = vadd.f32 0.0, %v1529
    %1531 = vmatprep.mubr.f32.mxu0 0.0
    %1532 = vmatmul.mubr.f32.gmra.mxu0 %v169
    %v1533 = vpop.f32.mrf.mxu0
    %v1534 = vadd.f32 0.0, %v1533
    %v1535 = vpop.f32.mrf.mxu0
    %v1536 = vadd.f32 0.0, %v1535
    %1537 = vmatprep.mubr.f32.mxu0 0.0
    %1538 = vmatmul.mubr.f32.gmra.mxu0 %v172
    %v1539 = vpop.f32.mrf.mxu0
    %v1540 = vadd.f32 0.0, %v1539
    %v1541 = vpop.f32.mrf.mxu0
    %v1542 = vadd.f32 0.0, %v1541
    %1543 = vdwg.mxu0
    %1544 = vmatprep.subr.mxu0 0.0
    %1545 = vmatpush1.msra.mxu0 0.0
    %1546 = vmatprep.subr.mxu0 0.0
    %1547 = vmatpush1.msra.mxu0 0.0
    %1548 = vmatprep.subr.mxu0 0.0
    %1549 = vmatpush1.msra.mxu0 0.0
    %1550 = vmatprep.subr.mxu0 0.0
    %1551 = vmatpush1.msra.mxu0 0.0
    %1552 = vmatprep.subr.mxu0 0.0
    %1553 = vmatpush1.msra.mxu0 0.0
    %1554 = vmatprep.subr.mxu0 0.0
    %1555 = vmatpush1.msra.mxu0 0.0
    %1556 = vmatprep.subr.mxu0 0.0
    %1557 = vmatpush1.msra.mxu0 0.0
    %1558 = vmatprep.subr.mxu0 0.0
    %1559 = vmatpush1.msra.mxu0 0.0
    %1560 = vmatprep.subr.mxu0 0.0
    %1561 = vmatpush1.msra.mxu0 0.0
    %1562 = vmatprep.subr.mxu0 0.0
    %1563 = vmatpush1.msra.mxu0 0.0
    %1564 = vmatprep.subr.mxu0 0.0
    %1565 = vmatpush1.msra.mxu0 0.0
    %1566 = vmatprep.subr.mxu0 0.0
    %1567 = vmatpush1.msra.mxu0 0.0
    %1568 = vmatprep.subr.mxu0 0.0
    %1569 = vmatpush1.msra.mxu0 0.0
    %1570 = vmatprep.subr.mxu0 %v114
    %1571 = vmatpush1.msra.mxu0 %v113
    %1572 = vmatprep.subr.mxu0 %v82
    %1573 = vmatpush1.msra.mxu0 %v81
    %1574 = vmatprep.subr.mxu0 %v50
    %1575 = vmatpush1.msra.mxu0 %v49
    %1576 = vmatprep.subr.mxu0 0.0
    %1577 = vmatpush2.msra.mxu0 0.0
    %1578 = vmatprep.subr.mxu0 0.0
    %1579 = vmatpush2.msra.mxu0 0.0
    %1580 = vmatprep.subr.mxu0 0.0
    %1581 = vmatpush2.msra.mxu0 0.0
    %1582 = vmatprep.subr.mxu0 0.0
    %1583 = vmatpush2.msra.mxu0 0.0
    %1584 = vmatprep.subr.mxu0 0.0
    %1585 = vmatpush2.msra.mxu0 0.0
    %1586 = vmatprep.subr.mxu0 0.0
    %1587 = vmatpush2.msra.mxu0 0.0
    %1588 = vmatprep.subr.mxu0 0.0
    %1589 = vmatpush2.msra.mxu0 0.0
    %1590 = vmatprep.subr.mxu0 0.0
    %1591 = vmatpush2.msra.mxu0 0.0
    %1592 = vmatprep.subr.mxu0 0.0
    %1593 = vmatpush2.msra.mxu0 0.0
    %1594 = vmatprep.subr.mxu0 0.0
    %1595 = vmatpush2.msra.mxu0 0.0
    %1596 = vmatprep.subr.mxu0 0.0
    %1597 = vmatpush2.msra.mxu0 0.0
    %1598 = vmatprep.subr.mxu0 0.0
    %1599 = vmatpush2.msra.mxu0 0.0
    %1600 = vmatprep.subr.mxu0 0.0
    %1601 = vmatpush2.msra.mxu0 0.0
    %1602 = vmatprep.subr.mxu0 0.0
    %1603 = vmatpush2.msra.mxu0 0.0
    %1604 = vmatprep.subr.mxu0 0.0
    %1605 = vmatpush2.msra.mxu0 0.0
    %1606 = vmatprep.subr.mxu0 0.0
    %1607 = vmatpush2.msra.mxu0 0.0
    %1608 = vmatprep.mubr.f32.mxu0 0.0
    %1609 = vmatmul.mubr.f32.gmra.mxu0 %v139
    %v1610 = vpop.f32.mrf.mxu0
    %v1611 = vadd.f32 0.0, %v1610
    %v1612 = vpop.f32.mrf.mxu0
    %v1613 = vadd.f32 0.0, %v1612
    %1614 = vmatprep.mubr.f32.mxu0 0.0
    %1615 = vmatmul.mubr.f32.gmra.mxu0 %v142
    %v1616 = vpop.f32.mrf.mxu0
    %v1617 = vadd.f32 0.0, %v1616
    %v1618 = vpop.f32.mrf.mxu0
    %v1619 = vadd.f32 0.0, %v1618
    %1620 = vmatprep.mubr.f32.mxu0 0.0
    %1621 = vmatmul.mubr.f32.gmra.mxu0 %v145
    %v1622 = vpop.f32.mrf.mxu0
    %v1623 = vadd.f32 0.0, %v1622
    %v1624 = vpop.f32.mrf.mxu0
    %v1625 = vadd.f32 0.0, %v1624
    %1626 = vmatprep.mubr.f32.mxu0 0.0
    %1627 = vmatmul.mubr.f32.gmra.mxu0 %v148
    %v1628 = vpop.f32.mrf.mxu0
    %v1629 = vadd.f32 0.0, %v1628
    %v1630 = vpop.f32.mrf.mxu0
    %v1631 = vadd.f32 0.0, %v1630
    %1632 = vmatprep.mubr.f32.mxu0 0.0
    %1633 = vmatmul.mubr.f32.gmra.mxu0 %v151
    %v1634 = vpop.f32.mrf.mxu0
    %v1635 = vadd.f32 0.0, %v1634
    %v1636 = vpop.f32.mrf.mxu0
    %v1637 = vadd.f32 0.0, %v1636
    %1638 = vmatprep.mubr.f32.mxu0 0.0
    %1639 = vmatmul.mubr.f32.gmra.mxu0 %v154
    %v1640 = vpop.f32.mrf.mxu0
    %v1641 = vadd.f32 0.0, %v1640
    %v1642 = vpop.f32.mrf.mxu0
    %v1643 = vadd.f32 0.0, %v1642
    %1644 = vmatprep.mubr.f32.mxu0 0.0
    %1645 = vmatmul.mubr.f32.gmra.mxu0 %v157
    %v1646 = vpop.f32.mrf.mxu0
    %v1647 = vadd.f32 0.0, %v1646
    %v1648 = vpop.f32.mrf.mxu0
    %v1649 = vadd.f32 0.0, %v1648
    %1650 = vmatprep.mubr.f32.mxu0 0.0
    %1651 = vmatmul.mubr.f32.gmra.mxu0 %v160
    %v1652 = vpop.f32.mrf.mxu0
    %v1653 = vadd.f32 0.0, %v1652
    %v1654 = vpop.f32.mrf.mxu0
    %v1655 = vadd.f32 0.0, %v1654
    %1656 = vmatprep.mubr.f32.mxu0 0.0
    %1657 = vmatmul.mubr.f32.gmra.mxu0 %v163
    %v1658 = vpop.f32.mrf.mxu0
    %v1659 = vadd.f32 0.0, %v1658
    %v1660 = vpop.f32.mrf.mxu0
    %v1661 = vadd.f32 0.0, %v1660
    %1662 = vmatprep.mubr.f32.mxu0 0.0
    %1663 = vmatmul.mubr.f32.gmra.mxu0 %v166
    %v1664 = vpop.f32.mrf.mxu0
    %v1665 = vadd.f32 0.0, %v1664
    %v1666 = vpop.f32.mrf.mxu0
    %v1667 = vadd.f32 0.0, %v1666
    %1668 = vmatprep.mubr.f32.mxu0 0.0
    %1669 = vmatmul.mubr.f32.gmra.mxu0 %v169
    %v1670 = vpop.f32.mrf.mxu0
    %v1671 = vadd.f32 0.0, %v1670
    %v1672 = vpop.f32.mrf.mxu0
    %v1673 = vadd.f32 0.0, %v1672
    %1674 = vmatprep.mubr.f32.mxu0 0.0
    %1675 = vmatmul.mubr.f32.gmra.mxu0 %v172
    %v1676 = vpop.f32.mrf.mxu0
    %v1677 = vadd.f32 0.0, %v1676
    %v1678 = vpop.f32.mrf.mxu0
    %v1679 = vadd.f32 0.0, %v1678
    %1680 = vdwg.mxu0
    %1681 = vmatprep.subr.mxu0 0.0
    %1682 = vmatpush1.msra.mxu0 0.0
    %1683 = vmatprep.subr.mxu0 0.0
    %1684 = vmatpush1.msra.mxu0 0.0
    %1685 = vmatprep.subr.mxu0 0.0
    %1686 = vmatpush1.msra.mxu0 0.0
    %1687 = vmatprep.subr.mxu0 0.0
    %1688 = vmatpush1.msra.mxu0 0.0
    %1689 = vmatprep.subr.mxu0 0.0
    %1690 = vmatpush1.msra.mxu0 0.0
    %1691 = vmatprep.subr.mxu0 0.0
    %1692 = vmatpush1.msra.mxu0 0.0
    %1693 = vmatprep.subr.mxu0 0.0
    %1694 = vmatpush1.msra.mxu0 0.0
    %1695 = vmatprep.subr.mxu0 0.0
    %1696 = vmatpush1.msra.mxu0 0.0
    %1697 = vmatprep.subr.mxu0 0.0
    %1698 = vmatpush1.msra.mxu0 0.0
    %1699 = vmatprep.subr.mxu0 0.0
    %1700 = vmatpush1.msra.mxu0 0.0
    %1701 = vmatprep.subr.mxu0 0.0
    %1702 = vmatpush1.msra.mxu0 0.0
    %1703 = vmatprep.subr.mxu0 0.0
    %1704 = vmatpush1.msra.mxu0 0.0
    %1705 = vmatprep.subr.mxu0 0.0
    %1706 = vmatpush1.msra.mxu0 0.0
    %1707 = vmatprep.subr.mxu0 %v116
    %1708 = vmatpush1.msra.mxu0 %v115
    %1709 = vmatprep.subr.mxu0 %v84
    %1710 = vmatpush1.msra.mxu0 %v83
    %1711 = vmatprep.subr.mxu0 %v52
    %1712 = vmatpush1.msra.mxu0 %v51
    %1713 = vmatprep.subr.mxu0 0.0
    %1714 = vmatpush2.msra.mxu0 0.0
    %1715 = vmatprep.subr.mxu0 0.0
    %1716 = vmatpush2.msra.mxu0 0.0
    %1717 = vmatprep.subr.mxu0 0.0
    %1718 = vmatpush2.msra.mxu0 0.0
    %1719 = vmatprep.subr.mxu0 0.0
    %1720 = vmatpush2.msra.mxu0 0.0
    %1721 = vmatprep.subr.mxu0 0.0
    %1722 = vmatpush2.msra.mxu0 0.0
    %1723 = vmatprep.subr.mxu0 0.0
    %1724 = vmatpush2.msra.mxu0 0.0
    %1725 = vmatprep.subr.mxu0 0.0
    %1726 = vmatpush2.msra.mxu0 0.0
    %1727 = vmatprep.subr.mxu0 0.0
    %1728 = vmatpush2.msra.mxu0 0.0
    %1729 = vmatprep.subr.mxu0 0.0
    %1730 = vmatpush2.msra.mxu0 0.0
    %1731 = vmatprep.subr.mxu0 0.0
    %1732 = vmatpush2.msra.mxu0 0.0
    %1733 = vmatprep.subr.mxu0 0.0
    %1734 = vmatpush2.msra.mxu0 0.0
    %1735 = vmatprep.subr.mxu0 0.0
    %1736 = vmatpush2.msra.mxu0 0.0
    %1737 = vmatprep.subr.mxu0 0.0
    %1738 = vmatpush2.msra.mxu0 0.0
    %1739 = vmatprep.subr.mxu0 0.0
    %1740 = vmatpush2.msra.mxu0 0.0
    %1741 = vmatprep.subr.mxu0 0.0
    %1742 = vmatpush2.msra.mxu0 0.0
    %1743 = vmatprep.subr.mxu0 0.0
    %1744 = vmatpush2.msra.mxu0 0.0
    %1745 = vmatprep.mubr.f32.mxu0 0.0
    %1746 = vmatmul.mubr.f32.gmra.mxu0 %v139
    %v1747 = vpop.f32.mrf.mxu0
    %v1748 = vadd.f32 0.0, %v1747
    %v1749 = vpop.f32.mrf.mxu0
    %v1750 = vadd.f32 0.0, %v1749
    %1751 = vmatprep.mubr.f32.mxu0 0.0
    %1752 = vmatmul.mubr.f32.gmra.mxu0 %v142
    %v1753 = vpop.f32.mrf.mxu0
    %v1754 = vadd.f32 0.0, %v1753
    %v1755 = vpop.f32.mrf.mxu0
    %v1756 = vadd.f32 0.0, %v1755
    %1757 = vmatprep.mubr.f32.mxu0 0.0
    %1758 = vmatmul.mubr.f32.gmra.mxu0 %v145
    %v1759 = vpop.f32.mrf.mxu0
    %v1760 = vadd.f32 0.0, %v1759
    %v1761 = vpop.f32.mrf.mxu0
    %v1762 = vadd.f32 0.0, %v1761
    %1763 = vmatprep.mubr.f32.mxu0 0.0
    %1764 = vmatmul.mubr.f32.gmra.mxu0 %v148
    %v1765 = vpop.f32.mrf.mxu0
    %v1766 = vadd.f32 0.0, %v1765
    %v1767 = vpop.f32.mrf.mxu0
    %v1768 = vadd.f32 0.0, %v1767
    %1769 = vmatprep.mubr.f32.mxu0 0.0
    %1770 = vmatmul.mubr.f32.gmra.mxu0 %v151
    %v1771 = vpop.f32.mrf.mxu0
    %v1772 = vadd.f32 0.0, %v1771
    %v1773 = vpop.f32.mrf.mxu0
    %v1774 = vadd.f32 0.0, %v1773
    %1775 = vmatprep.mubr.f32.mxu0 0.0
    %1776 = vmatmul.mubr.f32.gmra.mxu0 %v154
    %v1777 = vpop.f32.mrf.mxu0
    %v1778 = vadd.f32 0.0, %v1777
    %v1779 = vpop.f32.mrf.mxu0
    %v1780 = vadd.f32 0.0, %v1779
    %1781 = vmatprep.mubr.f32.mxu0 0.0
    %1782 = vmatmul.mubr.f32.gmra.mxu0 %v157
    %v1783 = vpop.f32.mrf.mxu0
    %v1784 = vadd.f32 0.0, %v1783
    %v1785 = vpop.f32.mrf.mxu0
    %v1786 = vadd.f32 0.0, %v1785
    %1787 = vmatprep.mubr.f32.mxu0 0.0
    %1788 = vmatmul.mubr.f32.gmra.mxu0 %v160
    %v1789 = vpop.f32.mrf.mxu0
    %v1790 = vadd.f32 0.0, %v1789
    %v1791 = vpop.f32.mrf.mxu0
    %v1792 = vadd.f32 0.0, %v1791
    %1793 = vmatprep.mubr.f32.mxu0 0.0
    %1794 = vmatmul.mubr.f32.gmra.mxu0 %v163
    %v1795 = vpop.f32.mrf.mxu0
    %v1796 = vadd.f32 0.0, %v1795
    %v1797 = vpop.f32.mrf.mxu0
    %v1798 = vadd.f32 0.0, %v1797
    %1799 = vmatprep.mubr.f32.mxu0 0.0
    %1800 = vmatmul.mubr.f32.gmra.mxu0 %v166
    %v1801 = vpop.f32.mrf.mxu0
    %v1802 = vadd.f32 0.0, %v1801
    %v1803 = vpop.f32.mrf.mxu0
    %v1804 = vadd.f32 0.0, %v1803
    %1805 = vmatprep.mubr.f32.mxu0 0.0
    %1806 = vmatmul.mubr.f32.gmra.mxu0 %v169
    %v1807 = vpop.f32.mrf.mxu0
    %v1808 = vadd.f32 0.0, %v1807
    %v1809 = vpop.f32.mrf.mxu0
    %v1810 = vadd.f32 0.0, %v1809
    %1811 = vmatprep.mubr.f32.mxu0 0.0
    %1812 = vmatmul.mubr.f32.gmra.mxu0 %v172
    %v1813 = vpop.f32.mrf.mxu0
    %v1814 = vadd.f32 0.0, %v1813
    %v1815 = vpop.f32.mrf.mxu0
    %v1816 = vadd.f32 0.0, %v1815
    %1817 = vdwg.mxu0
    %1818 = vmatprep.subr.mxu0 0.0
    %1819 = vmatpush1.msra.mxu0 0.0
    %1820 = vmatprep.subr.mxu0 0.0
    %1821 = vmatpush1.msra.mxu0 0.0
    %1822 = vmatprep.subr.mxu0 0.0
    %1823 = vmatpush1.msra.mxu0 0.0
    %1824 = vmatprep.subr.mxu0 0.0
    %1825 = vmatpush1.msra.mxu0 0.0
    %1826 = vmatprep.subr.mxu0 0.0
    %1827 = vmatpush1.msra.mxu0 0.0
    %1828 = vmatprep.subr.mxu0 0.0
    %1829 = vmatpush1.msra.mxu0 0.0
    %1830 = vmatprep.subr.mxu0 0.0
    %1831 = vmatpush1.msra.mxu0 0.0
    %1832 = vmatprep.subr.mxu0 0.0
    %1833 = vmatpush1.msra.mxu0 0.0
    %1834 = vmatprep.subr.mxu0 0.0
    %1835 = vmatpush1.msra.mxu0 0.0
    %1836 = vmatprep.subr.mxu0 0.0
    %1837 = vmatpush1.msra.mxu0 0.0
    %1838 = vmatprep.subr.mxu0 0.0
    %1839 = vmatpush1.msra.mxu0 0.0
    %1840 = vmatprep.subr.mxu0 0.0
    %1841 = vmatpush1.msra.mxu0 0.0
    %1842 = vmatprep.subr.mxu0 0.0
    %1843 = vmatpush1.msra.mxu0 0.0
    %1844 = vmatprep.subr.mxu0 %v118
    %1845 = vmatpush1.msra.mxu0 %v117
    %1846 = vmatprep.subr.mxu0 %v86
    %1847 = vmatpush1.msra.mxu0 %v85
    %1848 = vmatprep.subr.mxu0 %v54
    %1849 = vmatpush1.msra.mxu0 %v53
    %1850 = vmatprep.subr.mxu0 0.0
    %1851 = vmatpush2.msra.mxu0 0.0
    %1852 = vmatprep.subr.mxu0 0.0
    %1853 = vmatpush2.msra.mxu0 0.0
    %1854 = vmatprep.subr.mxu0 0.0
    %1855 = vmatpush2.msra.mxu0 0.0
    %1856 = vmatprep.subr.mxu0 0.0
    %1857 = vmatpush2.msra.mxu0 0.0
    %1858 = vmatprep.subr.mxu0 0.0
    %1859 = vmatpush2.msra.mxu0 0.0
    %1860 = vmatprep.subr.mxu0 0.0
    %1861 = vmatpush2.msra.mxu0 0.0
    %1862 = vmatprep.subr.mxu0 0.0
    %1863 = vmatpush2.msra.mxu0 0.0
    %1864 = vmatprep.subr.mxu0 0.0
    %1865 = vmatpush2.msra.mxu0 0.0
    %1866 = vmatprep.subr.mxu0 0.0
    %1867 = vmatpush2.msra.mxu0 0.0
    %1868 = vmatprep.subr.mxu0 0.0
    %1869 = vmatpush2.msra.mxu0 0.0
    %1870 = vmatprep.subr.mxu0 0.0
    %1871 = vmatpush2.msra.mxu0 0.0
    %1872 = vmatprep.subr.mxu0 0.0
    %1873 = vmatpush2.msra.mxu0 0.0
    %1874 = vmatprep.subr.mxu0 0.0
    %1875 = vmatpush2.msra.mxu0 0.0
    %1876 = vmatprep.subr.mxu0 0.0
    %1877 = vmatpush2.msra.mxu0 0.0
    %1878 = vmatprep.subr.mxu0 0.0
    %1879 = vmatpush2.msra.mxu0 0.0
    %1880 = vmatprep.subr.mxu0 0.0
    %1881 = vmatpush2.msra.mxu0 0.0
    %1882 = vmatprep.mubr.f32.mxu0 0.0
    %1883 = vmatmul.mubr.f32.gmra.mxu0 %v139
    %v1884 = vpop.f32.mrf.mxu0
    %v1885 = vadd.f32 0.0, %v1884
    %v1886 = vpop.f32.mrf.mxu0
    %v1887 = vadd.f32 0.0, %v1886
    %1888 = vmatprep.mubr.f32.mxu0 0.0
    %1889 = vmatmul.mubr.f32.gmra.mxu0 %v142
    %v1890 = vpop.f32.mrf.mxu0
    %v1891 = vadd.f32 0.0, %v1890
    %v1892 = vpop.f32.mrf.mxu0
    %v1893 = vadd.f32 0.0, %v1892
    %1894 = vmatprep.mubr.f32.mxu0 0.0
    %1895 = vmatmul.mubr.f32.gmra.mxu0 %v145
    %v1896 = vpop.f32.mrf.mxu0
    %v1897 = vadd.f32 0.0, %v1896
    %v1898 = vpop.f32.mrf.mxu0
    %v1899 = vadd.f32 0.0, %v1898
    %1900 = vmatprep.mubr.f32.mxu0 0.0
    %1901 = vmatmul.mubr.f32.gmra.mxu0 %v148
    %v1902 = vpop.f32.mrf.mxu0
    %v1903 = vadd.f32 0.0, %v1902
    %v1904 = vpop.f32.mrf.mxu0
    %v1905 = vadd.f32 0.0, %v1904
    %1906 = vmatprep.mubr.f32.mxu0 0.0
    %1907 = vmatmul.mubr.f32.gmra.mxu0 %v151
    %v1908 = vpop.f32.mrf.mxu0
    %v1909 = vadd.f32 0.0, %v1908
    %v1910 = vpop.f32.mrf.mxu0
    %v1911 = vadd.f32 0.0, %v1910
    %1912 = vmatprep.mubr.f32.mxu0 0.0
    %1913 = vmatmul.mubr.f32.gmra.mxu0 %v154
    %v1914 = vpop.f32.mrf.mxu0
    %v1915 = vadd.f32 0.0, %v1914
    %v1916 = vpop.f32.mrf.mxu0
    %v1917 = vadd.f32 0.0, %v1916
    %1918 = vmatprep.mubr.f32.mxu0 0.0
    %1919 = vmatmul.mubr.f32.gmra.mxu0 %v157
    %v1920 = vpop.f32.mrf.mxu0
    %v1921 = vadd.f32 0.0, %v1920
    %v1922 = vpop.f32.mrf.mxu0
    %v1923 = vadd.f32 0.0, %v1922
    %1924 = vmatprep.mubr.f32.mxu0 0.0
    %1925 = vmatmul.mubr.f32.gmra.mxu0 %v160
    %v1926 = vpop.f32.mrf.mxu0
    %v1927 = vadd.f32 0.0, %v1926
    %v1928 = vpop.f32.mrf.mxu0
    %v1929 = vadd.f32 0.0, %v1928
    %1930 = vmatprep.mubr.f32.mxu0 0.0
    %1931 = vmatmul.mubr.f32.gmra.mxu0 %v163
    %v1932 = vpop.f32.mrf.mxu0
    %v1933 = vadd.f32 0.0, %v1932
    %v1934 = vpop.f32.mrf.mxu0
    %v1935 = vadd.f32 0.0, %v1934
    %1936 = vmatprep.mubr.f32.mxu0 0.0
    %1937 = vmatmul.mubr.f32.gmra.mxu0 %v166
    %v1938 = vpop.f32.mrf.mxu0
    %v1939 = vadd.f32 0.0, %v1938
    %v1940 = vpop.f32.mrf.mxu0
    %v1941 = vadd.f32 0.0, %v1940
    %1942 = vmatprep.mubr.f32.mxu0 0.0
    %1943 = vmatmul.mubr.f32.gmra.mxu0 %v169
    %v1944 = vpop.f32.mrf.mxu0
    %v1945 = vadd.f32 0.0, %v1944
    %v1946 = vpop.f32.mrf.mxu0
    %v1947 = vadd.f32 0.0, %v1946
    %1948 = vmatprep.mubr.f32.mxu0 0.0
    %1949 = vmatmul.mubr.f32.gmra.mxu0 %v172
    %v1950 = vpop.f32.mrf.mxu0
    %v1951 = vadd.f32 0.0, %v1950
    %v1952 = vpop.f32.mrf.mxu0
    %v1953 = vadd.f32 0.0, %v1952
    %1954 = vdwg.mxu0
    %1955 = vmatprep.subr.mxu0 0.0
    %1956 = vmatpush1.msra.mxu0 0.0
    %1957 = vmatprep.subr.mxu0 0.0
    %1958 = vmatpush1.msra.mxu0 0.0
    %1959 = vmatprep.subr.mxu0 0.0
    %1960 = vmatpush1.msra.mxu0 0.0
    %1961 = vmatprep.subr.mxu0 0.0
    %1962 = vmatpush1.msra.mxu0 0.0
    %1963 = vmatprep.subr.mxu0 0.0
    %1964 = vmatpush1.msra.mxu0 0.0
    %1965 = vmatprep.subr.mxu0 0.0
    %1966 = vmatpush1.msra.mxu0 0.0
    %1967 = vmatprep.subr.mxu0 0.0
    %1968 = vmatpush1.msra.mxu0 0.0
    %1969 = vmatprep.subr.mxu0 0.0
    %1970 = vmatpush1.msra.mxu0 0.0
    %1971 = vmatprep.subr.mxu0 0.0
    %1972 = vmatpush1.msra.mxu0 0.0
    %1973 = vmatprep.subr.mxu0 0.0
    %1974 = vmatpush1.msra.mxu0 0.0
    %1975 = vmatprep.subr.mxu0 0.0
    %1976 = vmatpush1.msra.mxu0 0.0
    %1977 = vmatprep.subr.mxu0 0.0
    %1978 = vmatpush1.msra.mxu0 0.0
    %1979 = vmatprep.subr.mxu0 0.0
    %1980 = vmatpush1.msra.mxu0 0.0
    %1981 = vmatprep.subr.mxu0 %v120
    %1982 = vmatpush1.msra.mxu0 %v119
    %1983 = vmatprep.subr.mxu0 %v88
    %1984 = vmatpush1.msra.mxu0 %v87
    %1985 = vmatprep.subr.mxu0 %v56
    %1986 = vmatpush1.msra.mxu0 %v55
    %1987 = vmatprep.subr.mxu0 0.0
    %1988 = vmatpush2.msra.mxu0 0.0
    %1989 = vmatprep.subr.mxu0 0.0
    %1990 = vmatpush2.msra.mxu0 0.0
    %1991 = vmatprep.subr.mxu0 0.0
    %1992 = vmatpush2.msra.mxu0 0.0
    %1993 = vmatprep.subr.mxu0 0.0
    %1994 = vmatpush2.msra.mxu0 0.0
    %1995 = vmatprep.subr.mxu0 0.0
    %1996 = vmatpush2.msra.mxu0 0.0
    %1997 = vmatprep.subr.mxu0 0.0
    %1998 = vmatpush2.msra.mxu0 0.0
    %1999 = vmatprep.subr.mxu0 0.0
    %2000 = vmatpush2.msra.mxu0 0.0
    %2001 = vmatprep.subr.mxu0 0.0
    %2002 = vmatpush2.msra.mxu0 0.0
    %2003 = vmatprep.subr.mxu0 0.0
    %2004 = vmatpush2.msra.mxu0 0.0
    %2005 = vmatprep.subr.mxu0 0.0
    %2006 = vmatpush2.msra.mxu0 0.0
    %2007 = vmatprep.subr.mxu0 0.0
    %2008 = vmatpush2.msra.mxu0 0.0
    %2009 = vmatprep.subr.mxu0 0.0
    %2010 = vmatpush2.msra.mxu0 0.0
    %2011 = vmatprep.subr.mxu0 0.0
    %2012 = vmatpush2.msra.mxu0 0.0
    %2013 = vmatprep.subr.mxu0 0.0
    %2014 = vmatpush2.msra.mxu0 0.0
    %2015 = vmatprep.subr.mxu0 0.0
    %2016 = vmatpush2.msra.mxu0 0.0
    %2017 = vmatprep.subr.mxu0 0.0
    %2018 = vmatpush2.msra.mxu0 0.0
    %2019 = vmatprep.mubr.f32.mxu0 0.0
    %2020 = vmatmul.mubr.f32.gmra.mxu0 %v139
    %v2021 = vpop.f32.mrf.mxu0
    %v2022 = vadd.f32 0.0, %v2021
    %v2023 = vpop.f32.mrf.mxu0
    %v2024 = vadd.f32 0.0, %v2023
    %2025 = vmatprep.mubr.f32.mxu0 0.0
    %2026 = vmatmul.mubr.f32.gmra.mxu0 %v142
    %v2027 = vpop.f32.mrf.mxu0
    %v2028 = vadd.f32 0.0, %v2027
    %v2029 = vpop.f32.mrf.mxu0
    %v2030 = vadd.f32 0.0, %v2029
    %2031 = vmatprep.mubr.f32.mxu0 0.0
    %2032 = vmatmul.mubr.f32.gmra.mxu0 %v145
    %v2033 = vpop.f32.mrf.mxu0
    %v2034 = vadd.f32 0.0, %v2033
    %v2035 = vpop.f32.mrf.mxu0
    %v2036 = vadd.f32 0.0, %v2035
    %2037 = vmatprep.mubr.f32.mxu0 0.0
    %2038 = vmatmul.mubr.f32.gmra.mxu0 %v148
    %v2039 = vpop.f32.mrf.mxu0
    %v2040 = vadd.f32 0.0, %v2039
    %v2041 = vpop.f32.mrf.mxu0
    %v2042 = vadd.f32 0.0, %v2041
    %2043 = vmatprep.mubr.f32.mxu0 0.0
    %2044 = vmatmul.mubr.f32.gmra.mxu0 %v151
    %v2045 = vpop.f32.mrf.mxu0
    %v2046 = vadd.f32 0.0, %v2045
    %v2047 = vpop.f32.mrf.mxu0
    %v2048 = vadd.f32 0.0, %v2047
    %2049 = vmatprep.mubr.f32.mxu0 0.0
    %2050 = vmatmul.mubr.f32.gmra.mxu0 %v154
    %v2051 = vpop.f32.mrf.mxu0
    %v2052 = vadd.f32 0.0, %v2051
    %v2053 = vpop.f32.mrf.mxu0
    %v2054 = vadd.f32 0.0, %v2053
    %2055 = vmatprep.mubr.f32.mxu0 0.0
    %2056 = vmatmul.mubr.f32.gmra.mxu0 %v157
    %v2057 = vpop.f32.mrf.mxu0
    %v2058 = vadd.f32 0.0, %v2057
    %v2059 = vpop.f32.mrf.mxu0
    %v2060 = vadd.f32 0.0, %v2059
    %2061 = vmatprep.mubr.f32.mxu0 0.0
    %2062 = vmatmul.mubr.f32.gmra.mxu0 %v160
    %v2063 = vpop.f32.mrf.mxu0
    %v2064 = vadd.f32 0.0, %v2063
    %v2065 = vpop.f32.mrf.mxu0
    %v2066 = vadd.f32 0.0, %v2065
    %2067 = vmatprep.mubr.f32.mxu0 0.0
    %2068 = vmatmul.mubr.f32.gmra.mxu0 %v163
    %v2069 = vpop.f32.mrf.mxu0
    %v2070 = vadd.f32 0.0, %v2069
    %v2071 = vpop.f32.mrf.mxu0
    %v2072 = vadd.f32 0.0, %v2071
    %2073 = vmatprep.mubr.f32.mxu0 0.0
    %2074 = vmatmul.mubr.f32.gmra.mxu0 %v166
    %v2075 = vpop.f32.mrf.mxu0
    %v2076 = vadd.f32 0.0, %v2075
    %v2077 = vpop.f32.mrf.mxu0
    %v2078 = vadd.f32 0.0, %v2077
    %2079 = vmatprep.mubr.f32.mxu0 0.0
    %2080 = vmatmul.mubr.f32.gmra.mxu0 %v169
    %v2081 = vpop.f32.mrf.mxu0
    %v2082 = vadd.f32 0.0, %v2081
    %v2083 = vpop.f32.mrf.mxu0
    %v2084 = vadd.f32 0.0, %v2083
    %2085 = vmatprep.mubr.f32.mxu0 0.0
    %2086 = vmatmul.mubr.f32.gmra.mxu0 %v172
    %v2087 = vpop.f32.mrf.mxu0
    %v2088 = vadd.f32 0.0, %v2087
    %v2089 = vpop.f32.mrf.mxu0
    %v2090 = vadd.f32 0.0, %v2089
    %2091 = vdwg.mxu0
    %2092 = vmatprep.subr.mxu0 0.0
    %2093 = vmatpush1.msra.mxu0 0.0
    %2094 = vmatprep.subr.mxu0 0.0
    %2095 = vmatpush1.msra.mxu0 0.0
    %2096 = vmatprep.subr.mxu0 0.0
    %2097 = vmatpush1.msra.mxu0 0.0
    %2098 = vmatprep.subr.mxu0 0.0
    %2099 = vmatpush1.msra.mxu0 0.0
    %2100 = vmatprep.subr.mxu0 0.0
    %2101 = vmatpush1.msra.mxu0 0.0
    %2102 = vmatprep.subr.mxu0 0.0
    %2103 = vmatpush1.msra.mxu0 0.0
    %2104 = vmatprep.subr.mxu0 0.0
    %2105 = vmatpush1.msra.mxu0 0.0
    %2106 = vmatprep.subr.mxu0 0.0
    %2107 = vmatpush1.msra.mxu0 0.0
    %2108 = vmatprep.subr.mxu0 0.0
    %2109 = vmatpush1.msra.mxu0 0.0
    %2110 = vmatprep.subr.mxu0 0.0
    %2111 = vmatpush1.msra.mxu0 0.0
    %2112 = vmatprep.subr.mxu0 0.0
    %2113 = vmatpush1.msra.mxu0 0.0
    %2114 = vmatprep.subr.mxu0 0.0
    %2115 = vmatpush1.msra.mxu0 0.0
    %2116 = vmatprep.subr.mxu0 0.0
    %2117 = vmatpush1.msra.mxu0 0.0
    %2118 = vmatprep.subr.mxu0 %v122
    %2119 = vmatpush1.msra.mxu0 %v121
    %2120 = vmatprep.subr.mxu0 %v90
    %2121 = vmatpush1.msra.mxu0 %v89
    %2122 = vmatprep.subr.mxu0 %v58
    %2123 = vmatpush1.msra.mxu0 %v57
    %2124 = vmatprep.subr.mxu0 0.0
    %2125 = vmatpush2.msra.mxu0 0.0
    %2126 = vmatprep.subr.mxu0 0.0
    %2127 = vmatpush2.msra.mxu0 0.0
    %2128 = vmatprep.subr.mxu0 0.0
    %2129 = vmatpush2.msra.mxu0 0.0
    %2130 = vmatprep.subr.mxu0 0.0
    %2131 = vmatpush2.msra.mxu0 0.0
    %2132 = vmatprep.subr.mxu0 0.0
    %2133 = vmatpush2.msra.mxu0 0.0
    %2134 = vmatprep.subr.mxu0 0.0
    %2135 = vmatpush2.msra.mxu0 0.0
    %2136 = vmatprep.subr.mxu0 0.0
    %2137 = vmatpush2.msra.mxu0 0.0
    %2138 = vmatprep.subr.mxu0 0.0
    %2139 = vmatpush2.msra.mxu0 0.0
    %2140 = vmatprep.subr.mxu0 0.0
    %2141 = vmatpush2.msra.mxu0 0.0
    %2142 = vmatprep.subr.mxu0 0.0
    %2143 = vmatpush2.msra.mxu0 0.0
    %2144 = vmatprep.subr.mxu0 0.0
    %2145 = vmatpush2.msra.mxu0 0.0
    %2146 = vmatprep.subr.mxu0 0.0
    %2147 = vmatpush2.msra.mxu0 0.0
    %2148 = vmatprep.subr.mxu0 0.0
    %2149 = vmatpush2.msra.mxu0 0.0
    %2150 = vmatprep.subr.mxu0 0.0
    %2151 = vmatpush2.msra.mxu0 0.0
    %2152 = vmatprep.subr.mxu0 0.0
    %2153 = vmatpush2.msra.mxu0 0.0
    %2154 = vmatprep.subr.mxu0 0.0
    %2155 = vmatpush2.msra.mxu0 0.0
    %2156 = vmatprep.mubr.f32.mxu0 0.0
    %2157 = vmatmul.mubr.f32.gmra.mxu0 %v139
    %v2158 = vpop.f32.mrf.mxu0
    %v2159 = vadd.f32 0.0, %v2158
    %v2160 = vpop.f32.mrf.mxu0
    %v2161 = vadd.f32 0.0, %v2160
    %2162 = vmatprep.mubr.f32.mxu0 0.0
    %2163 = vmatmul.mubr.f32.gmra.mxu0 %v142
    %v2164 = vpop.f32.mrf.mxu0
    %v2165 = vadd.f32 0.0, %v2164
    %v2166 = vpop.f32.mrf.mxu0
    %v2167 = vadd.f32 0.0, %v2166
    %2168 = vmatprep.mubr.f32.mxu0 0.0
    %2169 = vmatmul.mubr.f32.gmra.mxu0 %v145
    %v2170 = vpop.f32.mrf.mxu0
    %v2171 = vadd.f32 0.0, %v2170
    %v2172 = vpop.f32.mrf.mxu0
    %v2173 = vadd.f32 0.0, %v2172
    %2174 = vmatprep.mubr.f32.mxu0 0.0
    %2175 = vmatmul.mubr.f32.gmra.mxu0 %v148
    %v2176 = vpop.f32.mrf.mxu0
    %v2177 = vadd.f32 0.0, %v2176
    %v2178 = vpop.f32.mrf.mxu0
    %v2179 = vadd.f32 0.0, %v2178
    %2180 = vmatprep.mubr.f32.mxu0 0.0
    %2181 = vmatmul.mubr.f32.gmra.mxu0 %v151
    %v2182 = vpop.f32.mrf.mxu0
    %v2183 = vadd.f32 0.0, %v2182
    %v2184 = vpop.f32.mrf.mxu0
    %v2185 = vadd.f32 0.0, %v2184
    %2186 = vmatprep.mubr.f32.mxu0 0.0
    %2187 = vmatmul.mubr.f32.gmra.mxu0 %v154
    %v2188 = vpop.f32.mrf.mxu0
    %v2189 = vadd.f32 0.0, %v2188
    %v2190 = vpop.f32.mrf.mxu0
    %v2191 = vadd.f32 0.0, %v2190
    %2192 = vmatprep.mubr.f32.mxu0 0.0
    %2193 = vmatmul.mubr.f32.gmra.mxu0 %v157
    %v2194 = vpop.f32.mrf.mxu0
    %v2195 = vadd.f32 0.0, %v2194
    %v2196 = vpop.f32.mrf.mxu0
    %v2197 = vadd.f32 0.0, %v2196
    %2198 = vmatprep.mubr.f32.mxu0 0.0
    %2199 = vmatmul.mubr.f32.gmra.mxu0 %v160
    %v2200 = vpop.f32.mrf.mxu0
    %v2201 = vadd.f32 0.0, %v2200
    %v2202 = vpop.f32.mrf.mxu0
    %v2203 = vadd.f32 0.0, %v2202
    %2204 = vmatprep.mubr.f32.mxu0 0.0
    %2205 = vmatmul.mubr.f32.gmra.mxu0 %v163
    %v2206 = vpop.f32.mrf.mxu0
    %v2207 = vadd.f32 0.0, %v2206
    %v2208 = vpop.f32.mrf.mxu0
    %v2209 = vadd.f32 0.0, %v2208
    %2210 = vmatprep.mubr.f32.mxu0 0.0
    %2211 = vmatmul.mubr.f32.gmra.mxu0 %v166
    %v2212 = vpop.f32.mrf.mxu0
    %v2213 = vadd.f32 0.0, %v2212
    %v2214 = vpop.f32.mrf.mxu0
    %v2215 = vadd.f32 0.0, %v2214
    %2216 = vmatprep.mubr.f32.mxu0 0.0
    %2217 = vmatmul.mubr.f32.gmra.mxu0 %v169
    %v2218 = vpop.f32.mrf.mxu0
    %v2219 = vadd.f32 0.0, %v2218
    %v2220 = vpop.f32.mrf.mxu0
    %v2221 = vadd.f32 0.0, %v2220
    %2222 = vmatprep.mubr.f32.mxu0 0.0
    %2223 = vmatmul.mubr.f32.gmra.mxu0 %v172
    %v2224 = vpop.f32.mrf.mxu0
    %v2225 = vadd.f32 0.0, %v2224
    %v2226 = vpop.f32.mrf.mxu0
    %v2227 = vadd.f32 0.0, %v2226
    %2228 = vdwg.mxu0
    %2229 = vmatprep.subr.mxu0 0.0
    %2230 = vmatpush1.msra.mxu0 0.0
    %2231 = vmatprep.subr.mxu0 0.0
    %2232 = vmatpush1.msra.mxu0 0.0
    %2233 = vmatprep.subr.mxu0 0.0
    %2234 = vmatpush1.msra.mxu0 0.0
    %2235 = vmatprep.subr.mxu0 0.0
    %2236 = vmatpush1.msra.mxu0 0.0
    %2237 = vmatprep.subr.mxu0 0.0
    %2238 = vmatpush1.msra.mxu0 0.0
    %2239 = vmatprep.subr.mxu0 0.0
    %2240 = vmatpush1.msra.mxu0 0.0
    %2241 = vmatprep.subr.mxu0 0.0
    %2242 = vmatpush1.msra.mxu0 0.0
    %2243 = vmatprep.subr.mxu0 0.0
    %2244 = vmatpush1.msra.mxu0 0.0
    %2245 = vmatprep.subr.mxu0 0.0
    %2246 = vmatpush1.msra.mxu0 0.0
    %2247 = vmatprep.subr.mxu0 0.0
    %2248 = vmatpush1.msra.mxu0 0.0
    %2249 = vmatprep.subr.mxu0 0.0
    %2250 = vmatpush1.msra.mxu0 0.0
    %2251 = vmatprep.subr.mxu0 0.0
    %2252 = vmatpush1.msra.mxu0 0.0
    %2253 = vmatprep.subr.mxu0 0.0
    %2254 = vmatpush1.msra.mxu0 0.0
    %2255 = vmatprep.subr.mxu0 %v124
    %2256 = vmatpush1.msra.mxu0 %v123
    %2257 = vmatprep.subr.mxu0 %v92
    %2258 = vmatpush1.msra.mxu0 %v91
    %2259 = vmatprep.subr.mxu0 %v60
    %2260 = vmatpush1.msra.mxu0 %v59
    %2261 = vmatprep.subr.mxu0 0.0
    %2262 = vmatpush2.msra.mxu0 0.0
    %2263 = vmatprep.subr.mxu0 0.0
    %2264 = vmatpush2.msra.mxu0 0.0
    %2265 = vmatprep.subr.mxu0 0.0
    %2266 = vmatpush2.msra.mxu0 0.0
    %2267 = vmatprep.subr.mxu0 0.0
    %2268 = vmatpush2.msra.mxu0 0.0
    %2269 = vmatprep.subr.mxu0 0.0
    %2270 = vmatpush2.msra.mxu0 0.0
    %2271 = vmatprep.subr.mxu0 0.0
    %2272 = vmatpush2.msra.mxu0 0.0
    %2273 = vmatprep.subr.mxu0 0.0
    %2274 = vmatpush2.msra.mxu0 0.0
    %2275 = vmatprep.subr.mxu0 0.0
    %2276 = vmatpush2.msra.mxu0 0.0
    %2277 = vmatprep.subr.mxu0 0.0
    %2278 = vmatpush2.msra.mxu0 0.0
    %2279 = vmatprep.subr.mxu0 0.0
    %2280 = vmatpush2.msra.mxu0 0.0
    %2281 = vmatprep.subr.mxu0 0.0
    %2282 = vmatpush2.msra.mxu0 0.0
    %2283 = vmatprep.subr.mxu0 0.0
    %2284 = vmatpush2.msra.mxu0 0.0
    %2285 = vmatprep.subr.mxu0 0.0
    %2286 = vmatpush2.msra.mxu0 0.0
    %2287 = vmatprep.subr.mxu0 0.0
    %2288 = vmatpush2.msra.mxu0 0.0
    %2289 = vmatprep.subr.mxu0 0.0
    %2290 = vmatpush2.msra.mxu0 0.0
    %2291 = vmatprep.subr.mxu0 0.0
    %2292 = vmatpush2.msra.mxu0 0.0
    %2293 = vmatprep.mubr.f32.mxu0 0.0
    %2294 = vmatmul.mubr.f32.gmra.mxu0 %v139
    %v2295 = vpop.f32.mrf.mxu0
    %v2296 = vadd.f32 0.0, %v2295
    %v2297 = vpop.f32.mrf.mxu0
    %v2298 = vadd.f32 0.0, %v2297
    %2299 = vmatprep.mubr.f32.mxu0 0.0
    %2300 = vmatmul.mubr.f32.gmra.mxu0 %v142
    %v2301 = vpop.f32.mrf.mxu0
    %v2302 = vadd.f32 0.0, %v2301
    %v2303 = vpop.f32.mrf.mxu0
    %v2304 = vadd.f32 0.0, %v2303
    %2305 = vmatprep.mubr.f32.mxu0 0.0
    %2306 = vmatmul.mubr.f32.gmra.mxu0 %v145
    %v2307 = vpop.f32.mrf.mxu0
    %v2308 = vadd.f32 0.0, %v2307
    %v2309 = vpop.f32.mrf.mxu0
    %v2310 = vadd.f32 0.0, %v2309
    %2311 = vmatprep.mubr.f32.mxu0 0.0
    %2312 = vmatmul.mubr.f32.gmra.mxu0 %v148
    %v2313 = vpop.f32.mrf.mxu0
    %v2314 = vadd.f32 0.0, %v2313
    %v2315 = vpop.f32.mrf.mxu0
    %v2316 = vadd.f32 0.0, %v2315
    %2317 = vmatprep.mubr.f32.mxu0 0.0
    %2318 = vmatmul.mubr.f32.gmra.mxu0 %v151
    %v2319 = vpop.f32.mrf.mxu0
    %v2320 = vadd.f32 0.0, %v2319
    %v2321 = vpop.f32.mrf.mxu0
    %v2322 = vadd.f32 0.0, %v2321
    %2323 = vmatprep.mubr.f32.mxu0 0.0
    %2324 = vmatmul.mubr.f32.gmra.mxu0 %v154
    %v2325 = vpop.f32.mrf.mxu0
    %v2326 = vadd.f32 0.0, %v2325
    %v2327 = vpop.f32.mrf.mxu0
    %v2328 = vadd.f32 0.0, %v2327
    %2329 = vmatprep.mubr.f32.mxu0 0.0
    %2330 = vmatmul.mubr.f32.gmra.mxu0 %v157
    %v2331 = vpop.f32.mrf.mxu0
    %v2332 = vadd.f32 0.0, %v2331
    %v2333 = vpop.f32.mrf.mxu0
    %v2334 = vadd.f32 0.0, %v2333
    %2335 = vmatprep.mubr.f32.mxu0 0.0
    %2336 = vmatmul.mubr.f32.gmra.mxu0 %v160
    %v2337 = vpop.f32.mrf.mxu0
    %v2338 = vadd.f32 0.0, %v2337
    %v2339 = vpop.f32.mrf.mxu0
    %v2340 = vadd.f32 0.0, %v2339
    %2341 = vmatprep.mubr.f32.mxu0 0.0
    %2342 = vmatmul.mubr.f32.gmra.mxu0 %v163
    %v2343 = vpop.f32.mrf.mxu0
    %v2344 = vadd.f32 0.0, %v2343
    %v2345 = vpop.f32.mrf.mxu0
    %v2346 = vadd.f32 0.0, %v2345
    %2347 = vmatprep.mubr.f32.mxu0 0.0
    %2348 = vmatmul.mubr.f32.gmra.mxu0 %v166
    %v2349 = vpop.f32.mrf.mxu0
    %v2350 = vadd.f32 0.0, %v2349
    %v2351 = vpop.f32.mrf.mxu0
    %v2352 = vadd.f32 0.0, %v2351
    %2353 = vmatprep.mubr.f32.mxu0 0.0
    %2354 = vmatmul.mubr.f32.gmra.mxu0 %v169
    %v2355 = vpop.f32.mrf.mxu0
    %v2356 = vadd.f32 0.0, %v2355
    %v2357 = vpop.f32.mrf.mxu0
    %v2358 = vadd.f32 0.0, %v2357
    %2359 = vmatprep.mubr.f32.mxu0 0.0
    %2360 = vmatmul.mubr.f32.gmra.mxu0 %v172
    %v2361 = vpop.f32.mrf.mxu0
    %v2362 = vadd.f32 0.0, %v2361
    %v2363 = vpop.f32.mrf.mxu0
    %v2364 = vadd.f32 0.0, %v2363
    %2365 = vdwg.mxu0
    %v2366 = vmul.f32 %v241, 1.442695
    %v2367 = vpow.pop %v2366
    %v2368 = vmul.f32 %v243, 1.442695
    %v2369 = vpow.pop %v2368
    %v2370 = vmul.f32 %v378, 1.442695
    %v2371 = vpow.pop %v2370
    %v2372 = vmul.f32 %v380, 1.442695
    %v2373 = vpow.pop %v2372
    %v2374 = vmul.f32 %v515, 1.442695
    %v2375 = vpow.pop %v2374
    %v2376 = vmul.f32 %v517, 1.442695
    %v2377 = vpow.pop %v2376
    %v2378 = vmul.f32 %v652, 1.442695
    %v2379 = vpow.pop %v2378
    %v2380 = vmul.f32 %v654, 1.442695
    %v2381 = vpow.pop %v2380
    %v2382 = vmul.f32 %v789, 1.442695
    %v2383 = vpow.pop %v2382
    %v2384 = vmul.f32 %v791, 1.442695
    %v2385 = vpow.pop %v2384
    %v2386 = vmul.f32 %v926, 1.442695
    %v2387 = vpow.pop %v2386
    %v2388 = vmul.f32 %v928, 1.442695
    %v2389 = vpow.pop %v2388
    %v2390 = vmul.f32 %v1063, 1.442695
    %v2391 = vpow.pop %v2390
    %v2392 = vmul.f32 %v1065, 1.442695
    %v2393 = vpow.pop %v2392
    %v2394 = vmul.f32 %v1200, 1.442695
    %v2395 = vpow.pop %v2394
    %v2396 = vmul.f32 %v1202, 1.442695
    %v2397 = vpow.pop %v2396
    %v2398 = vmul.f32 %v1337, 1.442695
    %v2399 = vpow.pop %v2398
    %v2400 = vmul.f32 %v1339, 1.442695
    %v2401 = vpow.pop %v2400
    %v2402 = vmul.f32 %v1474, 1.442695
    %v2403 = vpow.pop %v2402
    %v2404 = vmul.f32 %v1476, 1.442695
    %v2405 = vpow.pop %v2404
    %v2406 = vmul.f32 %v1611, 1.442695
    %v2407 = vpow.pop %v2406
    %v2408 = vmul.f32 %v1613, 1.442695
    %v2409 = vpow.pop %v2408
    %v2410 = vmul.f32 %v1748, 1.442695
    %v2411 = vpow.pop %v2410
    %v2412 = vmul.f32 %v1750, 1.442695
    %v2413 = vpow.pop %v2412
    %v2414 = vmul.f32 %v1885, 1.442695
    %v2415 = vpow.pop %v2414
    %v2416 = vmul.f32 %v1887, 1.442695
    %v2417 = vpow.pop %v2416
    %v2418 = vmul.f32 %v2022, 1.442695
    %v2419 = vpow.pop %v2418
    %v2420 = vmul.f32 %v2024, 1.442695
    %v2421 = vpow.pop %v2420
    %v2422 = vmul.f32 %v2159, 1.442695
    %v2423 = vpow.pop %v2422
    %v2424 = vmul.f32 %v2161, 1.442695
    %v2425 = vpow.pop %v2424
    %v2426 = vmul.f32 %v2296, 1.442695
    %v2427 = vpow.pop %v2426
    %v2428 = vmul.f32 %v2298, 1.442695
    %v2429 = vpow.pop %v2428
    %v2430 = vmul.f32 %v247, 1.442695
    %v2431 = vpow.pop %v2430
    %v2432 = vmul.f32 %v249, 1.442695
    %v2433 = vpow.pop %v2432
    %v2434 = vmul.f32 %v384, 1.442695
    %v2435 = vpow.pop %v2434
    %v2436 = vmul.f32 %v386, 1.442695
    %v2437 = vpow.pop %v2436
    %v2438 = vmul.f32 %v521, 1.442695
    %v2439 = vpow.pop %v2438
    %v2440 = vmul.f32 %v523, 1.442695
    %v2441 = vpow.pop %v2440
    %v2442 = vmul.f32 %v658, 1.442695
    %v2443 = vpow.pop %v2442
    %v2444 = vmul.f32 %v660, 1.442695
    %v2445 = vpow.pop %v2444
    %v2446 = vmul.f32 %v795, 1.442695
    %v2447 = vpow.pop %v2446
    %v2448 = vmul.f32 %v797, 1.442695
    %v2449 = vpow.pop %v2448
    %v2450 = vmul.f32 %v932, 1.442695
    %v2451 = vpow.pop %v2450
    %v2452 = vmul.f32 %v934, 1.442695
    %v2453 = vpow.pop %v2452
    %v2454 = vmul.f32 %v1069, 1.442695
    %v2455 = vpow.pop %v2454
    %v2456 = vmul.f32 %v1071, 1.442695
    %v2457 = vpow.pop %v2456
    %v2458 = vmul.f32 %v1206, 1.442695
    %v2459 = vpow.pop %v2458
    %v2460 = vmul.f32 %v1208, 1.442695
    %v2461 = vpow.pop %v2460
    %v2462 = vmul.f32 %v1343, 1.442695
    %v2463 = vpow.pop %v2462
    %v2464 = vmul.f32 %v1345, 1.442695
    %v2465 = vpow.pop %v2464
    %v2466 = vmul.f32 %v1480, 1.442695
    %v2467 = vpow.pop %v2466
    %v2468 = vmul.f32 %v1482, 1.442695
    %v2469 = vpow.pop %v2468
    %v2470 = vmul.f32 %v1617, 1.442695
    %v2471 = vpow.pop %v2470
    %v2472 = vmul.f32 %v1619, 1.442695
    %v2473 = vpow.pop %v2472
    %v2474 = vmul.f32 %v1754, 1.442695
    %v2475 = vpow.pop %v2474
    %v2476 = vmul.f32 %v1756, 1.442695
    %v2477 = vpow.pop %v2476
    %v2478 = vmul.f32 %v1891, 1.442695
    %v2479 = vpow.pop %v2478
    %v2480 = vmul.f32 %v1893, 1.442695
    %v2481 = vpow.pop %v2480
    %v2482 = vmul.f32 %v2028, 1.442695
    %v2483 = vpow.pop %v2482
    %v2484 = vmul.f32 %v2030, 1.442695
    %v2485 = vpow.pop %v2484
    %v2486 = vmul.f32 %v2165, 1.442695
    %v2487 = vpow.pop %v2486
    %v2488 = vmul.f32 %v2167, 1.442695
    %v2489 = vpow.pop %v2488
    %v2490 = vmul.f32 %v2302, 1.442695
    %v2491 = vpow.pop %v2490
    %v2492 = vmul.f32 %v2304, 1.442695
    %v2493 = vpow.pop %v2492
    %v2494 = vmul.f32 %v253, 1.442695
    %v2495 = vpow.pop %v2494
    %v2496 = vmul.f32 %v255, 1.442695
    %v2497 = vpow.pop %v2496
    %v2498 = vmul.f32 %v390, 1.442695
    %v2499 = vpow.pop %v2498
    %v2500 = vmul.f32 %v392, 1.442695
    %v2501 = vpow.pop %v2500
    %v2502 = vmul.f32 %v527, 1.442695
    %v2503 = vpow.pop %v2502
    %v2504 = vmul.f32 %v529, 1.442695
    %v2505 = vpow.pop %v2504
    %v2506 = vmul.f32 %v664, 1.442695
    %v2507 = vpow.pop %v2506
    %v2508 = vmul.f32 %v666, 1.442695
    %v2509 = vpow.pop %v2508
    %v2510 = vmul.f32 %v801, 1.442695
    %v2511 = vpow.pop %v2510
    %v2512 = vmul.f32 %v803, 1.442695
    %v2513 = vpow.pop %v2512
    %v2514 = vmul.f32 %v938, 1.442695
    %v2515 = vpow.pop %v2514
    %v2516 = vmul.f32 %v940, 1.442695
    %v2517 = vpow.pop %v2516
    %v2518 = vmul.f32 %v1075, 1.442695
    %v2519 = vpow.pop %v2518
    %v2520 = vmul.f32 %v1077, 1.442695
    %v2521 = vpow.pop %v2520
    %v2522 = vmul.f32 %v1212, 1.442695
    %v2523 = vpow.pop %v2522
    %v2524 = vmul.f32 %v1214, 1.442695
    %v2525 = vpow.pop %v2524
    %v2526 = vmul.f32 %v1349, 1.442695
    %v2527 = vpow.pop %v2526
    %v2528 = vmul.f32 %v1351, 1.442695
    %v2529 = vpow.pop %v2528
    %v2530 = vmul.f32 %v1486, 1.442695
    %v2531 = vpow.pop %v2530
    %v2532 = vmul.f32 %v1488, 1.442695
    %v2533 = vpow.pop %v2532
    %v2534 = vmul.f32 %v1623, 1.442695
    %v2535 = vpow.pop %v2534
    %v2536 = vmul.f32 %v1625, 1.442695
    %v2537 = vpow.pop %v2536
    %v2538 = vmul.f32 %v1760, 1.442695
    %v2539 = vpow.pop %v2538
    %v2540 = vmul.f32 %v1762, 1.442695
    %v2541 = vpow.pop %v2540
    %v2542 = vmul.f32 %v1897, 1.442695
    %v2543 = vpow.pop %v2542
    %v2544 = vmul.f32 %v1899, 1.442695
    %v2545 = vpow.pop %v2544
    %v2546 = vmul.f32 %v2034, 1.442695
    %v2547 = vpow.pop %v2546
    %v2548 = vmul.f32 %v2036, 1.442695
    %v2549 = vpow.pop %v2548
    %v2550 = vmul.f32 %v2171, 1.442695
    %v2551 = vpow.pop %v2550
    %v2552 = vmul.f32 %v2173, 1.442695
    %v2553 = vpow.pop %v2552
    %v2554 = vmul.f32 %v2308, 1.442695
    %v2555 = vpow.pop %v2554
    %v2556 = vmul.f32 %v2310, 1.442695
    %v2557 = vpow.pop %v2556
    %v2558 = vmul.f32 %v259, 1.442695
    %v2559 = vpow.pop %v2558
    %v2560 = vmul.f32 %v261, 1.442695
    %v2561 = vpow.pop %v2560
    %v2562 = vmul.f32 %v396, 1.442695
    %v2563 = vpow.pop %v2562
    %v2564 = vmul.f32 %v398, 1.442695
    %v2565 = vpow.pop %v2564
    %v2566 = vmul.f32 %v533, 1.442695
    %v2567 = vpow.pop %v2566
    %v2568 = vmul.f32 %v535, 1.442695
    %v2569 = vpow.pop %v2568
    %v2570 = vmul.f32 %v670, 1.442695
    %v2571 = vpow.pop %v2570
    %v2572 = vmul.f32 %v672, 1.442695
    %v2573 = vpow.pop %v2572
    %v2574 = vmul.f32 %v807, 1.442695
    %v2575 = vpow.pop %v2574
    %v2576 = vmul.f32 %v809, 1.442695
    %v2577 = vpow.pop %v2576
    %v2578 = vmul.f32 %v944, 1.442695
    %v2579 = vpow.pop %v2578
    %v2580 = vmul.f32 %v946, 1.442695
    %v2581 = vpow.pop %v2580
    %v2582 = vmul.f32 %v1081, 1.442695
    %v2583 = vpow.pop %v2582
    %v2584 = vmul.f32 %v1083, 1.442695
    %v2585 = vpow.pop %v2584
    %v2586 = vmul.f32 %v1218, 1.442695
    %v2587 = vpow.pop %v2586
    %v2588 = vmul.f32 %v1220, 1.442695
    %v2589 = vpow.pop %v2588
    %v2590 = vmul.f32 %v1355, 1.442695
    %v2591 = vpow.pop %v2590
    %v2592 = vmul.f32 %v1357, 1.442695
    %v2593 = vpow.pop %v2592
    %v2594 = vmul.f32 %v1492, 1.442695
    %v2595 = vpow.pop %v2594
    %v2596 = vmul.f32 %v1494, 1.442695
    %v2597 = vpow.pop %v2596
    %v2598 = vmul.f32 %v1629, 1.442695
    %v2599 = vpow.pop %v2598
    %v2600 = vmul.f32 %v1631, 1.442695
    %v2601 = vpow.pop %v2600
    %v2602 = vmul.f32 %v1766, 1.442695
    %v2603 = vpow.pop %v2602
    %v2604 = vmul.f32 %v1768, 1.442695
    %v2605 = vpow.pop %v2604
    %v2606 = vmul.f32 %v1903, 1.442695
    %v2607 = vpow.pop %v2606
    %v2608 = vmul.f32 %v1905, 1.442695
    %v2609 = vpow.pop %v2608
    %v2610 = vmul.f32 %v2040, 1.442695
    %v2611 = vpow.pop %v2610
    %v2612 = vmul.f32 %v2042, 1.442695
    %v2613 = vpow.pop %v2612
    %v2614 = vmul.f32 %v2177, 1.442695
    %v2615 = vpow.pop %v2614
    %v2616 = vmul.f32 %v2179, 1.442695
    %v2617 = vpow.pop %v2616
    %v2618 = vmul.f32 %v2314, 1.442695
    %v2619 = vpow.pop %v2618
    %v2620 = vmul.f32 %v2316, 1.442695
    %v2621 = vpow.pop %v2620
    %v2622 = vmul.f32 %v265, 1.442695
    %v2623 = vpow.pop %v2622
    %v2624 = vmul.f32 %v267, 1.442695
    %v2625 = vpow.pop %v2624
    %v2626 = vmul.f32 %v402, 1.442695
    %v2627 = vpow.pop %v2626
    %v2628 = vmul.f32 %v404, 1.442695
    %v2629 = vpow.pop %v2628
    %v2630 = vmul.f32 %v539, 1.442695
    %v2631 = vpow.pop %v2630
    %v2632 = vmul.f32 %v541, 1.442695
    %v2633 = vpow.pop %v2632
    %v2634 = vmul.f32 %v676, 1.442695
    %v2635 = vpow.pop %v2634
    %v2636 = vmul.f32 %v678, 1.442695
    %v2637 = vpow.pop %v2636
    %v2638 = vmul.f32 %v813, 1.442695
    %v2639 = vpow.pop %v2638
    %v2640 = vmul.f32 %v815, 1.442695
    %v2641 = vpow.pop %v2640
    %v2642 = vmul.f32 %v950, 1.442695
    %v2643 = vpow.pop %v2642
    %v2644 = vmul.f32 %v952, 1.442695
    %v2645 = vpow.pop %v2644
    %v2646 = vmul.f32 %v1087, 1.442695
    %v2647 = vpow.pop %v2646
    %v2648 = vmul.f32 %v1089, 1.442695
    %v2649 = vpow.pop %v2648
    %v2650 = vmul.f32 %v1224, 1.442695
    %v2651 = vpow.pop %v2650
    %v2652 = vmul.f32 %v1226, 1.442695
    %v2653 = vpow.pop %v2652
    %v2654 = vmul.f32 %v1361, 1.442695
    %v2655 = vpow.pop %v2654
    %v2656 = vmul.f32 %v1363, 1.442695
    %v2657 = vpow.pop %v2656
    %v2658 = vmul.f32 %v1498, 1.442695
    %v2659 = vpow.pop %v2658
    %v2660 = vmul.f32 %v1500, 1.442695
    %v2661 = vpow.pop %v2660
    %v2662 = vmul.f32 %v1635, 1.442695
    %v2663 = vpow.pop %v2662
    %v2664 = vmul.f32 %v1637, 1.442695
    %v2665 = vpow.pop %v2664
    %v2666 = vmul.f32 %v1772, 1.442695
    %v2667 = vpow.pop %v2666
    %v2668 = vmul.f32 %v1774, 1.442695
    %v2669 = vpow.pop %v2668
    %v2670 = vmul.f32 %v1909, 1.442695
    %v2671 = vpow.pop %v2670
    %v2672 = vmul.f32 %v1911, 1.442695
    %v2673 = vpow.pop %v2672
    %v2674 = vmul.f32 %v2046, 1.442695
    %v2675 = vpow.pop %v2674
    %v2676 = vmul.f32 %v2048, 1.442695
    %v2677 = vpow.pop %v2676
    %v2678 = vmul.f32 %v2183, 1.442695
    %v2679 = vpow.pop %v2678
    %v2680 = vmul.f32 %v2185, 1.442695
    %v2681 = vpow.pop %v2680
    %v2682 = vmul.f32 %v2320, 1.442695
    %v2683 = vpow.pop %v2682
    %v2684 = vmul.f32 %v2322, 1.442695
    %v2685 = vpow.pop %v2684
    %v2686 = vmul.f32 %v271, 1.442695
    %v2687 = vpow.pop %v2686
    %v2688 = vmul.f32 %v273, 1.442695
    %v2689 = vpow.pop %v2688
    %v2690 = vmul.f32 %v408, 1.442695
    %v2691 = vpow.pop %v2690
    %v2692 = vmul.f32 %v410, 1.442695
    %v2693 = vpow.pop %v2692
    %v2694 = vmul.f32 %v545, 1.442695
    %v2695 = vpow.pop %v2694
    %v2696 = vmul.f32 %v547, 1.442695
    %v2697 = vpow.pop %v2696
    %v2698 = vmul.f32 %v682, 1.442695
    %v2699 = vpow.pop %v2698
    %v2700 = vmul.f32 %v684, 1.442695
    %v2701 = vpow.pop %v2700
    %v2702 = vmul.f32 %v819, 1.442695
    %v2703 = vpow.pop %v2702
    %v2704 = vmul.f32 %v821, 1.442695
    %v2705 = vpow.pop %v2704
    %v2706 = vmul.f32 %v956, 1.442695
    %v2707 = vpow.pop %v2706
    %v2708 = vmul.f32 %v958, 1.442695
    %v2709 = vpow.pop %v2708
    %v2710 = vmul.f32 %v1093, 1.442695
    %v2711 = vpow.pop %v2710
    %v2712 = vmul.f32 %v1095, 1.442695
    %v2713 = vpow.pop %v2712
    %v2714 = vmul.f32 %v1230, 1.442695
    %v2715 = vpow.pop %v2714
    %v2716 = vmul.f32 %v1232, 1.442695
    %v2717 = vpow.pop %v2716
    %v2718 = vmul.f32 %v1367, 1.442695
    %v2719 = vpow.pop %v2718
    %v2720 = vmul.f32 %v1369, 1.442695
    %v2721 = vpow.pop %v2720
    %v2722 = vmul.f32 %v1504, 1.442695
    %v2723 = vpow.pop %v2722
    %v2724 = vmul.f32 %v1506, 1.442695
    %v2725 = vpow.pop %v2724
    %v2726 = vmul.f32 %v1641, 1.442695
    %v2727 = vpow.pop %v2726
    %v2728 = vmul.f32 %v1643, 1.442695
    %v2729 = vpow.pop %v2728
    %v2730 = vmul.f32 %v1778, 1.442695
    %v2731 = vpow.pop %v2730
    %v2732 = vmul.f32 %v1780, 1.442695
    %v2733 = vpow.pop %v2732
    %v2734 = vmul.f32 %v1915, 1.442695
    %v2735 = vpow.pop %v2734
    %v2736 = vmul.f32 %v1917, 1.442695
    %v2737 = vpow.pop %v2736
    %v2738 = vmul.f32 %v2052, 1.442695
    %v2739 = vpow.pop %v2738
    %v2740 = vmul.f32 %v2054, 1.442695
    %v2741 = vpow.pop %v2740
    %v2742 = vmul.f32 %v2189, 1.442695
    %v2743 = vpow.pop %v2742
    %v2744 = vmul.f32 %v2191, 1.442695
    %v2745 = vpow.pop %v2744
    %v2746 = vmul.f32 %v2326, 1.442695
    %v2747 = vpow.pop %v2746
    %v2748 = vmul.f32 %v2328, 1.442695
    %v2749 = vpow.pop %v2748
    %v2750 = vmul.f32 %v277, 1.442695
    %v2751 = vpow.pop %v2750
    %v2752 = vmul.f32 %v279, 1.442695
    %v2753 = vpow.pop %v2752
    %v2754 = vmul.f32 %v414, 1.442695
    %v2755 = vpow.pop %v2754
    %v2756 = vmul.f32 %v416, 1.442695
    %v2757 = vpow.pop %v2756
    %v2758 = vmul.f32 %v551, 1.442695
    %v2759 = vpow.pop %v2758
    %v2760 = vmul.f32 %v553, 1.442695
    %v2761 = vpow.pop %v2760
    %v2762 = vmul.f32 %v688, 1.442695
    %v2763 = vpow.pop %v2762
    %v2764 = vmul.f32 %v690, 1.442695
    %v2765 = vpow.pop %v2764
    %v2766 = vmul.f32 %v825, 1.442695
    %v2767 = vpow.pop %v2766
    %v2768 = vmul.f32 %v827, 1.442695
    %v2769 = vpow.pop %v2768
    %v2770 = vmul.f32 %v962, 1.442695
    %v2771 = vpow.pop %v2770
    %v2772 = vmul.f32 %v964, 1.442695
    %v2773 = vpow.pop %v2772
    %v2774 = vmul.f32 %v1099, 1.442695
    %v2775 = vpow.pop %v2774
    %v2776 = vmul.f32 %v1101, 1.442695
    %v2777 = vpow.pop %v2776
    %v2778 = vmul.f32 %v1236, 1.442695
    %v2779 = vpow.pop %v2778
    %v2780 = vmul.f32 %v1238, 1.442695
    %v2781 = vpow.pop %v2780
    %v2782 = vmul.f32 %v1373, 1.442695
    %v2783 = vpow.pop %v2782
    %v2784 = vmul.f32 %v1375, 1.442695
    %v2785 = vpow.pop %v2784
    %v2786 = vmul.f32 %v1510, 1.442695
    %v2787 = vpow.pop %v2786
    %v2788 = vmul.f32 %v1512, 1.442695
    %v2789 = vpow.pop %v2788
    %v2790 = vmul.f32 %v1647, 1.442695
    %v2791 = vpow.pop %v2790
    %v2792 = vmul.f32 %v1649, 1.442695
    %v2793 = vpow.pop %v2792
    %v2794 = vmul.f32 %v1784, 1.442695
    %v2795 = vpow.pop %v2794
    %v2796 = vmul.f32 %v1786, 1.442695
    %v2797 = vpow.pop %v2796
    %v2798 = vmul.f32 %v1921, 1.442695
    %v2799 = vpow.pop %v2798
    %v2800 = vmul.f32 %v1923, 1.442695
    %v2801 = vpow.pop %v2800
    %v2802 = vmul.f32 %v2058, 1.442695
    %v2803 = vpow.pop %v2802
    %v2804 = vmul.f32 %v2060, 1.442695
    %v2805 = vpow.pop %v2804
    %v2806 = vmul.f32 %v2195, 1.442695
    %v2807 = vpow.pop %v2806
    %v2808 = vmul.f32 %v2197, 1.442695
    %v2809 = vpow.pop %v2808
    %v2810 = vmul.f32 %v2332, 1.442695
    %v2811 = vpow.pop %v2810
    %v2812 = vmul.f32 %v2334, 1.442695
    %v2813 = vpow.pop %v2812
    %v2814 = vmul.f32 %v283, 1.442695
    %v2815 = vpow.pop %v2814
    %v2816 = vmul.f32 %v285, 1.442695
    %v2817 = vpow.pop %v2816
    %v2818 = vmul.f32 %v420, 1.442695
    %v2819 = vpow.pop %v2818
    %v2820 = vmul.f32 %v422, 1.442695
    %v2821 = vpow.pop %v2820
    %v2822 = vmul.f32 %v557, 1.442695
    %v2823 = vpow.pop %v2822
    %v2824 = vmul.f32 %v559, 1.442695
    %v2825 = vpow.pop %v2824
    %v2826 = vmul.f32 %v694, 1.442695
    %v2827 = vpow.pop %v2826
    %v2828 = vmul.f32 %v696, 1.442695
    %v2829 = vpow.pop %v2828
    %v2830 = vmul.f32 %v831, 1.442695
    %v2831 = vpow.pop %v2830
    %v2832 = vmul.f32 %v833, 1.442695
    %v2833 = vpow.pop %v2832
    %v2834 = vmul.f32 %v968, 1.442695
    %v2835 = vpow.pop %v2834
    %v2836 = vmul.f32 %v970, 1.442695
    %v2837 = vpow.pop %v2836
    %v2838 = vmul.f32 %v1105, 1.442695
    %v2839 = vpow.pop %v2838
    %v2840 = vmul.f32 %v1107, 1.442695
    %v2841 = vpow.pop %v2840
    %v2842 = vmul.f32 %v1242, 1.442695
    %v2843 = vpow.pop %v2842
    %v2844 = vmul.f32 %v1244, 1.442695
    %v2845 = vpow.pop %v2844
    %v2846 = vmul.f32 %v1379, 1.442695
    %v2847 = vpow.pop %v2846
    %v2848 = vmul.f32 %v1381, 1.442695
    %v2849 = vpow.pop %v2848
    %v2850 = vmul.f32 %v1516, 1.442695
    %v2851 = vpow.pop %v2850
    %v2852 = vmul.f32 %v1518, 1.442695
    %v2853 = vpow.pop %v2852
    %v2854 = vmul.f32 %v1653, 1.442695
    %v2855 = vpow.pop %v2854
    %v2856 = vmul.f32 %v1655, 1.442695
    %v2857 = vpow.pop %v2856
    %v2858 = vmul.f32 %v1790, 1.442695
    %v2859 = vpow.pop %v2858
    %v2860 = vmul.f32 %v1792, 1.442695
    %v2861 = vpow.pop %v2860
    %v2862 = vmul.f32 %v1927, 1.442695
    %v2863 = vpow.pop %v2862
    %v2864 = vmul.f32 %v1929, 1.442695
    %v2865 = vpow.pop %v2864
    %v2866 = vmul.f32 %v2064, 1.442695
    %v2867 = vpow.pop %v2866
    %v2868 = vmul.f32 %v2066, 1.442695
    %v2869 = vpow.pop %v2868
    %v2870 = vmul.f32 %v2201, 1.442695
    %v2871 = vpow.pop %v2870
    %v2872 = vmul.f32 %v2203, 1.442695
    %v2873 = vpow.pop %v2872
    %v2874 = vmul.f32 %v2338, 1.442695
    %v2875 = vpow.pop %v2874
    %v2876 = vmul.f32 %v2340, 1.442695
    %v2877 = vpow.pop %v2876
    %v2878 = vmul.f32 %v289, 1.442695
    %v2879 = vpow.pop %v2878
    %v2880 = vmul.f32 %v291, 1.442695
    %v2881 = vpow.pop %v2880
    %v2882 = vmul.f32 %v426, 1.442695
    %v2883 = vpow.pop %v2882
    %v2884 = vmul.f32 %v428, 1.442695
    %v2885 = vpow.pop %v2884
    %v2886 = vmul.f32 %v563, 1.442695
    %v2887 = vpow.pop %v2886
    %v2888 = vmul.f32 %v565, 1.442695
    %v2889 = vpow.pop %v2888
    %v2890 = vmul.f32 %v700, 1.442695
    %v2891 = vpow.pop %v2890
    %v2892 = vmul.f32 %v702, 1.442695
    %v2893 = vpow.pop %v2892
    %v2894 = vmul.f32 %v837, 1.442695
    %v2895 = vpow.pop %v2894
    %v2896 = vmul.f32 %v839, 1.442695
    %v2897 = vpow.pop %v2896
    %v2898 = vmul.f32 %v974, 1.442695
    %v2899 = vpow.pop %v2898
    %v2900 = vmul.f32 %v976, 1.442695
    %v2901 = vpow.pop %v2900
    %v2902 = vmul.f32 %v1111, 1.442695
    %v2903 = vpow.pop %v2902
    %v2904 = vmul.f32 %v1113, 1.442695
    %v2905 = vpow.pop %v2904
    %v2906 = vmul.f32 %v1248, 1.442695
    %v2907 = vpow.pop %v2906
    %v2908 = vmul.f32 %v1250, 1.442695
    %v2909 = vpow.pop %v2908
    %v2910 = vmul.f32 %v1385, 1.442695
    %v2911 = vpow.pop %v2910
    %v2912 = vmul.f32 %v1387, 1.442695
    %v2913 = vpow.pop %v2912
    %v2914 = vmul.f32 %v1522, 1.442695
    %v2915 = vpow.pop %v2914
    %v2916 = vmul.f32 %v1524, 1.442695
    %v2917 = vpow.pop %v2916
    %v2918 = vmul.f32 %v1659, 1.442695
    %v2919 = vpow.pop %v2918
    %v2920 = vmul.f32 %v1661, 1.442695
    %v2921 = vpow.pop %v2920
    %v2922 = vmul.f32 %v1796, 1.442695
    %v2923 = vpow.pop %v2922
    %v2924 = vmul.f32 %v1798, 1.442695
    %v2925 = vpow.pop %v2924
    %v2926 = vmul.f32 %v1933, 1.442695
    %v2927 = vpow.pop %v2926
    %v2928 = vmul.f32 %v1935, 1.442695
    %v2929 = vpow.pop %v2928
    %v2930 = vmul.f32 %v2070, 1.442695
    %v2931 = vpow.pop %v2930
    %v2932 = vmul.f32 %v2072, 1.442695
    %v2933 = vpow.pop %v2932
    %v2934 = vmul.f32 %v2207, 1.442695
    %v2935 = vpow.pop %v2934
    %v2936 = vmul.f32 %v2209, 1.442695
    %v2937 = vpow.pop %v2936
    %v2938 = vmul.f32 %v2344, 1.442695
    %v2939 = vpow.pop %v2938
    %v2940 = vmul.f32 %v2346, 1.442695
    %v2941 = vpow.pop %v2940
    %v2942 = vmul.f32 %v295, 1.442695
    %v2943 = vpow.pop %v2942
    %v2944 = vmul.f32 %v297, 1.442695
    %v2945 = vpow.pop %v2944
    %v2946 = vmul.f32 %v432, 1.442695
    %v2947 = vpow.pop %v2946
    %v2948 = vmul.f32 %v434, 1.442695
    %v2949 = vpow.pop %v2948
    %v2950 = vmul.f32 %v569, 1.442695
    %v2951 = vpow.pop %v2950
    %v2952 = vmul.f32 %v571, 1.442695
    %v2953 = vpow.pop %v2952
    %v2954 = vmul.f32 %v706, 1.442695
    %v2955 = vpow.pop %v2954
    %v2956 = vmul.f32 %v708, 1.442695
    %v2957 = vpow.pop %v2956
    %v2958 = vmul.f32 %v843, 1.442695
    %v2959 = vpow.pop %v2958
    %v2960 = vmul.f32 %v845, 1.442695
    %v2961 = vpow.pop %v2960
    %v2962 = vmul.f32 %v980, 1.442695
    %v2963 = vpow.pop %v2962
    %v2964 = vmul.f32 %v982, 1.442695
    %v2965 = vpow.pop %v2964
    %v2966 = vmul.f32 %v1117, 1.442695
    %v2967 = vpow.pop %v2966
    %v2968 = vmul.f32 %v1119, 1.442695
    %v2969 = vpow.pop %v2968
    %v2970 = vmul.f32 %v1254, 1.442695
    %v2971 = vpow.pop %v2970
    %v2972 = vmul.f32 %v1256, 1.442695
    %v2973 = vpow.pop %v2972
    %v2974 = vmul.f32 %v1391, 1.442695
    %v2975 = vpow.pop %v2974
    %v2976 = vmul.f32 %v1393, 1.442695
    %v2977 = vpow.pop %v2976
    %v2978 = vmul.f32 %v1528, 1.442695
    %v2979 = vpow.pop %v2978
    %v2980 = vmul.f32 %v1530, 1.442695
    %v2981 = vpow.pop %v2980
    %v2982 = vmul.f32 %v1665, 1.442695
    %v2983 = vpow.pop %v2982
    %v2984 = vmul.f32 %v1667, 1.442695
    %v2985 = vpow.pop %v2984
    %v2986 = vmul.f32 %v1802, 1.442695
    %v2987 = vpow.pop %v2986
    %v2988 = vmul.f32 %v1804, 1.442695
    %v2989 = vpow.pop %v2988
    %v2990 = vmul.f32 %v1939, 1.442695
    %v2991 = vpow.pop %v2990
    %v2992 = vmul.f32 %v1941, 1.442695
    %v2993 = vpow.pop %v2992
    %v2994 = vmul.f32 %v2076, 1.442695
    %v2995 = vpow.pop %v2994
    %v2996 = vmul.f32 %v2078, 1.442695
    %v2997 = vpow.pop %v2996
    %v2998 = vmul.f32 %v2213, 1.442695
    %v2999 = vpow.pop %v2998
    %v3000 = vmul.f32 %v2215, 1.442695
    %v3001 = vpow.pop %v3000
    %v3002 = vmul.f32 %v2350, 1.442695
    %v3003 = vpow.pop %v3002
    %v3004 = vmul.f32 %v2352, 1.442695
    %v3005 = vpow.pop %v3004
    %v3006 = vmul.f32 %v301, 1.442695
    %v3007 = vpow.pop %v3006
    %v3008 = vmul.f32 %v303, 1.442695
    %v3009 = vpow.pop %v3008
    %v3010 = vmul.f32 %v438, 1.442695
    %v3011 = vpow.pop %v3010
    %v3012 = vmul.f32 %v440, 1.442695
    %v3013 = vpow.pop %v3012
    %v3014 = vmul.f32 %v575, 1.442695
    %v3015 = vpow.pop %v3014
    %v3016 = vmul.f32 %v577, 1.442695
    %v3017 = vpow.pop %v3016
    %v3018 = vmul.f32 %v712, 1.442695
    %v3019 = vpow.pop %v3018
    %v3020 = vmul.f32 %v714, 1.442695
    %v3021 = vpow.pop %v3020
    %v3022 = vmul.f32 %v849, 1.442695
    %v3023 = vpow.pop %v3022
    %v3024 = vmul.f32 %v851, 1.442695
    %v3025 = vpow.pop %v3024
    %v3026 = vmul.f32 %v986, 1.442695
    %v3027 = vpow.pop %v3026
    %v3028 = vmul.f32 %v988, 1.442695
    %v3029 = vpow.pop %v3028
    %v3030 = vmul.f32 %v1123, 1.442695
    %v3031 = vpow.pop %v3030
    %v3032 = vmul.f32 %v1125, 1.442695
    %v3033 = vpow.pop %v3032
    %v3034 = vmul.f32 %v1260, 1.442695
    %v3035 = vpow.pop %v3034
    %v3036 = vmul.f32 %v1262, 1.442695
    %v3037 = vpow.pop %v3036
    %v3038 = vmul.f32 %v1397, 1.442695
    %v3039 = vpow.pop %v3038
    %v3040 = vmul.f32 %v1399, 1.442695
    %v3041 = vpow.pop %v3040
    %v3042 = vmul.f32 %v1534, 1.442695
    %v3043 = vpow.pop %v3042
    %v3044 = vmul.f32 %v1536, 1.442695
    %v3045 = vpow.pop %v3044
    %v3046 = vmul.f32 %v1671, 1.442695
    %v3047 = vpow.pop %v3046
    %v3048 = vmul.f32 %v1673, 1.442695
    %v3049 = vpow.pop %v3048
    %v3050 = vmul.f32 %v1808, 1.442695
    %v3051 = vpow.pop %v3050
    %v3052 = vmul.f32 %v1810, 1.442695
    %v3053 = vpow.pop %v3052
    %v3054 = vmul.f32 %v1945, 1.442695
    %v3055 = vpow.pop %v3054
    %v3056 = vmul.f32 %v1947, 1.442695
    %v3057 = vpow.pop %v3056
    %v3058 = vmul.f32 %v2082, 1.442695
    %v3059 = vpow.pop %v3058
    %v3060 = vmul.f32 %v2084, 1.442695
    %v3061 = vpow.pop %v3060
    %v3062 = vmul.f32 %v2219, 1.442695
    %v3063 = vpow.pop %v3062
    %v3064 = vmul.f32 %v2221, 1.442695
    %v3065 = vpow.pop %v3064
    %v3066 = vmul.f32 %v2356, 1.442695
    %v3067 = vpow.pop %v3066
    %v3068 = vmul.f32 %v2358, 1.442695
    %v3069 = vpow.pop %v3068
    %v3070 = vmul.f32 %v307, 1.442695
    %v3071 = vpow.pop %v3070
    %v3072 = vmul.f32 %v309, 1.442695
    %v3073 = vpow.pop %v3072
    %v3074 = vmul.f32 %v444, 1.442695
    %v3075 = vpow.pop %v3074
    %v3076 = vmul.f32 %v446, 1.442695
    %v3077 = vpow.pop %v3076
    %v3078 = vmul.f32 %v581, 1.442695
    %v3079 = vpow.pop %v3078
    %v3080 = vmul.f32 %v583, 1.442695
    %v3081 = vpow.pop %v3080
    %v3082 = vmul.f32 %v718, 1.442695
    %v3083 = vpow.pop %v3082
    %v3084 = vmul.f32 %v720, 1.442695
    %v3085 = vpow.pop %v3084
    %v3086 = vmul.f32 %v855, 1.442695
    %v3087 = vpow.pop %v3086
    %v3088 = vmul.f32 %v857, 1.442695
    %v3089 = vpow.pop %v3088
    %v3090 = vmul.f32 %v992, 1.442695
    %v3091 = vpow.pop %v3090
    %v3092 = vmul.f32 %v994, 1.442695
    %v3093 = vpow.pop %v3092
    %v3094 = vmul.f32 %v1129, 1.442695
    %v3095 = vpow.pop %v3094
    %v3096 = vmul.f32 %v1131, 1.442695
    %v3097 = vpow.pop %v3096
    %v3098 = vmul.f32 %v1266, 1.442695
    %v3099 = vpow.pop %v3098
    %v3100 = vmul.f32 %v1268, 1.442695
    %v3101 = vpow.pop %v3100
    %v3102 = vmul.f32 %v1403, 1.442695
    %v3103 = vpow.pop %v3102
    %v3104 = vmul.f32 %v1405, 1.442695
    %v3105 = vpow.pop %v3104
    %v3106 = vmul.f32 %v1540, 1.442695
    %v3107 = vpow.pop %v3106
    %v3108 = vmul.f32 %v1542, 1.442695
    %v3109 = vpow.pop %v3108
    %v3110 = vmul.f32 %v1677, 1.442695
    %v3111 = vpow.pop %v3110
    %v3112 = vmul.f32 %v1679, 1.442695
    %v3113 = vpow.pop %v3112
    %v3114 = vmul.f32 %v1814, 1.442695
    %v3115 = vpow.pop %v3114
    %v3116 = vmul.f32 %v1816, 1.442695
    %v3117 = vpow.pop %v3116
    %v3118 = vmul.f32 %v1951, 1.442695
    %v3119 = vpow.pop %v3118
    %v3120 = vmul.f32 %v1953, 1.442695
    %v3121 = vpow.pop %v3120
    %v3122 = vmul.f32 %v2088, 1.442695
    %v3123 = vpow.pop %v3122
    %v3124 = vmul.f32 %v2090, 1.442695
    %v3125 = vpow.pop %v3124
    %v3126 = vmul.f32 %v2225, 1.442695
    %v3127 = vpow.pop %v3126
    %v3128 = vmul.f32 %v2227, 1.442695
    %v3129 = vpow.pop %v3128
    %v3130 = vmul.f32 %v2362, 1.442695
    %v3131 = vpow.pop %v3130
    %v3132 = vmul.f32 %v2364, 1.442695
    %v3133 = vpow.pop %v3132
    %v3134 = vld [vmem:[%s1] sm:$0xff]
    %v3135 = vld [vmem:[%s1 + $0x8] sm:$0xff]
    %v3136 = vld [vmem:[%s1 + $0x10] sm:$0xff]
    %vm3137 = vcmask 785408
    %v3139 = vsel %vm3137, %v3134, 0
    %v3142 = vsel %vm3137, %v3135, 0
    %v3145 = vsel %vm3137, %v3136, 0
    %3147 = vmatprep.subr.mxu0 0.0
    %3148 = vmatpush1.msra.mxu0 0.0
    %3149 = vmatprep.subr.mxu0 0.0
    %3150 = vmatpush1.msra.mxu0 0.0
    %3151 = vmatprep.subr.mxu0 0.0
    %3152 = vmatpush1.msra.mxu0 0.0
    %3153 = vmatprep.subr.mxu0 0.0
    %3154 = vmatpush1.msra.mxu0 0.0
    %3155 = vmatprep.subr.mxu0 %v3073
    %3156 = vmatpush1.msra.mxu0 %v3071
    %3157 = vmatprep.subr.mxu0 %v3009
    %3158 = vmatpush1.msra.mxu0 %v3007
    %3159 = vmatprep.subr.mxu0 %v2945
    %3160 = vmatpush1.msra.mxu0 %v2943
    %3161 = vmatprep.subr.mxu0 %v2881
    %3162 = vmatpush1.msra.mxu0 %v2879
    %3163 = vmatprep.subr.mxu0 %v2817
    %3164 = vmatpush1.msra.mxu0 %v2815
    %3165 = vmatprep.subr.mxu0 %v2753
    %3166 = vmatpush1.msra.mxu0 %v2751
    %3167 = vmatprep.subr.mxu0 %v2689
    %3168 = vmatpush1.msra.mxu0 %v2687
    %3169 = vmatprep.subr.mxu0 %v2625
    %3170 = vmatpush1.msra.mxu0 %v2623
    %3171 = vmatprep.subr.mxu0 %v2561
    %3172 = vmatpush1.msra.mxu0 %v2559
    %3173 = vmatprep.subr.mxu0 %v2497
    %3174 = vmatpush1.msra.mxu0 %v2495
    %3175 = vmatprep.subr.mxu0 %v2433
    %3176 = vmatpush1.msra.mxu0 %v2431
    %3177 = vmatprep.subr.mxu0 %v2369
    %3178 = vmatpush1.msra.mxu0 %v2367
    %3179 = vmatprep.subr.mxu0 0.0
    %3180 = vmatpush2.msra.mxu0 0.0
    %3181 = vmatprep.subr.mxu0 0.0
    %3182 = vmatpush2.msra.mxu0 0.0
    %3183 = vmatprep.subr.mxu0 0.0
    %3184 = vmatpush2.msra.mxu0 0.0
    %3185 = vmatprep.subr.mxu0 0.0
    %3186 = vmatpush2.msra.mxu0 0.0
    %3187 = vmatprep.subr.mxu0 0.0
    %3188 = vmatpush2.msra.mxu0 0.0
    %3189 = vmatprep.subr.mxu0 0.0
    %3190 = vmatpush2.msra.mxu0 0.0
    %3191 = vmatprep.subr.mxu0 0.0
    %3192 = vmatpush2.msra.mxu0 0.0
    %3193 = vmatprep.subr.mxu0 0.0
    %3194 = vmatpush2.msra.mxu0 0.0
    %3195 = vmatprep.subr.mxu0 0.0
    %3196 = vmatpush2.msra.mxu0 0.0
    %3197 = vmatprep.subr.mxu0 0.0
    %3198 = vmatpush2.msra.mxu0 0.0
    %3199 = vmatprep.subr.mxu0 0.0
    %3200 = vmatpush2.msra.mxu0 0.0
    %3201 = vmatprep.subr.mxu0 0.0
    %3202 = vmatpush2.msra.mxu0 0.0
    %3203 = vmatprep.subr.mxu0 0.0
    %3204 = vmatpush2.msra.mxu0 0.0
    %3205 = vmatprep.subr.mxu0 0.0
    %3206 = vmatpush2.msra.mxu0 0.0
    %3207 = vmatprep.subr.mxu0 0.0
    %3208 = vmatpush2.msra.mxu0 0.0
    %3209 = vmatprep.subr.mxu0 0.0
    %3210 = vmatpush2.msra.mxu0 0.0
    %3211 = vmatprep.mubr.f32.mxu0 0.0
    %3212 = vmatmul.mubr.f32.gmra.mxu0 %v3139
    %v3213 = vpop.f32.mrf.mxu0
    %v3214 = vadd.f32 0.0, %v3213
    %v3215 = vpop.f32.mrf.mxu0
    %v3216 = vadd.f32 0.0, %v3215
    %3217 = vmatprep.mubr.f32.mxu0 0.0
    %3218 = vmatmul.mubr.f32.gmra.mxu0 %v3142
    %v3219 = vpop.f32.mrf.mxu0
    %v3220 = vadd.f32 0.0, %v3219
    %v3221 = vpop.f32.mrf.mxu0
    %v3222 = vadd.f32 0.0, %v3221
    %3223 = vmatprep.mubr.f32.mxu0 0.0
    %3224 = vmatmul.mubr.f32.gmra.mxu0 %v3145
    %v3225 = vpop.f32.mrf.mxu0
    %v3226 = vadd.f32 0.0, %v3225
    %v3227 = vpop.f32.mrf.mxu0
    %v3228 = vadd.f32 0.0, %v3227
    %3229 = vdwg.mxu0
    %3230 = vmatprep.subr.mxu0 0.0
    %3231 = vmatpush1.msra.mxu0 0.0
    %3232 = vmatprep.subr.mxu0 0.0
    %3233 = vmatpush1.msra.mxu0 0.0
    %3234 = vmatprep.subr.mxu0 0.0
    %3235 = vmatpush1.msra.mxu0 0.0
    %3236 = vmatprep.subr.mxu0 0.0
    %3237 = vmatpush1.msra.mxu0 0.0
    %3238 = vmatprep.subr.mxu0 %v3077
    %3239 = vmatpush1.msra.mxu0 %v3075
    %3240 = vmatprep.subr.mxu0 %v3013
    %3241 = vmatpush1.msra.mxu0 %v3011
    %3242 = vmatprep.subr.mxu0 %v2949
    %3243 = vmatpush1.msra.mxu0 %v2947
    %3244 = vmatprep.subr.mxu0 %v2885
    %3245 = vmatpush1.msra.mxu0 %v2883
    %3246 = vmatprep.subr.mxu0 %v2821
    %3247 = vmatpush1.msra.mxu0 %v2819
    %3248 = vmatprep.subr.mxu0 %v2757
    %3249 = vmatpush1.msra.mxu0 %v2755
    %3250 = vmatprep.subr.mxu0 %v2693
    %3251 = vmatpush1.msra.mxu0 %v2691
    %3252 = vmatprep.subr.mxu0 %v2629
    %3253 = vmatpush1.msra.mxu0 %v2627
    %3254 = vmatprep.subr.mxu0 %v2565
    %3255 = vmatpush1.msra.mxu0 %v2563
    %3256 = vmatprep.subr.mxu0 %v2501
    %3257 = vmatpush1.msra.mxu0 %v2499
    %3258 = vmatprep.subr.mxu0 %v2437
    %3259 = vmatpush1.msra.mxu0 %v2435
    %3260 = vmatprep.subr.mxu0 %v2373
    %3261 = vmatpush1.msra.mxu0 %v2371
    %3262 = vmatprep.subr.mxu0 0.0
    %3263 = vmatpush2.msra.mxu0 0.0
    %3264 = vmatprep.subr.mxu0 0.0
    %3265 = vmatpush2.msra.mxu0 0.0
    %3266 = vmatprep.subr.mxu0 0.0
    %3267 = vmatpush2.msra.mxu0 0.0
    %3268 = vmatprep.subr.mxu0 0.0
    %3269 = vmatpush2.msra.mxu0 0.0
    %3270 = vmatprep.subr.mxu0 0.0
    %3271 = vmatpush2.msra.mxu0 0.0
    %3272 = vmatprep.subr.mxu0 0.0
    %3273 = vmatpush2.msra.mxu0 0.0
    %3274 = vmatprep.subr.mxu0 0.0
    %3275 = vmatpush2.msra.mxu0 0.0
    %3276 = vmatprep.subr.mxu0 0.0
    %3277 = vmatpush2.msra.mxu0 0.0
    %3278 = vmatprep.subr.mxu0 0.0
    %3279 = vmatpush2.msra.mxu0 0.0
    %3280 = vmatprep.subr.mxu0 0.0
    %3281 = vmatpush2.msra.mxu0 0.0
    %3282 = vmatprep.subr.mxu0 0.0
    %3283 = vmatpush2.msra.mxu0 0.0
    %3284 = vmatprep.subr.mxu0 0.0
    %3285 = vmatpush2.msra.mxu0 0.0
    %3286 = vmatprep.subr.mxu0 0.0
    %3287 = vmatpush2.msra.mxu0 0.0
    %3288 = vmatprep.subr.mxu0 0.0
    %3289 = vmatpush2.msra.mxu0 0.0
    %3290 = vmatprep.subr.mxu0 0.0
    %3291 = vmatpush2.msra.mxu0 0.0
    %3292 = vmatprep.subr.mxu0 0.0
    %3293 = vmatpush2.msra.mxu0 0.0
    %3294 = vmatprep.mubr.f32.mxu0 0.0
    %3295 = vmatmul.mubr.f32.gmra.mxu0 %v3139
    %v3296 = vpop.f32.mrf.mxu0
    %v3297 = vadd.f32 0.0, %v3296
    %v3298 = vpop.f32.mrf.mxu0
    %v3299 = vadd.f32 0.0, %v3298
    %3300 = vmatprep.mubr.f32.mxu0 0.0
    %3301 = vmatmul.mubr.f32.gmra.mxu0 %v3142
    %v3302 = vpop.f32.mrf.mxu0
    %v3303 = vadd.f32 0.0, %v3302
    %v3304 = vpop.f32.mrf.mxu0
    %v3305 = vadd.f32 0.0, %v3304
    %3306 = vmatprep.mubr.f32.mxu0 0.0
    %3307 = vmatmul.mubr.f32.gmra.mxu0 %v3145
    %v3308 = vpop.f32.mrf.mxu0
    %v3309 = vadd.f32 0.0, %v3308
    %v3310 = vpop.f32.mrf.mxu0
    %v3311 = vadd.f32 0.0, %v3310
    %3312 = vdwg.mxu0
    %3313 = vmatprep.subr.mxu0 0.0
    %3314 = vmatpush1.msra.mxu0 0.0
    %3315 = vmatprep.subr.mxu0 0.0
    %3316 = vmatpush1.msra.mxu0 0.0
    %3317 = vmatprep.subr.mxu0 0.0
    %3318 = vmatpush1.msra.mxu0 0.0
    %3319 = vmatprep.subr.mxu0 0.0
    %3320 = vmatpush1.msra.mxu0 0.0
    %3321 = vmatprep.subr.mxu0 %v3081
    %3322 = vmatpush1.msra.mxu0 %v3079
    %3323 = vmatprep.subr.mxu0 %v3017
    %3324 = vmatpush1.msra.mxu0 %v3015
    %3325 = vmatprep.subr.mxu0 %v2953
    %3326 = vmatpush1.msra.mxu0 %v2951
    %3327 = vmatprep.subr.mxu0 %v2889
    %3328 = vmatpush1.msra.mxu0 %v2887
    %3329 = vmatprep.subr.mxu0 %v2825
    %3330 = vmatpush1.msra.mxu0 %v2823
    %3331 = vmatprep.subr.mxu0 %v2761
    %3332 = vmatpush1.msra.mxu0 %v2759
    %3333 = vmatprep.subr.mxu0 %v2697
    %3334 = vmatpush1.msra.mxu0 %v2695
    %3335 = vmatprep.subr.mxu0 %v2633
    %3336 = vmatpush1.msra.mxu0 %v2631
    %3337 = vmatprep.subr.mxu0 %v2569
    %3338 = vmatpush1.msra.mxu0 %v2567
    %3339 = vmatprep.subr.mxu0 %v2505
    %3340 = vmatpush1.msra.mxu0 %v2503
    %3341 = vmatprep.subr.mxu0 %v2441
    %3342 = vmatpush1.msra.mxu0 %v2439
    %3343 = vmatprep.subr.mxu0 %v2377
    %3344 = vmatpush1.msra.mxu0 %v2375
    %3345 = vmatprep.subr.mxu0 0.0
    %3346 = vmatpush2.msra.mxu0 0.0
    %3347 = vmatprep.subr.mxu0 0.0
    %3348 = vmatpush2.msra.mxu0 0.0
    %3349 = vmatprep.subr.mxu0 0.0
    %3350 = vmatpush2.msra.mxu0 0.0
    %3351 = vmatprep.subr.mxu0 0.0
    %3352 = vmatpush2.msra.mxu0 0.0
    %3353 = vmatprep.subr.mxu0 0.0
    %3354 = vmatpush2.msra.mxu0 0.0
    %3355 = vmatprep.subr.mxu0 0.0
    %3356 = vmatpush2.msra.mxu0 0.0
    %3357 = vmatprep.subr.mxu0 0.0
    %3358 = vmatpush2.msra.mxu0 0.0
    %3359 = vmatprep.subr.mxu0 0.0
    %3360 = vmatpush2.msra.mxu0 0.0
    %3361 = vmatprep.subr.mxu0 0.0
    %3362 = vmatpush2.msra.mxu0 0.0
    %3363 = vmatprep.subr.mxu0 0.0
    %3364 = vmatpush2.msra.mxu0 0.0
    %3365 = vmatprep.subr.mxu0 0.0
    %3366 = vmatpush2.msra.mxu0 0.0
    %3367 = vmatprep.subr.mxu0 0.0
    %3368 = vmatpush2.msra.mxu0 0.0
    %3369 = vmatprep.subr.mxu0 0.0
    %3370 = vmatpush2.msra.mxu0 0.0
    %3371 = vmatprep.subr.mxu0 0.0
    %3372 = vmatpush2.msra.mxu0 0.0
    %3373 = vmatprep.subr.mxu0 0.0
    %3374 = vmatpush2.msra.mxu0 0.0
    %3375 = vmatprep.subr.mxu0 0.0
    %3376 = vmatpush2.msra.mxu0 0.0
    %3377 = vmatprep.mubr.f32.mxu0 0.0
    %3378 = vmatmul.mubr.f32.gmra.mxu0 %v3139
    %v3379 = vpop.f32.mrf.mxu0
    %v3380 = vadd.f32 0.0, %v3379
    %v3381 = vpop.f32.mrf.mxu0
    %v3382 = vadd.f32 0.0, %v3381
    %3383 = vmatprep.mubr.f32.mxu0 0.0
    %3384 = vmatmul.mubr.f32.gmra.mxu0 %v3142
    %v3385 = vpop.f32.mrf.mxu0
    %v3386 = vadd.f32 0.0, %v3385
    %v3387 = vpop.f32.mrf.mxu0
    %v3388 = vadd.f32 0.0, %v3387
    %3389 = vmatprep.mubr.f32.mxu0 0.0
    %3390 = vmatmul.mubr.f32.gmra.mxu0 %v3145
    %v3391 = vpop.f32.mrf.mxu0
    %v3392 = vadd.f32 0.0, %v3391
    %v3393 = vpop.f32.mrf.mxu0
    %v3394 = vadd.f32 0.0, %v3393
    %3395 = vdwg.mxu0
    %3396 = vmatprep.subr.mxu0 0.0
    %3397 = vmatpush1.msra.mxu0 0.0
    %3398 = vmatprep.subr.mxu0 0.0
    %3399 = vmatpush1.msra.mxu0 0.0
    %3400 = vmatprep.subr.mxu0 0.0
    %3401 = vmatpush1.msra.mxu0 0.0
    %3402 = vmatprep.subr.mxu0 0.0
    %3403 = vmatpush1.msra.mxu0 0.0
    %3404 = vmatprep.subr.mxu0 %v3085
    %3405 = vmatpush1.msra.mxu0 %v3083
    %3406 = vmatprep.subr.mxu0 %v3021
    %3407 = vmatpush1.msra.mxu0 %v3019
    %3408 = vmatprep.subr.mxu0 %v2957
    %3409 = vmatpush1.msra.mxu0 %v2955
    %3410 = vmatprep.subr.mxu0 %v2893
    %3411 = vmatpush1.msra.mxu0 %v2891
    %3412 = vmatprep.subr.mxu0 %v2829
    %3413 = vmatpush1.msra.mxu0 %v2827
    %3414 = vmatprep.subr.mxu0 %v2765
    %3415 = vmatpush1.msra.mxu0 %v2763
    %3416 = vmatprep.subr.mxu0 %v2701
    %3417 = vmatpush1.msra.mxu0 %v2699
    %3418 = vmatprep.subr.mxu0 %v2637
    %3419 = vmatpush1.msra.mxu0 %v2635
    %3420 = vmatprep.subr.mxu0 %v2573
    %3421 = vmatpush1.msra.mxu0 %v2571
    %3422 = vmatprep.subr.mxu0 %v2509
    %3423 = vmatpush1.msra.mxu0 %v2507
    %3424 = vmatprep.subr.mxu0 %v2445
    %3425 = vmatpush1.msra.mxu0 %v2443
    %3426 = vmatprep.subr.mxu0 %v2381
    %3427 = vmatpush1.msra.mxu0 %v2379
    %3428 = vmatprep.subr.mxu0 0.0
    %3429 = vmatpush2.msra.mxu0 0.0
    %3430 = vmatprep.subr.mxu0 0.0
    %3431 = vmatpush2.msra.mxu0 0.0
    %3432 = vmatprep.subr.mxu0 0.0
    %3433 = vmatpush2.msra.mxu0 0.0
    %3434 = vmatprep.subr.mxu0 0.0
    %3435 = vmatpush2.msra.mxu0 0.0
    %3436 = vmatprep.subr.mxu0 0.0
    %3437 = vmatpush2.msra.mxu0 0.0
    %3438 = vmatprep.subr.mxu0 0.0
    %3439 = vmatpush2.msra.mxu0 0.0
    %3440 = vmatprep.subr.mxu0 0.0
    %3441 = vmatpush2.msra.mxu0 0.0
    %3442 = vmatprep.subr.mxu0 0.0
    %3443 = vmatpush2.msra.mxu0 0.0
    %3444 = vmatprep.subr.mxu0 0.0
    %3445 = vmatpush2.msra.mxu0 0.0
    %3446 = vmatprep.subr.mxu0 0.0
    %3447 = vmatpush2.msra.mxu0 0.0
    %3448 = vmatprep.subr.mxu0 0.0
    %3449 = vmatpush2.msra.mxu0 0.0
    %3450 = vmatprep.subr.mxu0 0.0
    %3451 = vmatpush2.msra.mxu0 0.0
    %3452 = vmatprep.subr.mxu0 0.0
    %3453 = vmatpush2.msra.mxu0 0.0
    %3454 = vmatprep.subr.mxu0 0.0
    %3455 = vmatpush2.msra.mxu0 0.0
    %3456 = vmatprep.subr.mxu0 0.0
    %3457 = vmatpush2.msra.mxu0 0.0
    %3458 = vmatprep.subr.mxu0 0.0
    %3459 = vmatpush2.msra.mxu0 0.0
    %3460 = vmatprep.mubr.f32.mxu0 0.0
    %3461 = vmatmul.mubr.f32.gmra.mxu0 %v3139
    %v3462 = vpop.f32.mrf.mxu0
    %v3463 = vadd.f32 0.0, %v3462
    %v3464 = vpop.f32.mrf.mxu0
    %v3465 = vadd.f32 0.0, %v3464
    %3466 = vmatprep.mubr.f32.mxu0 0.0
    %3467 = vmatmul.mubr.f32.gmra.mxu0 %v3142
    %v3468 = vpop.f32.mrf.mxu0
    %v3469 = vadd.f32 0.0, %v3468
    %v3470 = vpop.f32.mrf.mxu0
    %v3471 = vadd.f32 0.0, %v3470
    %3472 = vmatprep.mubr.f32.mxu0 0.0
    %3473 = vmatmul.mubr.f32.gmra.mxu0 %v3145
    %v3474 = vpop.f32.mrf.mxu0
    %v3475 = vadd.f32 0.0, %v3474
    %v3476 = vpop.f32.mrf.mxu0
    %v3477 = vadd.f32 0.0, %v3476
    %3478 = vdwg.mxu0
    %3479 = vmatprep.subr.mxu0 0.0
    %3480 = vmatpush1.msra.mxu0 0.0
    %3481 = vmatprep.subr.mxu0 0.0
    %3482 = vmatpush1.msra.mxu0 0.0
    %3483 = vmatprep.subr.mxu0 0.0
    %3484 = vmatpush1.msra.mxu0 0.0
    %3485 = vmatprep.subr.mxu0 0.0
    %3486 = vmatpush1.msra.mxu0 0.0
    %3487 = vmatprep.subr.mxu0 %v3089
    %3488 = vmatpush1.msra.mxu0 %v3087
    %3489 = vmatprep.subr.mxu0 %v3025
    %3490 = vmatpush1.msra.mxu0 %v3023
    %3491 = vmatprep.subr.mxu0 %v2961
    %3492 = vmatpush1.msra.mxu0 %v2959
    %3493 = vmatprep.subr.mxu0 %v2897
    %3494 = vmatpush1.msra.mxu0 %v2895
    %3495 = vmatprep.subr.mxu0 %v2833
    %3496 = vmatpush1.msra.mxu0 %v2831
    %3497 = vmatprep.subr.mxu0 %v2769
    %3498 = vmatpush1.msra.mxu0 %v2767
    %3499 = vmatprep.subr.mxu0 %v2705
    %3500 = vmatpush1.msra.mxu0 %v2703
    %3501 = vmatprep.subr.mxu0 %v2641
    %3502 = vmatpush1.msra.mxu0 %v2639
    %3503 = vmatprep.subr.mxu0 %v2577
    %3504 = vmatpush1.msra.mxu0 %v2575
    %3505 = vmatprep.subr.mxu0 %v2513
    %3506 = vmatpush1.msra.mxu0 %v2511
    %3507 = vmatprep.subr.mxu0 %v2449
    %3508 = vmatpush1.msra.mxu0 %v2447
    %3509 = vmatprep.subr.mxu0 %v2385
    %3510 = vmatpush1.msra.mxu0 %v2383
    %3511 = vmatprep.subr.mxu0 0.0
    %3512 = vmatpush2.msra.mxu0 0.0
    %3513 = vmatprep.subr.mxu0 0.0
    %3514 = vmatpush2.msra.mxu0 0.0
    %3515 = vmatprep.subr.mxu0 0.0
    %3516 = vmatpush2.msra.mxu0 0.0
    %3517 = vmatprep.subr.mxu0 0.0
    %3518 = vmatpush2.msra.mxu0 0.0
    %3519 = vmatprep.subr.mxu0 0.0
    %3520 = vmatpush2.msra.mxu0 0.0
    %3521 = vmatprep.subr.mxu0 0.0
    %3522 = vmatpush2.msra.mxu0 0.0
    %3523 = vmatprep.subr.mxu0 0.0
    %3524 = vmatpush2.msra.mxu0 0.0
    %3525 = vmatprep.subr.mxu0 0.0
    %3526 = vmatpush2.msra.mxu0 0.0
    %3527 = vmatprep.subr.mxu0 0.0
    %3528 = vmatpush2.msra.mxu0 0.0
    %3529 = vmatprep.subr.mxu0 0.0
    %3530 = vmatpush2.msra.mxu0 0.0
    %3531 = vmatprep.subr.mxu0 0.0
    %3532 = vmatpush2.msra.mxu0 0.0
    %3533 = vmatprep.subr.mxu0 0.0
    %3534 = vmatpush2.msra.mxu0 0.0
    %3535 = vmatprep.subr.mxu0 0.0
    %3536 = vmatpush2.msra.mxu0 0.0
    %3537 = vmatprep.subr.mxu0 0.0
    %3538 = vmatpush2.msra.mxu0 0.0
    %3539 = vmatprep.subr.mxu0 0.0
    %3540 = vmatpush2.msra.mxu0 0.0
    %3541 = vmatprep.subr.mxu0 0.0
    %3542 = vmatpush2.msra.mxu0 0.0
    %3543 = vmatprep.mubr.f32.mxu0 0.0
    %3544 = vmatmul.mubr.f32.gmra.mxu0 %v3139
    %v3545 = vpop.f32.mrf.mxu0
    %v3546 = vadd.f32 0.0, %v3545
    %v3547 = vpop.f32.mrf.mxu0
    %v3548 = vadd.f32 0.0, %v3547
    %3549 = vmatprep.mubr.f32.mxu0 0.0
    %3550 = vmatmul.mubr.f32.gmra.mxu0 %v3142
    %v3551 = vpop.f32.mrf.mxu0
    %v3552 = vadd.f32 0.0, %v3551
    %v3553 = vpop.f32.mrf.mxu0
    %v3554 = vadd.f32 0.0, %v3553
    %3555 = vmatprep.mubr.f32.mxu0 0.0
    %3556 = vmatmul.mubr.f32.gmra.mxu0 %v3145
    %v3557 = vpop.f32.mrf.mxu0
    %v3558 = vadd.f32 0.0, %v3557
    %v3559 = vpop.f32.mrf.mxu0
    %v3560 = vadd.f32 0.0, %v3559
    %3561 = vdwg.mxu0
    %3562 = vmatprep.subr.mxu0 0.0
    %3563 = vmatpush1.msra.mxu0 0.0
    %3564 = vmatprep.subr.mxu0 0.0
    %3565 = vmatpush1.msra.mxu0 0.0
    %3566 = vmatprep.subr.mxu0 0.0
    %3567 = vmatpush1.msra.mxu0 0.0
    %3568 = vmatprep.subr.mxu0 0.0
    %3569 = vmatpush1.msra.mxu0 0.0
    %3570 = vmatprep.subr.mxu0 %v3093
    %3571 = vmatpush1.msra.mxu0 %v3091
    %3572 = vmatprep.subr.mxu0 %v3029
    %3573 = vmatpush1.msra.mxu0 %v3027
    %3574 = vmatprep.subr.mxu0 %v2965
    %3575 = vmatpush1.msra.mxu0 %v2963
    %3576 = vmatprep.subr.mxu0 %v2901
    %3577 = vmatpush1.msra.mxu0 %v2899
    %3578 = vmatprep.subr.mxu0 %v2837
    %3579 = vmatpush1.msra.mxu0 %v2835
    %3580 = vmatprep.subr.mxu0 %v2773
    %3581 = vmatpush1.msra.mxu0 %v2771
    %3582 = vmatprep.subr.mxu0 %v2709
    %3583 = vmatpush1.msra.mxu0 %v2707
    %3584 = vmatprep.subr.mxu0 %v2645
    %3585 = vmatpush1.msra.mxu0 %v2643
    %3586 = vmatprep.subr.mxu0 %v2581
    %3587 = vmatpush1.msra.mxu0 %v2579
    %3588 = vmatprep.subr.mxu0 %v2517
    %3589 = vmatpush1.msra.mxu0 %v2515
    %3590 = vmatprep.subr.mxu0 %v2453
    %3591 = vmatpush1.msra.mxu0 %v2451
    %3592 = vmatprep.subr.mxu0 %v2389
    %3593 = vmatpush1.msra.mxu0 %v2387
    %3594 = vmatprep.subr.mxu0 0.0
    %3595 = vmatpush2.msra.mxu0 0.0
    %3596 = vmatprep.subr.mxu0 0.0
    %3597 = vmatpush2.msra.mxu0 0.0
    %3598 = vmatprep.subr.mxu0 0.0
    %3599 = vmatpush2.msra.mxu0 0.0
    %3600 = vmatprep.subr.mxu0 0.0
    %3601 = vmatpush2.msra.mxu0 0.0
    %3602 = vmatprep.subr.mxu0 0.0
    %3603 = vmatpush2.msra.mxu0 0.0
    %3604 = vmatprep.subr.mxu0 0.0
    %3605 = vmatpush2.msra.mxu0 0.0
    %3606 = vmatprep.subr.mxu0 0.0
    %3607 = vmatpush2.msra.mxu0 0.0
    %3608 = vmatprep.subr.mxu0 0.0
    %3609 = vmatpush2.msra.mxu0 0.0
    %3610 = vmatprep.subr.mxu0 0.0
    %3611 = vmatpush2.msra.mxu0 0.0
    %3612 = vmatprep.subr.mxu0 0.0
    %3613 = vmatpush2.msra.mxu0 0.0
    %3614 = vmatprep.subr.mxu0 0.0
    %3615 = vmatpush2.msra.mxu0 0.0
    %3616 = vmatprep.subr.mxu0 0.0
    %3617 = vmatpush2.msra.mxu0 0.0
    %3618 = vmatprep.subr.mxu0 0.0
    %3619 = vmatpush2.msra.mxu0 0.0
    %3620 = vmatprep.subr.mxu0 0.0
    %3621 = vmatpush2.msra.mxu0 0.0
    %3622 = vmatprep.subr.mxu0 0.0
    %3623 = vmatpush2.msra.mxu0 0.0
    %3624 = vmatprep.subr.mxu0 0.0
    %3625 = vmatpush2.msra.mxu0 0.0
    %3626 = vmatprep.mubr.f32.mxu0 0.0
    %3627 = vmatmul.mubr.f32.gmra.mxu0 %v3139
    %v3628 = vpop.f32.mrf.mxu0
    %v3629 = vadd.f32 0.0, %v3628
    %v3630 = vpop.f32.mrf.mxu0
    %v3631 = vadd.f32 0.0, %v3630
    %3632 = vmatprep.mubr.f32.mxu0 0.0
    %3633 = vmatmul.mubr.f32.gmra.mxu0 %v3142
    %v3634 = vpop.f32.mrf.mxu0
    %v3635 = vadd.f32 0.0, %v3634
    %v3636 = vpop.f32.mrf.mxu0
    %v3637 = vadd.f32 0.0, %v3636
    %3638 = vmatprep.mubr.f32.mxu0 0.0
    %3639 = vmatmul.mubr.f32.gmra.mxu0 %v3145
    %v3640 = vpop.f32.mrf.mxu0
    %v3641 = vadd.f32 0.0, %v3640
    %v3642 = vpop.f32.mrf.mxu0
    %v3643 = vadd.f32 0.0, %v3642
    %3644 = vdwg.mxu0
    %3645 = vmatprep.subr.mxu0 0.0
    %3646 = vmatpush1.msra.mxu0 0.0
    %3647 = vmatprep.subr.mxu0 0.0
    %3648 = vmatpush1.msra.mxu0 0.0
    %3649 = vmatprep.subr.mxu0 0.0
    %3650 = vmatpush1.msra.mxu0 0.0
    %3651 = vmatprep.subr.mxu0 0.0
    %3652 = vmatpush1.msra.mxu0 0.0
    %3653 = vmatprep.subr.mxu0 %v3097
    %3654 = vmatpush1.msra.mxu0 %v3095
    %3655 = vmatprep.subr.mxu0 %v3033
    %3656 = vmatpush1.msra.mxu0 %v3031
    %3657 = vmatprep.subr.mxu0 %v2969
    %3658 = vmatpush1.msra.mxu0 %v2967
    %3659 = vmatprep.subr.mxu0 %v2905
    %3660 = vmatpush1.msra.mxu0 %v2903
    %3661 = vmatprep.subr.mxu0 %v2841
    %3662 = vmatpush1.msra.mxu0 %v2839
    %3663 = vmatprep.subr.mxu0 %v2777
    %3664 = vmatpush1.msra.mxu0 %v2775
    %3665 = vmatprep.subr.mxu0 %v2713
    %3666 = vmatpush1.msra.mxu0 %v2711
    %3667 = vmatprep.subr.mxu0 %v2649
    %3668 = vmatpush1.msra.mxu0 %v2647
    %3669 = vmatprep.subr.mxu0 %v2585
    %3670 = vmatpush1.msra.mxu0 %v2583
    %3671 = vmatprep.subr.mxu0 %v2521
    %3672 = vmatpush1.msra.mxu0 %v2519
    %3673 = vmatprep.subr.mxu0 %v2457
    %3674 = vmatpush1.msra.mxu0 %v2455
    %3675 = vmatprep.subr.mxu0 %v2393
    %3676 = vmatpush1.msra.mxu0 %v2391
    %3677 = vmatprep.subr.mxu0 0.0
    %3678 = vmatpush2.msra.mxu0 0.0
    %3679 = vmatprep.subr.mxu0 0.0
    %3680 = vmatpush2.msra.mxu0 0.0
    %3681 = vmatprep.subr.mxu0 0.0
    %3682 = vmatpush2.msra.mxu0 0.0
    %3683 = vmatprep.subr.mxu0 0.0
    %3684 = vmatpush2.msra.mxu0 0.0
    %3685 = vmatprep.subr.mxu0 0.0
    %3686 = vmatpush2.msra.mxu0 0.0
    %3687 = vmatprep.subr.mxu0 0.0
    %3688 = vmatpush2.msra.mxu0 0.0
    %3689 = vmatprep.subr.mxu0 0.0
    %3690 = vmatpush2.msra.mxu0 0.0
    %3691 = vmatprep.subr.mxu0 0.0
    %3692 = vmatpush2.msra.mxu0 0.0
    %3693 = vmatprep.subr.mxu0 0.0
    %3694 = vmatpush2.msra.mxu0 0.0
    %3695 = vmatprep.subr.mxu0 0.0
    %3696 = vmatpush2.msra.mxu0 0.0
    %3697 = vmatprep.subr.mxu0 0.0
    %3698 = vmatpush2.msra.mxu0 0.0
    %3699 = vmatprep.subr.mxu0 0.0
    %3700 = vmatpush2.msra.mxu0 0.0
    %3701 = vmatprep.subr.mxu0 0.0
    %3702 = vmatpush2.msra.mxu0 0.0
    %3703 = vmatprep.subr.mxu0 0.0
    %3704 = vmatpush2.msra.mxu0 0.0
    %3705 = vmatprep.subr.mxu0 0.0
    %3706 = vmatpush2.msra.mxu0 0.0
    %3707 = vmatprep.subr.mxu0 0.0
    %3708 = vmatpush2.msra.mxu0 0.0
    %3709 = vmatprep.mubr.f32.mxu0 0.0
    %3710 = vmatmul.mubr.f32.gmra.mxu0 %v3139
    %v3711 = vpop.f32.mrf.mxu0
    %v3712 = vadd.f32 0.0, %v3711
    %v3713 = vpop.f32.mrf.mxu0
    %v3714 = vadd.f32 0.0, %v3713
    %3715 = vmatprep.mubr.f32.mxu0 0.0
    %3716 = vmatmul.mubr.f32.gmra.mxu0 %v3142
    %v3717 = vpop.f32.mrf.mxu0
    %v3718 = vadd.f32 0.0, %v3717
    %v3719 = vpop.f32.mrf.mxu0
    %v3720 = vadd.f32 0.0, %v3719
    %3721 = vmatprep.mubr.f32.mxu0 0.0
    %3722 = vmatmul.mubr.f32.gmra.mxu0 %v3145
    %v3723 = vpop.f32.mrf.mxu0
    %v3724 = vadd.f32 0.0, %v3723
    %v3725 = vpop.f32.mrf.mxu0
    %v3726 = vadd.f32 0.0, %v3725
    %3727 = vdwg.mxu0
    %3728 = vmatprep.subr.mxu0 0.0
    %3729 = vmatpush1.msra.mxu0 0.0
    %3730 = vmatprep.subr.mxu0 0.0
    %3731 = vmatpush1.msra.mxu0 0.0
    %3732 = vmatprep.subr.mxu0 0.0
    %3733 = vmatpush1.msra.mxu0 0.0
    %3734 = vmatprep.subr.mxu0 0.0
    %3735 = vmatpush1.msra.mxu0 0.0
    %3736 = vmatprep.subr.mxu0 %v3101
    %3737 = vmatpush1.msra.mxu0 %v3099
    %3738 = vmatprep.subr.mxu0 %v3037
    %3739 = vmatpush1.msra.mxu0 %v3035
    %3740 = vmatprep.subr.mxu0 %v2973
    %3741 = vmatpush1.msra.mxu0 %v2971
    %3742 = vmatprep.subr.mxu0 %v2909
    %3743 = vmatpush1.msra.mxu0 %v2907
    %3744 = vmatprep.subr.mxu0 %v2845
    %3745 = vmatpush1.msra.mxu0 %v2843
    %3746 = vmatprep.subr.mxu0 %v2781
    %3747 = vmatpush1.msra.mxu0 %v2779
    %3748 = vmatprep.subr.mxu0 %v2717
    %3749 = vmatpush1.msra.mxu0 %v2715
    %3750 = vmatprep.subr.mxu0 %v2653
    %3751 = vmatpush1.msra.mxu0 %v2651
    %3752 = vmatprep.subr.mxu0 %v2589
    %3753 = vmatpush1.msra.mxu0 %v2587
    %3754 = vmatprep.subr.mxu0 %v2525
    %3755 = vmatpush1.msra.mxu0 %v2523
    %3756 = vmatprep.subr.mxu0 %v2461
    %3757 = vmatpush1.msra.mxu0 %v2459
    %3758 = vmatprep.subr.mxu0 %v2397
    %3759 = vmatpush1.msra.mxu0 %v2395
    %3760 = vmatprep.subr.mxu0 0.0
    %3761 = vmatpush2.msra.mxu0 0.0
    %3762 = vmatprep.subr.mxu0 0.0
    %3763 = vmatpush2.msra.mxu0 0.0
    %3764 = vmatprep.subr.mxu0 0.0
    %3765 = vmatpush2.msra.mxu0 0.0
    %3766 = vmatprep.subr.mxu0 0.0
    %3767 = vmatpush2.msra.mxu0 0.0
    %3768 = vmatprep.subr.mxu0 0.0
    %3769 = vmatpush2.msra.mxu0 0.0
    %3770 = vmatprep.subr.mxu0 0.0
    %3771 = vmatpush2.msra.mxu0 0.0
    %3772 = vmatprep.subr.mxu0 0.0
    %3773 = vmatpush2.msra.mxu0 0.0
    %3774 = vmatprep.subr.mxu0 0.0
    %3775 = vmatpush2.msra.mxu0 0.0
    %3776 = vmatprep.subr.mxu0 0.0
    %3777 = vmatpush2.msra.mxu0 0.0
    %3778 = vmatprep.subr.mxu0 0.0
    %3779 = vmatpush2.msra.mxu0 0.0
    %3780 = vmatprep.subr.mxu0 0.0
    %3781 = vmatpush2.msra.mxu0 0.0
    %3782 = vmatprep.subr.mxu0 0.0
    %3783 = vmatpush2.msra.mxu0 0.0
    %3784 = vmatprep.subr.mxu0 0.0
    %3785 = vmatpush2.msra.mxu0 0.0
    %3786 = vmatprep.subr.mxu0 0.0
    %3787 = vmatpush2.msra.mxu0 0.0
    %3788 = vmatprep.subr.mxu0 0.0
    %3789 = vmatpush2.msra.mxu0 0.0
    %3790 = vmatprep.subr.mxu0 0.0
    %3791 = vmatpush2.msra.mxu0 0.0
    %3792 = vmatprep.mubr.f32.mxu0 0.0
    %3793 = vmatmul.mubr.f32.gmra.mxu0 %v3139
    %v3794 = vpop.f32.mrf.mxu0
    %v3795 = vadd.f32 0.0, %v3794
    %v3796 = vpop.f32.mrf.mxu0
    %v3797 = vadd.f32 0.0, %v3796
    %3798 = vmatprep.mubr.f32.mxu0 0.0
    %3799 = vmatmul.mubr.f32.gmra.mxu0 %v3142
    %v3800 = vpop.f32.mrf.mxu0
    %v3801 = vadd.f32 0.0, %v3800
    %v3802 = vpop.f32.mrf.mxu0
    %v3803 = vadd.f32 0.0, %v3802
    %3804 = vmatprep.mubr.f32.mxu0 0.0
    %3805 = vmatmul.mubr.f32.gmra.mxu0 %v3145
    %v3806 = vpop.f32.mrf.mxu0
    %v3807 = vadd.f32 0.0, %v3806
    %v3808 = vpop.f32.mrf.mxu0
    %v3809 = vadd.f32 0.0, %v3808
    %3810 = vdwg.mxu0
    %3811 = vmatprep.subr.mxu0 0.0
    %3812 = vmatpush1.msra.mxu0 0.0
    %3813 = vmatprep.subr.mxu0 0.0
    %3814 = vmatpush1.msra.mxu0 0.0
    %3815 = vmatprep.subr.mxu0 0.0
    %3816 = vmatpush1.msra.mxu0 0.0
    %3817 = vmatprep.subr.mxu0 0.0
    %3818 = vmatpush1.msra.mxu0 0.0
    %3819 = vmatprep.subr.mxu0 %v3105
    %3820 = vmatpush1.msra.mxu0 %v3103
    %3821 = vmatprep.subr.mxu0 %v3041
    %3822 = vmatpush1.msra.mxu0 %v3039
    %3823 = vmatprep.subr.mxu0 %v2977
    %3824 = vmatpush1.msra.mxu0 %v2975
    %3825 = vmatprep.subr.mxu0 %v2913
    %3826 = vmatpush1.msra.mxu0 %v2911
    %3827 = vmatprep.subr.mxu0 %v2849
    %3828 = vmatpush1.msra.mxu0 %v2847
    %3829 = vmatprep.subr.mxu0 %v2785
    %3830 = vmatpush1.msra.mxu0 %v2783
    %3831 = vmatprep.subr.mxu0 %v2721
    %3832 = vmatpush1.msra.mxu0 %v2719
    %3833 = vmatprep.subr.mxu0 %v2657
    %3834 = vmatpush1.msra.mxu0 %v2655
    %3835 = vmatprep.subr.mxu0 %v2593
    %3836 = vmatpush1.msra.mxu0 %v2591
    %3837 = vmatprep.subr.mxu0 %v2529
    %3838 = vmatpush1.msra.mxu0 %v2527
    %3839 = vmatprep.subr.mxu0 %v2465
    %3840 = vmatpush1.msra.mxu0 %v2463
    %3841 = vmatprep.subr.mxu0 %v2401
    %3842 = vmatpush1.msra.mxu0 %v2399
    %3843 = vmatprep.subr.mxu0 0.0
    %3844 = vmatpush2.msra.mxu0 0.0
    %3845 = vmatprep.subr.mxu0 0.0
    %3846 = vmatpush2.msra.mxu0 0.0
    %3847 = vmatprep.subr.mxu0 0.0
    %3848 = vmatpush2.msra.mxu0 0.0
    %3849 = vmatprep.subr.mxu0 0.0
    %3850 = vmatpush2.msra.mxu0 0.0
    %3851 = vmatprep.subr.mxu0 0.0
    %3852 = vmatpush2.msra.mxu0 0.0
    %3853 = vmatprep.subr.mxu0 0.0
    %3854 = vmatpush2.msra.mxu0 0.0
    %3855 = vmatprep.subr.mxu0 0.0
    %3856 = vmatpush2.msra.mxu0 0.0
    %3857 = vmatprep.subr.mxu0 0.0
    %3858 = vmatpush2.msra.mxu0 0.0
    %3859 = vmatprep.subr.mxu0 0.0
    %3860 = vmatpush2.msra.mxu0 0.0
    %3861 = vmatprep.subr.mxu0 0.0
    %3862 = vmatpush2.msra.mxu0 0.0
    %3863 = vmatprep.subr.mxu0 0.0
    %3864 = vmatpush2.msra.mxu0 0.0
    %3865 = vmatprep.subr.mxu0 0.0
    %3866 = vmatpush2.msra.mxu0 0.0
    %3867 = vmatprep.subr.mxu0 0.0
    %3868 = vmatpush2.msra.mxu0 0.0
    %3869 = vmatprep.subr.mxu0 0.0
    %3870 = vmatpush2.msra.mxu0 0.0
    %3871 = vmatprep.subr.mxu0 0.0
    %3872 = vmatpush2.msra.mxu0 0.0
    %3873 = vmatprep.subr.mxu0 0.0
    %3874 = vmatpush2.msra.mxu0 0.0
    %3875 = vmatprep.mubr.f32.mxu0 0.0
    %3876 = vmatmul.mubr.f32.gmra.mxu0 %v3139
    %v3877 = vpop.f32.mrf.mxu0
    %v3878 = vadd.f32 0.0, %v3877
    %v3879 = vpop.f32.mrf.mxu0
    %v3880 = vadd.f32 0.0, %v3879
    %3881 = vmatprep.mubr.f32.mxu0 0.0
    %3882 = vmatmul.mubr.f32.gmra.mxu0 %v3142
    %v3883 = vpop.f32.mrf.mxu0
    %v3884 = vadd.f32 0.0, %v3883
    %v3885 = vpop.f32.mrf.mxu0
    %v3886 = vadd.f32 0.0, %v3885
    %3887 = vmatprep.mubr.f32.mxu0 0.0
    %3888 = vmatmul.mubr.f32.gmra.mxu0 %v3145
    %v3889 = vpop.f32.mrf.mxu0
    %v3890 = vadd.f32 0.0, %v3889
    %v3891 = vpop.f32.mrf.mxu0
    %v3892 = vadd.f32 0.0, %v3891
    %3893 = vdwg.mxu0
    %3894 = vmatprep.subr.mxu0 0.0
    %3895 = vmatpush1.msra.mxu0 0.0
    %3896 = vmatprep.subr.mxu0 0.0
    %3897 = vmatpush1.msra.mxu0 0.0
    %3898 = vmatprep.subr.mxu0 0.0
    %3899 = vmatpush1.msra.mxu0 0.0
    %3900 = vmatprep.subr.mxu0 0.0
    %3901 = vmatpush1.msra.mxu0 0.0
    %3902 = vmatprep.subr.mxu0 %v3109
    %3903 = vmatpush1.msra.mxu0 %v3107
    %3904 = vmatprep.subr.mxu0 %v3045
    %3905 = vmatpush1.msra.mxu0 %v3043
    %3906 = vmatprep.subr.mxu0 %v2981
    %3907 = vmatpush1.msra.mxu0 %v2979
    %3908 = vmatprep.subr.mxu0 %v2917
    %3909 = vmatpush1.msra.mxu0 %v2915
    %3910 = vmatprep.subr.mxu0 %v2853
    %3911 = vmatpush1.msra.mxu0 %v2851
    %3912 = vmatprep.subr.mxu0 %v2789
    %3913 = vmatpush1.msra.mxu0 %v2787
    %3914 = vmatprep.subr.mxu0 %v2725
    %3915 = vmatpush1.msra.mxu0 %v2723
    %3916 = vmatprep.subr.mxu0 %v2661
    %3917 = vmatpush1.msra.mxu0 %v2659
    %3918 = vmatprep.subr.mxu0 %v2597
    %3919 = vmatpush1.msra.mxu0 %v2595
    %3920 = vmatprep.subr.mxu0 %v2533
    %3921 = vmatpush1.msra.mxu0 %v2531
    %3922 = vmatprep.subr.mxu0 %v2469
    %3923 = vmatpush1.msra.mxu0 %v2467
    %3924 = vmatprep.subr.mxu0 %v2405
    %3925 = vmatpush1.msra.mxu0 %v2403
    %3926 = vmatprep.subr.mxu0 0.0
    %3927 = vmatpush2.msra.mxu0 0.0
    %3928 = vmatprep.subr.mxu0 0.0
    %3929 = vmatpush2.msra.mxu0 0.0
    %3930 = vmatprep.subr.mxu0 0.0
    %3931 = vmatpush2.msra.mxu0 0.0
    %3932 = vmatprep.subr.mxu0 0.0
    %3933 = vmatpush2.msra.mxu0 0.0
    %3934 = vmatprep.subr.mxu0 0.0
    %3935 = vmatpush2.msra.mxu0 0.0
    %3936 = vmatprep.subr.mxu0 0.0
    %3937 = vmatpush2.msra.mxu0 0.0
    %3938 = vmatprep.subr.mxu0 0.0
    %3939 = vmatpush2.msra.mxu0 0.0
    %3940 = vmatprep.subr.mxu0 0.0
    %3941 = vmatpush2.msra.mxu0 0.0
    %3942 = vmatprep.subr.mxu0 0.0
    %3943 = vmatpush2.msra.mxu0 0.0
    %3944 = vmatprep.subr.mxu0 0.0
    %3945 = vmatpush2.msra.mxu0 0.0
    %3946 = vmatprep.subr.mxu0 0.0
    %3947 = vmatpush2.msra.mxu0 0.0
    %3948 = vmatprep.subr.mxu0 0.0
    %3949 = vmatpush2.msra.mxu0 0.0
    %3950 = vmatprep.subr.mxu0 0.0
    %3951 = vmatpush2.msra.mxu0 0.0
    %3952 = vmatprep.subr.mxu0 0.0
    %3953 = vmatpush2.msra.mxu0 0.0
    %3954 = vmatprep.subr.mxu0 0.0
    %3955 = vmatpush2.msra.mxu0 0.0
    %3956 = vmatprep.subr.mxu0 0.0
    %3957 = vmatpush2.msra.mxu0 0.0
    %3958 = vmatprep.mubr.f32.mxu0 0.0
    %3959 = vmatmul.mubr.f32.gmra.mxu0 %v3139
    %v3960 = vpop.f32.mrf.mxu0
    %v3961 = vadd.f32 0.0, %v3960
    %v3962 = vpop.f32.mrf.mxu0
    %v3963 = vadd.f32 0.0, %v3962
    %3964 = vmatprep.mubr.f32.mxu0 0.0
    %3965 = vmatmul.mubr.f32.gmra.mxu0 %v3142
    %v3966 = vpop.f32.mrf.mxu0
    %v3967 = vadd.f32 0.0, %v3966
    %v3968 = vpop.f32.mrf.mxu0
    %v3969 = vadd.f32 0.0, %v3968
    %3970 = vmatprep.mubr.f32.mxu0 0.0
    %3971 = vmatmul.mubr.f32.gmra.mxu0 %v3145
    %v3972 = vpop.f32.mrf.mxu0
    %v3973 = vadd.f32 0.0, %v3972
    %v3974 = vpop.f32.mrf.mxu0
    %v3975 = vadd.f32 0.0, %v3974
    %3976 = vdwg.mxu0
    %3977 = vmatprep.subr.mxu0 0.0
    %3978 = vmatpush1.msra.mxu0 0.0
    %3979 = vmatprep.subr.mxu0 0.0
    %3980 = vmatpush1.msra.mxu0 0.0
    %3981 = vmatprep.subr.mxu0 0.0
    %3982 = vmatpush1.msra.mxu0 0.0
    %3983 = vmatprep.subr.mxu0 0.0
    %3984 = vmatpush1.msra.mxu0 0.0
    %3985 = vmatprep.subr.mxu0 %v3113
    %3986 = vmatpush1.msra.mxu0 %v3111
    %3987 = vmatprep.subr.mxu0 %v3049
    %3988 = vmatpush1.msra.mxu0 %v3047
    %3989 = vmatprep.subr.mxu0 %v2985
    %3990 = vmatpush1.msra.mxu0 %v2983
    %3991 = vmatprep.subr.mxu0 %v2921
    %3992 = vmatpush1.msra.mxu0 %v2919
    %3993 = vmatprep.subr.mxu0 %v2857
    %3994 = vmatpush1.msra.mxu0 %v2855
    %3995 = vmatprep.subr.mxu0 %v2793
    %3996 = vmatpush1.msra.mxu0 %v2791
    %3997 = vmatprep.subr.mxu0 %v2729
    %3998 = vmatpush1.msra.mxu0 %v2727
    %3999 = vmatprep.subr.mxu0 %v2665
    %4000 = vmatpush1.msra.mxu0 %v2663
    %4001 = vmatprep.subr.mxu0 %v2601
    %4002 = vmatpush1.msra.mxu0 %v2599
    %4003 = vmatprep.subr.mxu0 %v2537
    %4004 = vmatpush1.msra.mxu0 %v2535
    %4005 = vmatprep.subr.mxu0 %v2473
    %4006 = vmatpush1.msra.mxu0 %v2471
    %4007 = vmatprep.subr.mxu0 %v2409
    %4008 = vmatpush1.msra.mxu0 %v2407
    %4009 = vmatprep.subr.mxu0 0.0
    %4010 = vmatpush2.msra.mxu0 0.0
    %4011 = vmatprep.subr.mxu0 0.0
    %4012 = vmatpush2.msra.mxu0 0.0
    %4013 = vmatprep.subr.mxu0 0.0
    %4014 = vmatpush2.msra.mxu0 0.0
    %4015 = vmatprep.subr.mxu0 0.0
    %4016 = vmatpush2.msra.mxu0 0.0
    %4017 = vmatprep.subr.mxu0 0.0
    %4018 = vmatpush2.msra.mxu0 0.0
    %4019 = vmatprep.subr.mxu0 0.0
    %4020 = vmatpush2.msra.mxu0 0.0
    %4021 = vmatprep.subr.mxu0 0.0
    %4022 = vmatpush2.msra.mxu0 0.0
    %4023 = vmatprep.subr.mxu0 0.0
    %4024 = vmatpush2.msra.mxu0 0.0
    %4025 = vmatprep.subr.mxu0 0.0
    %4026 = vmatpush2.msra.mxu0 0.0
    %4027 = vmatprep.subr.mxu0 0.0
    %4028 = vmatpush2.msra.mxu0 0.0
    %4029 = vmatprep.subr.mxu0 0.0
    %4030 = vmatpush2.msra.mxu0 0.0
    %4031 = vmatprep.subr.mxu0 0.0
    %4032 = vmatpush2.msra.mxu0 0.0
    %4033 = vmatprep.subr.mxu0 0.0
    %4034 = vmatpush2.msra.mxu0 0.0
    %4035 = vmatprep.subr.mxu0 0.0
    %4036 = vmatpush2.msra.mxu0 0.0
    %4037 = vmatprep.subr.mxu0 0.0
    %4038 = vmatpush2.msra.mxu0 0.0
    %4039 = vmatprep.subr.mxu0 0.0
    %4040 = vmatpush2.msra.mxu0 0.0
    %4041 = vmatprep.mubr.f32.mxu0 0.0
    %4042 = vmatmul.mubr.f32.gmra.mxu0 %v3139
    %v4043 = vpop.f32.mrf.mxu0
    %v4044 = vadd.f32 0.0, %v4043
    %v4045 = vpop.f32.mrf.mxu0
    %v4046 = vadd.f32 0.0, %v4045
    %4047 = vmatprep.mubr.f32.mxu0 0.0
    %4048 = vmatmul.mubr.f32.gmra.mxu0 %v3142
    %v4049 = vpop.f32.mrf.mxu0
    %v4050 = vadd.f32 0.0, %v4049
    %v4051 = vpop.f32.mrf.mxu0
    %v4052 = vadd.f32 0.0, %v4051
    %4053 = vmatprep.mubr.f32.mxu0 0.0
    %4054 = vmatmul.mubr.f32.gmra.mxu0 %v3145
    %v4055 = vpop.f32.mrf.mxu0
    %v4056 = vadd.f32 0.0, %v4055
    %v4057 = vpop.f32.mrf.mxu0
    %v4058 = vadd.f32 0.0, %v4057
    %4059 = vdwg.mxu0
    %4060 = vmatprep.subr.mxu0 0.0
    %4061 = vmatpush1.msra.mxu0 0.0
    %4062 = vmatprep.subr.mxu0 0.0
    %4063 = vmatpush1.msra.mxu0 0.0
    %4064 = vmatprep.subr.mxu0 0.0
    %4065 = vmatpush1.msra.mxu0 0.0
    %4066 = vmatprep.subr.mxu0 0.0
    %4067 = vmatpush1.msra.mxu0 0.0
    %4068 = vmatprep.subr.mxu0 %v3117
    %4069 = vmatpush1.msra.mxu0 %v3115
    %4070 = vmatprep.subr.mxu0 %v3053
    %4071 = vmatpush1.msra.mxu0 %v3051
    %4072 = vmatprep.subr.mxu0 %v2989
    %4073 = vmatpush1.msra.mxu0 %v2987
    %4074 = vmatprep.subr.mxu0 %v2925
    %4075 = vmatpush1.msra.mxu0 %v2923
    %4076 = vmatprep.subr.mxu0 %v2861
    %4077 = vmatpush1.msra.mxu0 %v2859
    %4078 = vmatprep.subr.mxu0 %v2797
    %4079 = vmatpush1.msra.mxu0 %v2795
    %4080 = vmatprep.subr.mxu0 %v2733
    %4081 = vmatpush1.msra.mxu0 %v2731
    %4082 = vmatprep.subr.mxu0 %v2669
    %4083 = vmatpush1.msra.mxu0 %v2667
    %4084 = vmatprep.subr.mxu0 %v2605
    %4085 = vmatpush1.msra.mxu0 %v2603
    %4086 = vmatprep.subr.mxu0 %v2541
    %4087 = vmatpush1.msra.mxu0 %v2539
    %4088 = vmatprep.subr.mxu0 %v2477
    %4089 = vmatpush1.msra.mxu0 %v2475
    %4090 = vmatprep.subr.mxu0 %v2413
    %4091 = vmatpush1.msra.mxu0 %v2411
    %4092 = vmatprep.subr.mxu0 0.0
    %4093 = vmatpush2.msra.mxu0 0.0
    %4094 = vmatprep.subr.mxu0 0.0
    %4095 = vmatpush2.msra.mxu0 0.0
    %4096 = vmatprep.subr.mxu0 0.0
    %4097 = vmatpush2.msra.mxu0 0.0
    %4098 = vmatprep.subr.mxu0 0.0
    %4099 = vmatpush2.msra.mxu0 0.0
    %4100 = vmatprep.subr.mxu0 0.0
    %4101 = vmatpush2.msra.mxu0 0.0
    %4102 = vmatprep.subr.mxu0 0.0
    %4103 = vmatpush2.msra.mxu0 0.0
    %4104 = vmatprep.subr.mxu0 0.0
    %4105 = vmatpush2.msra.mxu0 0.0
    %4106 = vmatprep.subr.mxu0 0.0
    %4107 = vmatpush2.msra.mxu0 0.0
    %4108 = vmatprep.subr.mxu0 0.0
    %4109 = vmatpush2.msra.mxu0 0.0
    %4110 = vmatprep.subr.mxu0 0.0
    %4111 = vmatpush2.msra.mxu0 0.0
    %4112 = vmatprep.subr.mxu0 0.0
    %4113 = vmatpush2.msra.mxu0 0.0
    %4114 = vmatprep.subr.mxu0 0.0
    %4115 = vmatpush2.msra.mxu0 0.0
    %4116 = vmatprep.subr.mxu0 0.0
    %4117 = vmatpush2.msra.mxu0 0.0
    %4118 = vmatprep.subr.mxu0 0.0
    %4119 = vmatpush2.msra.mxu0 0.0
    %4120 = vmatprep.subr.mxu0 0.0
    %4121 = vmatpush2.msra.mxu0 0.0
    %4122 = vmatprep.subr.mxu0 0.0
    %4123 = vmatpush2.msra.mxu0 0.0
    %4124 = vmatprep.mubr.f32.mxu0 0.0
    %4125 = vmatmul.mubr.f32.gmra.mxu0 %v3139
    %v4126 = vpop.f32.mrf.mxu0
    %v4127 = vadd.f32 0.0, %v4126
    %v4128 = vpop.f32.mrf.mxu0
    %v4129 = vadd.f32 0.0, %v4128
    %4130 = vmatprep.mubr.f32.mxu0 0.0
    %4131 = vmatmul.mubr.f32.gmra.mxu0 %v3142
    %v4132 = vpop.f32.mrf.mxu0
    %v4133 = vadd.f32 0.0, %v4132
    %v4134 = vpop.f32.mrf.mxu0
    %v4135 = vadd.f32 0.0, %v4134
    %4136 = vmatprep.mubr.f32.mxu0 0.0
    %4137 = vmatmul.mubr.f32.gmra.mxu0 %v3145
    %v4138 = vpop.f32.mrf.mxu0
    %v4139 = vadd.f32 0.0, %v4138
    %v4140 = vpop.f32.mrf.mxu0
    %v4141 = vadd.f32 0.0, %v4140
    %4142 = vdwg.mxu0
    %4143 = vmatprep.subr.mxu0 0.0
    %4144 = vmatpush1.msra.mxu0 0.0
    %4145 = vmatprep.subr.mxu0 0.0
    %4146 = vmatpush1.msra.mxu0 0.0
    %4147 = vmatprep.subr.mxu0 0.0
    %4148 = vmatpush1.msra.mxu0 0.0
    %4149 = vmatprep.subr.mxu0 0.0
    %4150 = vmatpush1.msra.mxu0 0.0
    %4151 = vmatprep.subr.mxu0 %v3121
    %4152 = vmatpush1.msra.mxu0 %v3119
    %4153 = vmatprep.subr.mxu0 %v3057
    %4154 = vmatpush1.msra.mxu0 %v3055
    %4155 = vmatprep.subr.mxu0 %v2993
    %4156 = vmatpush1.msra.mxu0 %v2991
    %4157 = vmatprep.subr.mxu0 %v2929
    %4158 = vmatpush1.msra.mxu0 %v2927
    %4159 = vmatprep.subr.mxu0 %v2865
    %4160 = vmatpush1.msra.mxu0 %v2863
    %4161 = vmatprep.subr.mxu0 %v2801
    %4162 = vmatpush1.msra.mxu0 %v2799
    %4163 = vmatprep.subr.mxu0 %v2737
    %4164 = vmatpush1.msra.mxu0 %v2735
    %4165 = vmatprep.subr.mxu0 %v2673
    %4166 = vmatpush1.msra.mxu0 %v2671
    %4167 = vmatprep.subr.mxu0 %v2609
    %4168 = vmatpush1.msra.mxu0 %v2607
    %4169 = vmatprep.subr.mxu0 %v2545
    %4170 = vmatpush1.msra.mxu0 %v2543
    %4171 = vmatprep.subr.mxu0 %v2481
    %4172 = vmatpush1.msra.mxu0 %v2479
    %4173 = vmatprep.subr.mxu0 %v2417
    %4174 = vmatpush1.msra.mxu0 %v2415
    %4175 = vmatprep.subr.mxu0 0.0
    %4176 = vmatpush2.msra.mxu0 0.0
    %4177 = vmatprep.subr.mxu0 0.0
    %4178 = vmatpush2.msra.mxu0 0.0
    %4179 = vmatprep.subr.mxu0 0.0
    %4180 = vmatpush2.msra.mxu0 0.0
    %4181 = vmatprep.subr.mxu0 0.0
    %4182 = vmatpush2.msra.mxu0 0.0
    %4183 = vmatprep.subr.mxu0 0.0
    %4184 = vmatpush2.msra.mxu0 0.0
    %4185 = vmatprep.subr.mxu0 0.0
    %4186 = vmatpush2.msra.mxu0 0.0
    %4187 = vmatprep.subr.mxu0 0.0
    %4188 = vmatpush2.msra.mxu0 0.0
    %4189 = vmatprep.subr.mxu0 0.0
    %4190 = vmatpush2.msra.mxu0 0.0
    %4191 = vmatprep.subr.mxu0 0.0
    %4192 = vmatpush2.msra.mxu0 0.0
    %4193 = vmatprep.subr.mxu0 0.0
    %4194 = vmatpush2.msra.mxu0 0.0
    %4195 = vmatprep.subr.mxu0 0.0
    %4196 = vmatpush2.msra.mxu0 0.0
    %4197 = vmatprep.subr.mxu0 0.0
    %4198 = vmatpush2.msra.mxu0 0.0
    %4199 = vmatprep.subr.mxu0 0.0
    %4200 = vmatpush2.msra.mxu0 0.0
    %4201 = vmatprep.subr.mxu0 0.0
    %4202 = vmatpush2.msra.mxu0 0.0
    %4203 = vmatprep.subr.mxu0 0.0
    %4204 = vmatpush2.msra.mxu0 0.0
    %4205 = vmatprep.subr.mxu0 0.0
    %4206 = vmatpush2.msra.mxu0 0.0
    %4207 = vmatprep.mubr.f32.mxu0 0.0
    %4208 = vmatmul.mubr.f32.gmra.mxu0 %v3139
    %v4209 = vpop.f32.mrf.mxu0
    %v4210 = vadd.f32 0.0, %v4209
    %v4211 = vpop.f32.mrf.mxu0
    %v4212 = vadd.f32 0.0, %v4211
    %4213 = vmatprep.mubr.f32.mxu0 0.0
    %4214 = vmatmul.mubr.f32.gmra.mxu0 %v3142
    %v4215 = vpop.f32.mrf.mxu0
    %v4216 = vadd.f32 0.0, %v4215
    %v4217 = vpop.f32.mrf.mxu0
    %v4218 = vadd.f32 0.0, %v4217
    %4219 = vmatprep.mubr.f32.mxu0 0.0
    %4220 = vmatmul.mubr.f32.gmra.mxu0 %v3145
    %v4221 = vpop.f32.mrf.mxu0
    %v4222 = vadd.f32 0.0, %v4221
    %v4223 = vpop.f32.mrf.mxu0
    %v4224 = vadd.f32 0.0, %v4223
    %4225 = vdwg.mxu0
    %4226 = vmatprep.subr.mxu0 0.0
    %4227 = vmatpush1.msra.mxu0 0.0
    %4228 = vmatprep.subr.mxu0 0.0
    %4229 = vmatpush1.msra.mxu0 0.0
    %4230 = vmatprep.subr.mxu0 0.0
    %4231 = vmatpush1.msra.mxu0 0.0
    %4232 = vmatprep.subr.mxu0 0.0
    %4233 = vmatpush1.msra.mxu0 0.0
    %4234 = vmatprep.subr.mxu0 %v3125
    %4235 = vmatpush1.msra.mxu0 %v3123
    %4236 = vmatprep.subr.mxu0 %v3061
    %4237 = vmatpush1.msra.mxu0 %v3059
    %4238 = vmatprep.subr.mxu0 %v2997
    %4239 = vmatpush1.msra.mxu0 %v2995
    %4240 = vmatprep.subr.mxu0 %v2933
    %4241 = vmatpush1.msra.mxu0 %v2931
    %4242 = vmatprep.subr.mxu0 %v2869
    %4243 = vmatpush1.msra.mxu0 %v2867
    %4244 = vmatprep.subr.mxu0 %v2805
    %4245 = vmatpush1.msra.mxu0 %v2803
    %4246 = vmatprep.subr.mxu0 %v2741
    %4247 = vmatpush1.msra.mxu0 %v2739
    %4248 = vmatprep.subr.mxu0 %v2677
    %4249 = vmatpush1.msra.mxu0 %v2675
    %4250 = vmatprep.subr.mxu0 %v2613
    %4251 = vmatpush1.msra.mxu0 %v2611
    %4252 = vmatprep.subr.mxu0 %v2549
    %4253 = vmatpush1.msra.mxu0 %v2547
    %4254 = vmatprep.subr.mxu0 %v2485
    %4255 = vmatpush1.msra.mxu0 %v2483
    %4256 = vmatprep.subr.mxu0 %v2421
    %4257 = vmatpush1.msra.mxu0 %v2419
    %4258 = vmatprep.subr.mxu0 0.0
    %4259 = vmatpush2.msra.mxu0 0.0
    %4260 = vmatprep.subr.mxu0 0.0
    %4261 = vmatpush2.msra.mxu0 0.0
    %4262 = vmatprep.subr.mxu0 0.0
    %4263 = vmatpush2.msra.mxu0 0.0
    %4264 = vmatprep.subr.mxu0 0.0
    %4265 = vmatpush2.msra.mxu0 0.0
    %4266 = vmatprep.subr.mxu0 0.0
    %4267 = vmatpush2.msra.mxu0 0.0
    %4268 = vmatprep.subr.mxu0 0.0
    %4269 = vmatpush2.msra.mxu0 0.0
    %4270 = vmatprep.subr.mxu0 0.0
    %4271 = vmatpush2.msra.mxu0 0.0
    %4272 = vmatprep.subr.mxu0 0.0
    %4273 = vmatpush2.msra.mxu0 0.0
    %4274 = vmatprep.subr.mxu0 0.0
    %4275 = vmatpush2.msra.mxu0 0.0
    %4276 = vmatprep.subr.mxu0 0.0
    %4277 = vmatpush2.msra.mxu0 0.0
    %4278 = vmatprep.subr.mxu0 0.0
    %4279 = vmatpush2.msra.mxu0 0.0
    %4280 = vmatprep.subr.mxu0 0.0
    %4281 = vmatpush2.msra.mxu0 0.0
    %4282 = vmatprep.subr.mxu0 0.0
    %4283 = vmatpush2.msra.mxu0 0.0
    %4284 = vmatprep.subr.mxu0 0.0
    %4285 = vmatpush2.msra.mxu0 0.0
    %4286 = vmatprep.subr.mxu0 0.0
    %4287 = vmatpush2.msra.mxu0 0.0
    %4288 = vmatprep.subr.mxu0 0.0
    %4289 = vmatpush2.msra.mxu0 0.0
    %4290 = vmatprep.mubr.f32.mxu0 0.0
    %4291 = vmatmul.mubr.f32.gmra.mxu0 %v3139
    %v4292 = vpop.f32.mrf.mxu0
    %v4293 = vadd.f32 0.0, %v4292
    %v4294 = vpop.f32.mrf.mxu0
    %v4295 = vadd.f32 0.0, %v4294
    %4296 = vmatprep.mubr.f32.mxu0 0.0
    %4297 = vmatmul.mubr.f32.gmra.mxu0 %v3142
    %v4298 = vpop.f32.mrf.mxu0
    %v4299 = vadd.f32 0.0, %v4298
    %v4300 = vpop.f32.mrf.mxu0
    %v4301 = vadd.f32 0.0, %v4300
    %4302 = vmatprep.mubr.f32.mxu0 0.0
    %4303 = vmatmul.mubr.f32.gmra.mxu0 %v3145
    %v4304 = vpop.f32.mrf.mxu0
    %v4305 = vadd.f32 0.0, %v4304
    %v4306 = vpop.f32.mrf.mxu0
    %v4307 = vadd.f32 0.0, %v4306
    %4308 = vdwg.mxu0
    %4309 = vmatprep.subr.mxu0 0.0
    %4310 = vmatpush1.msra.mxu0 0.0
    %4311 = vmatprep.subr.mxu0 0.0
    %4312 = vmatpush1.msra.mxu0 0.0
    %4313 = vmatprep.subr.mxu0 0.0
    %4314 = vmatpush1.msra.mxu0 0.0
    %4315 = vmatprep.subr.mxu0 0.0
    %4316 = vmatpush1.msra.mxu0 0.0
    %4317 = vmatprep.subr.mxu0 %v3129
    %4318 = vmatpush1.msra.mxu0 %v3127
    %4319 = vmatprep.subr.mxu0 %v3065
    %4320 = vmatpush1.msra.mxu0 %v3063
    %4321 = vmatprep.subr.mxu0 %v3001
    %4322 = vmatpush1.msra.mxu0 %v2999
    %4323 = vmatprep.subr.mxu0 %v2937
    %4324 = vmatpush1.msra.mxu0 %v2935
    %4325 = vmatprep.subr.mxu0 %v2873
    %4326 = vmatpush1.msra.mxu0 %v2871
    %4327 = vmatprep.subr.mxu0 %v2809
    %4328 = vmatpush1.msra.mxu0 %v2807
    %4329 = vmatprep.subr.mxu0 %v2745
    %4330 = vmatpush1.msra.mxu0 %v2743
    %4331 = vmatprep.subr.mxu0 %v2681
    %4332 = vmatpush1.msra.mxu0 %v2679
    %4333 = vmatprep.subr.mxu0 %v2617
    %4334 = vmatpush1.msra.mxu0 %v2615
    %4335 = vmatprep.subr.mxu0 %v2553
    %4336 = vmatpush1.msra.mxu0 %v2551
    %4337 = vmatprep.subr.mxu0 %v2489
    %4338 = vmatpush1.msra.mxu0 %v2487
    %4339 = vmatprep.subr.mxu0 %v2425
    %4340 = vmatpush1.msra.mxu0 %v2423
    %4341 = vmatprep.subr.mxu0 0.0
    %4342 = vmatpush2.msra.mxu0 0.0
    %4343 = vmatprep.subr.mxu0 0.0
    %4344 = vmatpush2.msra.mxu0 0.0
    %4345 = vmatprep.subr.mxu0 0.0
    %4346 = vmatpush2.msra.mxu0 0.0
    %4347 = vmatprep.subr.mxu0 0.0
    %4348 = vmatpush2.msra.mxu0 0.0
    %4349 = vmatprep.subr.mxu0 0.0
    %4350 = vmatpush2.msra.mxu0 0.0
    %4351 = vmatprep.subr.mxu0 0.0
    %4352 = vmatpush2.msra.mxu0 0.0
    %4353 = vmatprep.subr.mxu0 0.0
    %4354 = vmatpush2.msra.mxu0 0.0
    %4355 = vmatprep.subr.mxu0 0.0
    %4356 = vmatpush2.msra.mxu0 0.0
    %4357 = vmatprep.subr.mxu0 0.0
    %4358 = vmatpush2.msra.mxu0 0.0
    %4359 = vmatprep.subr.mxu0 0.0
    %4360 = vmatpush2.msra.mxu0 0.0
    %4361 = vmatprep.subr.mxu0 0.0
    %4362 = vmatpush2.msra.mxu0 0.0
    %4363 = vmatprep.subr.mxu0 0.0
    %4364 = vmatpush2.msra.mxu0 0.0
    %4365 = vmatprep.subr.mxu0 0.0
    %4366 = vmatpush2.msra.mxu0 0.0
    %4367 = vmatprep.subr.mxu0 0.0
    %4368 = vmatpush2.msra.mxu0 0.0
    %4369 = vmatprep.subr.mxu0 0.0
    %4370 = vmatpush2.msra.mxu0 0.0
    %4371 = vmatprep.subr.mxu0 0.0
    %4372 = vmatpush2.msra.mxu0 0.0
    %4373 = vmatprep.mubr.f32.mxu0 0.0
    %4374 = vmatmul.mubr.f32.gmra.mxu0 %v3139
    %v4375 = vpop.f32.mrf.mxu0
    %v4376 = vadd.f32 0.0, %v4375
    %v4377 = vpop.f32.mrf.mxu0
    %v4378 = vadd.f32 0.0, %v4377
    %4379 = vmatprep.mubr.f32.mxu0 0.0
    %4380 = vmatmul.mubr.f32.gmra.mxu0 %v3142
    %v4381 = vpop.f32.mrf.mxu0
    %v4382 = vadd.f32 0.0, %v4381
    %v4383 = vpop.f32.mrf.mxu0
    %v4384 = vadd.f32 0.0, %v4383
    %4385 = vmatprep.mubr.f32.mxu0 0.0
    %4386 = vmatmul.mubr.f32.gmra.mxu0 %v3145
    %v4387 = vpop.f32.mrf.mxu0
    %v4388 = vadd.f32 0.0, %v4387
    %v4389 = vpop.f32.mrf.mxu0
    %v4390 = vadd.f32 0.0, %v4389
    %4391 = vdwg.mxu0
    %4392 = vmatprep.subr.mxu0 0.0
    %4393 = vmatpush1.msra.mxu0 0.0
    %4394 = vmatprep.subr.mxu0 0.0
    %4395 = vmatpush1.msra.mxu0 0.0
    %4396 = vmatprep.subr.mxu0 0.0
    %4397 = vmatpush1.msra.mxu0 0.0
    %4398 = vmatprep.subr.mxu0 0.0
    %4399 = vmatpush1.msra.mxu0 0.0
    %4400 = vmatprep.subr.mxu0 %v3133
    %4401 = vmatpush1.msra.mxu0 %v3131
    %4402 = vmatprep.subr.mxu0 %v3069
    %4403 = vmatpush1.msra.mxu0 %v3067
    %4404 = vmatprep.subr.mxu0 %v3005
    %4405 = vmatpush1.msra.mxu0 %v3003
    %4406 = vmatprep.subr.mxu0 %v2941
    %4407 = vmatpush1.msra.mxu0 %v2939
    %4408 = vmatprep.subr.mxu0 %v2877
    %4409 = vmatpush1.msra.mxu0 %v2875
    %4410 = vmatprep.subr.mxu0 %v2813
    %4411 = vmatpush1.msra.mxu0 %v2811
    %4412 = vmatprep.subr.mxu0 %v2749
    %4413 = vmatpush1.msra.mxu0 %v2747
    %4414 = vmatprep.subr.mxu0 %v2685
    %4415 = vmatpush1.msra.mxu0 %v2683
    %4416 = vmatprep.subr.mxu0 %v2621
    %4417 = vmatpush1.msra.mxu0 %v2619
    %4418 = vmatprep.subr.mxu0 %v2557
    %4419 = vmatpush1.msra.mxu0 %v2555
    %4420 = vmatprep.subr.mxu0 %v2493
    %4421 = vmatpush1.msra.mxu0 %v2491
    %4422 = vmatprep.subr.mxu0 %v2429
    %4423 = vmatpush1.msra.mxu0 %v2427
    %4424 = vmatprep.subr.mxu0 0.0
    %4425 = vmatpush2.msra.mxu0 0.0
    %4426 = vmatprep.subr.mxu0 0.0
    %4427 = vmatpush2.msra.mxu0 0.0
    %4428 = vmatprep.subr.mxu0 0.0
    %4429 = vmatpush2.msra.mxu0 0.0
    %4430 = vmatprep.subr.mxu0 0.0
    %4431 = vmatpush2.msra.mxu0 0.0
    %4432 = vmatprep.subr.mxu0 0.0
    %4433 = vmatpush2.msra.mxu0 0.0
    %4434 = vmatprep.subr.mxu0 0.0
    %4435 = vmatpush2.msra.mxu0 0.0
    %4436 = vmatprep.subr.mxu0 0.0
    %4437 = vmatpush2.msra.mxu0 0.0
    %4438 = vmatprep.subr.mxu0 0.0
    %4439 = vmatpush2.msra.mxu0 0.0
    %4440 = vmatprep.subr.mxu0 0.0
    %4441 = vmatpush2.msra.mxu0 0.0
    %4442 = vmatprep.subr.mxu0 0.0
    %4443 = vmatpush2.msra.mxu0 0.0
    %4444 = vmatprep.subr.mxu0 0.0
    %4445 = vmatpush2.msra.mxu0 0.0
    %4446 = vmatprep.subr.mxu0 0.0
    %4447 = vmatpush2.msra.mxu0 0.0
    %4448 = vmatprep.subr.mxu0 0.0
    %4449 = vmatpush2.msra.mxu0 0.0
    %4450 = vmatprep.subr.mxu0 0.0
    %4451 = vmatpush2.msra.mxu0 0.0
    %4452 = vmatprep.subr.mxu0 0.0
    %4453 = vmatpush2.msra.mxu0 0.0
    %4454 = vmatprep.subr.mxu0 0.0
    %4455 = vmatpush2.msra.mxu0 0.0
    %4456 = vmatprep.mubr.f32.mxu0 0.0
    %4457 = vmatmul.mubr.f32.gmra.mxu0 %v3139
    %v4458 = vpop.f32.mrf.mxu0
    %v4459 = vadd.f32 0.0, %v4458
    %v4460 = vpop.f32.mrf.mxu0
    %v4461 = vadd.f32 0.0, %v4460
    %4462 = vmatprep.mubr.f32.mxu0 0.0
    %4463 = vmatmul.mubr.f32.gmra.mxu0 %v3142
    %v4464 = vpop.f32.mrf.mxu0
    %v4465 = vadd.f32 0.0, %v4464
    %v4466 = vpop.f32.mrf.mxu0
    %v4467 = vadd.f32 0.0, %v4466
    %4468 = vmatprep.mubr.f32.mxu0 0.0
    %4469 = vmatmul.mubr.f32.gmra.mxu0 %v3145
    %v4470 = vpop.f32.mrf.mxu0
    %v4471 = vadd.f32 0.0, %v4470
    %v4472 = vpop.f32.mrf.mxu0
    %v4473 = vadd.f32 0.0, %v4472
    %4474 = vdwg.mxu0
    %4475 = vst [vmem:[#allocation5] sm:$0xff] %v3214
    %4476 = vst [vmem:[#allocation5 + $0x8] sm:$0xff] %v3216
    %4477 = vst [vmem:[#allocation5 + $0x10] sm:$0xff] %v3297
    %4478 = vst [vmem:[#allocation5 + $0x18] sm:$0xff] %v3299
    %4479 = vst [vmem:[#allocation5 + $0x20] sm:$0xff] %v3380
    %4480 = vst [vmem:[#allocation5 + $0x28] sm:$0xff] %v3382
    %4481 = vst [vmem:[#allocation5 + $0x30] sm:$0xff] %v3463
    %4482 = vst [vmem:[#allocation5 + $0x38] sm:$0xff] %v3465
    %4483 = vst [vmem:[#allocation5 + $0x40] sm:$0xff] %v3546
    %4484 = vst [vmem:[#allocation5 + $0x48] sm:$0xff] %v3548
    %4485 = vst [vmem:[#allocation5 + $0x50] sm:$0xff] %v3629
    %4486 = vst [vmem:[#allocation5 + $0x58] sm:$0xff] %v3631
    %4487 = vst [vmem:[#allocation5 + $0x60] sm:$0xff] %v3712
    %4488 = vst [vmem:[#allocation5 + $0x68] sm:$0xff] %v3714
    %4489 = vst [vmem:[#allocation5 + $0x70] sm:$0xff] %v3795
    %4490 = vst [vmem:[#allocation5 + $0x78] sm:$0xff] %v3797
    %4491 = vst [vmem:[#allocation5 + $0x80] sm:$0xff] %v3878
    %4492 = vst [vmem:[#allocation5 + $0x88] sm:$0xff] %v3880
    %4493 = vst [vmem:[#allocation5 + $0x90] sm:$0xff] %v3961
    %4494 = vst [vmem:[#allocation5 + $0x98] sm:$0xff] %v3963
    %4495 = vst [vmem:[#allocation5 + $0xa0] sm:$0xff] %v4044
    %4496 = vst [vmem:[#allocation5 + $0xa8] sm:$0xff] %v4046
    %4497 = vst [vmem:[#allocation5 + $0xb0] sm:$0xff] %v4127
    %4498 = vst [vmem:[#allocation5 + $0xb8] sm:$0xff] %v4129
    %4499 = vst [vmem:[#allocation5 + $0xc0] sm:$0xff] %v4210
    %4500 = vst [vmem:[#allocation5 + $0xc8] sm:$0xff] %v4212
    %4501 = vst [vmem:[#allocation5 + $0xd0] sm:$0xff] %v4293
    %4502 = vst [vmem:[#allocation5 + $0xd8] sm:$0xff] %v4295
    %4503 = vst [vmem:[#allocation5 + $0xe0] sm:$0xff] %v4376
    %4504 = vst [vmem:[#allocation5 + $0xe8] sm:$0xff] %v4378
    %4505 = vst [vmem:[#allocation5 + $0xf0] sm:$0xff] %v4459
    %4506 = vst [vmem:[#allocation5 + $0xf8] sm:$0xff] %v4461
    %4507 = vst [vmem:[#allocation5 + $0x100] sm:$0xff] %v3220
    %4508 = vst [vmem:[#allocation5 + $0x108] sm:$0xff] %v3222
    %4509 = vst [vmem:[#allocation5 + $0x110] sm:$0xff] %v3303
    %4510 = vst [vmem:[#allocation5 + $0x118] sm:$0xff] %v3305
    %4511 = vst [vmem:[#allocation5 + $0x120] sm:$0xff] %v3386
    %4512 = vst [vmem:[#allocation5 + $0x128] sm:$0xff] %v3388
    %4513 = vst [vmem:[#allocation5 + $0x130] sm:$0xff] %v3469
    %4514 = vst [vmem:[#allocation5 + $0x138] sm:$0xff] %v3471
    %4515 = vst [vmem:[#allocation5 + $0x140] sm:$0xff] %v3552
    %4516 = vst [vmem:[#allocation5 + $0x148] sm:$0xff] %v3554
    %4517 = vst [vmem:[#allocation5 + $0x150] sm:$0xff] %v3635
    %4518 = vst [vmem:[#allocation5 + $0x158] sm:$0xff] %v3637
    %4519 = vst [vmem:[#allocation5 + $0x160] sm:$0xff] %v3718
    %4520 = vst [vmem:[#allocation5 + $0x168] sm:$0xff] %v3720
    %4521 = vst [vmem:[#allocation5 + $0x170] sm:$0xff] %v3801
    %4522 = vst [vmem:[#allocation5 + $0x178] sm:$0xff] %v3803
    %4523 = vst [vmem:[#allocation5 + $0x180] sm:$0xff] %v3884
    %4524 = vst [vmem:[#allocation5 + $0x188] sm:$0xff] %v3886
    %4525 = vst [vmem:[#allocation5 + $0x190] sm:$0xff] %v3967
    %4526 = vst [vmem:[#allocation5 + $0x198] sm:$0xff] %v3969
    %4527 = vst [vmem:[#allocation5 + $0x1a0] sm:$0xff] %v4050
    %4528 = vst [vmem:[#allocation5 + $0x1a8] sm:$0xff] %v4052
    %4529 = vst [vmem:[#allocation5 + $0x1b0] sm:$0xff] %v4133
    %4530 = vst [vmem:[#allocation5 + $0x1b8] sm:$0xff] %v4135
    %4531 = vst [vmem:[#allocation5 + $0x1c0] sm:$0xff] %v4216
    %4532 = vst [vmem:[#allocation5 + $0x1c8] sm:$0xff] %v4218
    %4533 = vst [vmem:[#allocation5 + $0x1d0] sm:$0xff] %v4299
    %4534 = vst [vmem:[#allocation5 + $0x1d8] sm:$0xff] %v4301
    %4535 = vst [vmem:[#allocation5 + $0x1e0] sm:$0xff] %v4382
    %4536 = vst [vmem:[#allocation5 + $0x1e8] sm:$0xff] %v4384
    %4537 = vst [vmem:[#allocation5 + $0x1f0] sm:$0xff] %v4465
    %4538 = vst [vmem:[#allocation5 + $0x1f8] sm:$0xff] %v4467
    %4539 = vst [vmem:[#allocation5 + $0x200] sm:$0xff] %v3226
    %4540 = vst [vmem:[#allocation5 + $0x208] sm:$0xff] %v3228
    %4541 = vst [vmem:[#allocation5 + $0x210] sm:$0xff] %v3309
    %4542 = vst [vmem:[#allocation5 + $0x218] sm:$0xff] %v3311
    %4543 = vst [vmem:[#allocation5 + $0x220] sm:$0xff] %v3392
    %4544 = vst [vmem:[#allocation5 + $0x228] sm:$0xff] %v3394
    %4545 = vst [vmem:[#allocation5 + $0x230] sm:$0xff] %v3475
    %4546 = vst [vmem:[#allocation5 + $0x238] sm:$0xff] %v3477
    %4547 = vst [vmem:[#allocation5 + $0x240] sm:$0xff] %v3558
    %4548 = vst [vmem:[#allocation5 + $0x248] sm:$0xff] %v3560
    %4549 = vst [vmem:[#allocation5 + $0x250] sm:$0xff] %v3641
    %4550 = vst [vmem:[#allocation5 + $0x258] sm:$0xff] %v3643
    %4551 = vst [vmem:[#allocation5 + $0x260] sm:$0xff] %v3724
    %4552 = vst [vmem:[#allocation5 + $0x268] sm:$0xff] %v3726
    %4553 = vst [vmem:[#allocation5 + $0x270] sm:$0xff] %v3807
    %4554 = vst [vmem:[#allocation5 + $0x278] sm:$0xff] %v3809
    %4555 = vst [vmem:[#allocation5 + $0x280] sm:$0xff] %v3890
    %4556 = vst [vmem:[#allocation5 + $0x288] sm:$0xff] %v3892
    %4557 = vst [vmem:[#allocation5 + $0x290] sm:$0xff] %v3973
    %4558 = vst [vmem:[#allocation5 + $0x298] sm:$0xff] %v3975
    %4559 = vst [vmem:[#allocation5 + $0x2a0] sm:$0xff] %v4056
    %4560 = vst [vmem:[#allocation5 + $0x2a8] sm:$0xff] %v4058
    %4561 = vst [vmem:[#allocation5 + $0x2b0] sm:$0xff] %v4139
    %4562 = vst [vmem:[#allocation5 + $0x2b8] sm:$0xff] %v4141
    %4563 = vst [vmem:[#allocation5 + $0x2c0] sm:$0xff] %v4222
    %4564 = vst [vmem:[#allocation5 + $0x2c8] sm:$0xff] %v4224
    %4565 = vst [vmem:[#allocation5 + $0x2d0] sm:$0xff] %v4305
    %4566 = vst [vmem:[#allocation5 + $0x2d8] sm:$0xff] %v4307
    %4567 = vst [vmem:[#allocation5 + $0x2e0] sm:$0xff] %v4388
    %4568 = vst [vmem:[#allocation5 + $0x2e8] sm:$0xff] %v4390
    %4569 = vst [vmem:[#allocation5 + $0x2f0] sm:$0xff] %v4471
    %4570 = vst [vmem:[#allocation5 + $0x2f8] sm:$0xff] %v4473
    // Predicated region
    $region18: #{tpu_custom_call.1} parent=1 // pred_check
      _
    $region19: #{tpu_custom_call.1} parent=1 // pred_check_branch
      %4572 = sbr.rel (0) target = $region21
    $region20: #{tpu_custom_call.1} parent=1 // pred_region
      %s4574 = ssub.s32 12288, 12288
      %4575 = vsyncadd [#allocation4], %s4574
      %s4576 = sshll.u32 [#allocation5], 4
      %s4577 = int_to_ptr.vmem [resolvable:$true] %s4576
      %4582 = dma.vmem_to_hbm [thread:$0]  %s4577, 12288, %s3, [#allocation4], 4096, 4096, 256
    $region21: #{tpu_custom_call.1} parent=1 // pred_fallthru
      _
    // Predicated region
    $region22: #{tpu_custom_call.1} parent=1 // pred_check
      _
    $region23: #{tpu_custom_call.1} parent=1 // pred_check_branch
      %4584 = sbr.rel (0) target = $region25
    $region24: #{tpu_custom_call.1} parent=1 // pred_region
      %4585 = dma.done [#allocation4], 12288
    $region25: #{tpu_custom_call.1} parent=1 // pred_fallthru
      _
    %4586 = vsyncpa [#allocation3], 1
    %4587 = vsyncpa [#allocation4], 1

</llo_original>
